<compile_context>
chip_gen: v6e
topology: v6e:2x2x1
jax: 0.10.0
libtpu: 0.0.40
codegen_flags: <defaults>
</compile_context>

<pallas_src>
import functools
import math

import jax
import jax.numpy as jnp
from jax.experimental import pallas as pl
from jax.experimental.pallas import tpu as pltpu

# ------------------------- small, module-consistent config -------------------------
HIDDEN = 32          # hidden_channels
NUM_HEADS = 4        # num_heads (HIDDEN % NUM_HEADS == 0)
HEAD_DIM = HIDDEN // NUM_HEADS
NUM_LAYERS = 3       # num_layers
NUM_RBF = 16         # num_rbf  (expnorm)
CUTOFF_LOWER = 0.0
CUTOFF_UPPER = 5.0
MAX_Z = 100
N_ATOMS = 16         # two molecules of 8 atoms each
LN_EPS = 1e-5

# dk/dv slab lane layout (128-lane-tile aligned, no slice straddles a tile boundary):
#   lanes [0,   L*H) : [Wdk_0 | Wdk_1 | ... | Wdk_{L-1}]   (pad to lane 128)
#   lanes [128, 128+L*H) : [Wdv_0 | Wdv_1 | ... | Wdv_{L-1}] (pad to lane 256)
assert NUM_LAYERS * HIDDEN <= 128, "dk/dv slab packing assumes L*H <= 128 lanes"
DKDV_LANES = 256


# ---------------------------------- Pallas kernel ----------------------------------
def _fused_layers_kernel(x_ref, rbf_ref, cut_ref, p_ref, rbfw_ref, rbfb_ref,
                         wqkv_ref, wo_ref, wdkdv_ref, bdkdv_ref, baux_ref,
                         out_ref, *, n_atoms, hidden, num_layers):
    """All EquivariantMultiHeadAttention layers (distance_influence='both'), fused.

    Per layer: layernorm -> fused qkv proj -> (hoisted) dk/dv -> per-edge attention
    silu(per-head sum of q_i*k_j*dk) -> msg = v_j*dv*attn (cutoff folded into dv)
    -> segment-sum over source j -> o_proj -> residual add.
    """
    N, H = n_atoms, hidden

    # ----------- layer-invariant edge work: done ONCE, kept resident in VMEM ---------
    cut = cut_ref[...]                                        # (N*N, 1)   f32
    P_bf = p_ref[...]                                         # (H, H)     bf16, 0/1

    # edge_attr = rbf_proj(rbf); bf16 MXU operands, f32 accumulation.
    ea = jnp.dot(rbf_ref[...], rbfw_ref[...],
                 preferred_element_type=jnp.float32) + rbfb_ref[...]      # (N*N, H)
    ea_bf = ea.astype(jnp.bfloat16)

    # Hoisted dk/dv projections for ALL layers: one lane-dense (N*N, 256) matmul
    # + one silu pass (replaces L narrow matmuls / L silu passes inside the loop).
    dkdv_all = jax.nn.silu(
        jnp.dot(ea_bf, wdkdv_ref[...], preferred_element_type=jnp.float32)
        + bdkdv_ref[...])                                     # (N*N, 256) f32
    dk_all = dkdv_all[:, :128]                                # tile-aligned slice
    dv_all = dkdv_all[:, 128:] * cut                          # fold cutoff/mask ONCE

    x = x_ref[...]                                            # (N, H) f32 residual stream
    for l in range(num_layers):                               # static unroll (L=3, tiny)
        Wqkv = wqkv_ref[l]                                    # (H, 3H) bf16
        Wo = wo_ref[l]                                        # (H, H)  bf16
        B = baux_ref[l]                                       # (8, H)  f32: bq,bk,bv,bo,ln_g,ln_b,-,-

        # LayerNorm (PyTorch semantics: biased variance, eps=1e-5) -- f32
        mean = jnp.mean(x, axis=-1, keepdims=True)
        var = jnp.mean((x - mean) ** 2, axis=-1, keepdims=True)
        y = (x - mean) * jax.lax.rsqrt(var + LN_EPS) * B[4:5, :] + B[5:6, :]

        # Fused Q/K/V projection: one (N,H)x(H,3H) MXU matmul (bf16 in, f32 acc)
        qkv = jnp.dot(y.astype(jnp.bfloat16), Wqkv,
                      preferred_element_type=jnp.float32)     # (N, 3H)
        q = qkv[:, 0:H] + B[0:1, :]
        k = qkv[:, H:2 * H] + B[1:2, :]
        v = qkv[:, 2 * H:3 * H] + B[2:3, :]

        dk = dk_all[:, l * H:(l + 1) * H]                     # (N*N, H)
        dv = dv_all[:, l * H:(l + 1) * H]                     # (N*N, H), cutoff folded in

        # Per-edge q_i * k_j * dk_ij, flattened to (N*N, H); row e = i*N + j
        qk = (q[:, None, :] * k[None, :, :]).reshape(N * N, H)
        prod = qk * dk

        # Per-head sum + broadcast back to channels in one block-diagonal matmul.
        # silu(broadcast(s)) == broadcast(silu(s)) so per-channel silu is exact.
        attn = jax.nn.silu(jnp.dot(prod.astype(jnp.bfloat16), P_bf,
                                   preferred_element_type=jnp.float32))   # (N*N, H)

        # Messages v_j * dv_ij * attn; scatter-add over source j is an exact
        # sublane reduction (no O(N^3) segment-sum matmul).
        v_b = jnp.broadcast_to(v[None, :, :], (N, N, H)).reshape(N * N, H)
        msg = v_b * dv * attn
        agg = msg.reshape(N, N, H).sum(axis=1)                # (N, H) f32

        # Output projection + residual (bf16 MXU operands, f32 residual add)
        dx = jnp.dot(agg.astype(jnp.bfloat16), Wo,
                     preferred_element_type=jnp.float32) + B[3:4, :]
        x = x + dx

    out_ref[...] = x


def attention_stack(x, rbf_flat, cut_flat, head_p, rbf_w, rbf_b,
                    w_qkv, w_o, w_dkdv, b_dkdv, b_aux):
    """Run the fused attention-layer stack in a single Pallas kernel (one VMEM tile)."""
    N, H = x.shape
    kernel = functools.partial(_fused_layers_kernel, n_atoms=N, hidden=H,
                               num_layers=w_qkv.shape[0])
    vmem = pl.BlockSpec(memory_space=pltpu.MemorySpace.VMEM)
    return pl.pallas_call(
        kernel,
        out_shape=jax.ShapeDtypeStruct((N, H), jnp.float32),
        in_specs=[vmem] * 11,
        out_specs=vmem,
    )(x, rbf_flat, cut_flat, head_p, rbf_w, rbf_b, w_qkv, w_o, w_dkdv, b_dkdv, b_aux)


# --------------------------------- parameter init ----------------------------------
def _xavier(key, fan_in, fan_out):
    limit = math.sqrt(6.0 / (fan_in + fan_out))
    return jax.random.uniform(key, (fan_in, fan_out), jnp.float32, -limit, limit)


def init_params(key):
    keys = jax.random.split(key, 8 + NUM_LAYERS)
    p = {}
    p['embedding'] = jax.random.normal(keys[0], (MAX_Z, HIDDEN), jnp.float32)
    p['ne_embedding'] = jax.random.normal(keys[1], (MAX_Z, HIDDEN), jnp.float32)
    p['ne_wdist'] = _xavier(keys[2], NUM_RBF, HIDDEN)
    p['ne_bdist'] = jnp.zeros((HIDDEN,), jnp.float32)
    p['ne_wcomb'] = _xavier(keys[3], 2 * HIDDEN, HIDDEN)
    p['ne_bcomb'] = jnp.zeros((HIDDEN,), jnp.float32)

    # rbf_proj weights fed to the kernel as bf16 MXU operands; bias stays f32.
    p['rbf_w'] = _xavier(keys[4], NUM_RBF, HIDDEN).astype(jnp.bfloat16)
    p['rbf_b'] = jnp.zeros((1, HIDDEN), jnp.float32)

    # ExpNormalSmearing initial params
    start = math.exp(-(CUTOFF_UPPER - CUTOFF_LOWER))
    p['rbf_means'] = jnp.linspace(start, 1.0, NUM_RBF).astype(jnp.float32)
    p['rbf_betas'] = jnp.full((NUM_RBF,), (2.0 / NUM_RBF * (1.0 - start)) ** -2,
                              jnp.float32)

    # Block-diagonal head reduce+broadcast matrix (0/1 -> exact in bf16)
    head_idx = jnp.arange(HIDDEN) // HEAD_DIM
    p['head_P'] = (head_idx[:, None] == head_idx[None, :]).astype(jnp.bfloat16)

    p['out_g'] = jnp.ones((1, HIDDEN), jnp.float32)
    p['out_b'] = jnp.zeros((1, HIDDEN), jnp.float32)

    # ---- packed per-layer slabs (128-lane aligned; no in-kernel slice straddles a tile) ----
    wqkv_rows, wo_rows, wdk_cols, wdv_cols, baux_rows = [], [], [], [], []
    ones_h = jnp.ones((1, HIDDEN), jnp.float32)
    zeros_h = jnp.zeros((1, HIDDEN), jnp.float32)
    for li in range(NUM_LAYERS):
        lk = jax.random.split(keys[8 + li], 6)
        wq = _xavier(lk[0], HIDDEN, HIDDEN)
        wk = _xavier(lk[1], HIDDEN, HIDDEN)
        wv = _xavier(lk[2], HIDDEN, HIDDEN)
        wdk = _xavier(lk[3], HIDDEN, HIDDEN)
        wdv = _xavier(lk[4], HIDDEN, HIDDEN)
        wo = _xavier(lk[5], HIDDEN, HIDDEN)
        wqkv_rows.append(jnp.concatenate([wq, wk, wv], axis=1))   # (H, 3H)
        wo_rows.append(wo)                                        # (H, H)
        wdk_cols.append(wdk)
        wdv_cols.append(wdv)
        # sublane-stacked bias/LN rows: bq, bk, bv, bo, ln_g, ln_b, pad, pad
        baux_rows.append(jnp.concatenate(
            [zeros_h, zeros_h, zeros_h, zeros_h, ones_h, zeros_h, zeros_h, zeros_h],
            axis=0))                                              # (8, H)

    p['attn_wqkv'] = jnp.stack(wqkv_rows).astype(jnp.bfloat16)    # (L, H, 3H)
    p['attn_wo'] = jnp.stack(wo_rows).astype(jnp.bfloat16)        # (L, H, H)

    pad = jnp.zeros((HIDDEN, 128 - NUM_LAYERS * HIDDEN), jnp.float32)
    p['attn_wdkdv'] = jnp.concatenate(
        wdk_cols + [pad] + wdv_cols + [pad], axis=1).astype(jnp.bfloat16)  # (H, 256)
    p['attn_bdkdv'] = jnp.zeros((1, DKDV_LANES), jnp.float32)     # dk/dv biases (zero init)
    p['attn_baux'] = jnp.stack(baux_rows)                         # (L, 8, H) f32
    return p


# --------------------------------- full forward pass --------------------------------
def torchmd_s_forward(params, z, pos, batch):
    """Mirrors TorchMD_S.forward: returns (x, None, z, pos, batch)."""
    N = z.shape[0]

    # Embedding lookup
    x = params['embedding'][z]                                     # (N, H)

    # Distance module (dense): all pairs within cutoff, same molecule, self loops
    diff = pos[:, None, :] - pos[None, :, :]
    dist = jnp.sqrt(jnp.sum(diff * diff, axis=-1))                 # (N, N)
    same_batch = batch[:, None] == batch[None, :]
    edge_mask = same_batch & (dist < CUTOFF_UPPER)
    mask_f = edge_mask.astype(jnp.float32)

    # Cosine cutoff (cutoff_lower == 0 branch)
    cut = 0.5 * (jnp.cos(dist * (math.pi / CUTOFF_UPPER)) + 1.0)
    cut = cut * (dist < CUTOFF_UPPER).astype(jnp.float32)

    # ExpNormal RBF expansion (dense, (N, N, NUM_RBF))
    alpha = 5.0 / (CUTOFF_UPPER - CUTOFF_LOWER)
    rbf = cut[..., None] * jnp.exp(
        -params['rbf_betas'] *
        (jnp.exp(alpha * (-dist[..., None] + CUTOFF_LOWER)) - params['rbf_means']) ** 2)

    # NeighborEmbedding (self loops removed, as in the module)
    c_noself = cut * mask_f * (1.0 - jnp.eye(N, dtype=jnp.float32))
    w_edge = (rbf @ params['ne_wdist'] + params['ne_bdist']) * c_noself[..., None]
    x_nbr_src = params['ne_embedding'][z]
    agg = jnp.einsum('ijh,jh->ih', w_edge, x_nbr_src)
    x = jnp.concatenate([x, agg], axis=-1) @ params['ne_wcomb'] + params['ne_bcomb']

    # Layer-invariant edge quantities for the fused kernel (edge row e = i*N + j):
    rbf_flat = rbf.reshape(N * N, NUM_RBF).astype(jnp.bfloat16)    # rbf_proj done in-kernel
    cut_flat = (cut * mask_f).reshape(N * N, 1)                    # cosine cutoff * edge mask

    # Fused attention stack (hot path): single Pallas kernel over all layers
    x = attention_stack(x, rbf_flat, cut_flat, params['head_P'],
                        params['rbf_w'], params['rbf_b'],
                        params['attn_wqkv'], params['attn_wo'],
                        params['attn_wdkdv'], params['attn_bdkdv'],
                        params['attn_baux'])

    # out_norm
    mean = jnp.mean(x, axis=-1, keepdims=True)
    var = jnp.mean((x - mean) ** 2, axis=-1, keepdims=True)
    x = (x - mean) * jax.lax.rsqrt(var + LN_EPS) * params['out_g'] + params['out_b']
    return x, None, z, pos, batch


# --------------------------------------- main ---------------------------------------
if __name__ == "__main__":
    key = jax.random.PRNGKey(0)
    kz, kpos, kp = jax.random.split(key, 3)

    z = jax.random.randint(kz, (N_ATOMS,), 1, MAX_Z, dtype=jnp.int32)
    pos = jax.random.uniform(kpos, (N_ATOMS, 3), jnp.float32, 0.0, 4.0)
    batch = jnp.concatenate([jnp.zeros(N_ATOMS // 2, jnp.int32),
                             jnp.ones(N_ATOMS - N_ATOMS // 2, jnp.int32)])

    params = init_params(kp)
    fwd = jax.jit(torchmd_s_forward)
    x_out, _, z_out, pos_out, batch_out = fwd(params, z, pos, batch)
    jax.block_until_ready(x_out)

    assert x_out.shape == (N_ATOMS, HIDDEN)
    assert bool(jnp.all(jnp.isfinite(x_out)))
    print("KERNEL_OK")
</pallas_src>

<mosaic_0001>
module attributes {stable_mosaic.version = 11 : i64} {
  func.func @_fused_layers_kernel(%arg0: memref<16x32xf32, #tpu.memory_space<vmem>>, %arg1: memref<256x16xbf16, #tpu.memory_space<vmem>>, %arg2: memref<256x1xf32, #tpu.memory_space<vmem>>, %arg3: memref<32x32xbf16, #tpu.memory_space<vmem>>, %arg4: memref<16x32xbf16, #tpu.memory_space<vmem>>, %arg5: memref<1x32xf32, #tpu.memory_space<vmem>>, %arg6: memref<3x32x96xbf16, #tpu.memory_space<vmem>>, %arg7: memref<3x32x32xbf16, #tpu.memory_space<vmem>>, %arg8: memref<32x256xbf16, #tpu.memory_space<vmem>>, %arg9: memref<1x256xf32, #tpu.memory_space<vmem>>, %arg10: memref<3x8x32xf32, #tpu.memory_space<vmem>>, %arg11: memref<16x32xf32, #tpu.memory_space<vmem>>) attributes {dimension_semantics = [], scalar_prefetch = 0 : i64, scratch_operands = 0 : i64, tpu.core_type = #tpu.core_type<tc>} {
    %c0 = arith.constant 0 : index
    %c0_0 = arith.constant 0 : index
    %0 = vector.load %arg2[%c0, %c0_0] : memref<256x1xf32, #tpu.memory_space<vmem>>, vector<256x1xf32>
    %c0_1 = arith.constant 0 : index
    %c0_2 = arith.constant 0 : index
    %1 = vector.load %arg3[%c0_1, %c0_2] : memref<32x32xbf16, #tpu.memory_space<vmem>>, vector<32x32xbf16>
    %c0_3 = arith.constant 0 : index
    %c0_4 = arith.constant 0 : index
    %2 = vector.load %arg1[%c0_3, %c0_4] : memref<256x16xbf16, #tpu.memory_space<vmem>>, vector<256x16xbf16>
    %c0_5 = arith.constant 0 : index
    %c0_6 = arith.constant 0 : index
    %3 = vector.load %arg4[%c0_5, %c0_6] : memref<16x32xbf16, #tpu.memory_space<vmem>>, vector<16x32xbf16>
    %cst = arith.constant dense<0.000000e+00> : vector<256x32xf32>
    %4 = tpu.matmul %2, %3, %cst {dimension_numbers = #tpu.dot_dimension_numbers<[1], [0], [0], [1], [0, 0, 1, 1], [], []>} : vector<256x16xbf16>, vector<16x32xbf16>, vector<256x32xf32> -> vector<256x32xf32>
    %c0_7 = arith.constant 0 : index
    %c0_8 = arith.constant 0 : index
    %5 = vector.load %arg5[%c0_7, %c0_8] : memref<1x32xf32, #tpu.memory_space<vmem>>, vector<1x32xf32>
    %6 = vector.broadcast %5 : vector<1x32xf32> to vector<256x32xf32>
    %7 = arith.addf %4, %6 : vector<256x32xf32>
    %8 = arith.truncf %7 : vector<256x32xf32> to vector<256x32xbf16>
    %c0_9 = arith.constant 0 : index
    %c0_10 = arith.constant 0 : index
    %9 = vector.load %arg8[%c0_9, %c0_10] : memref<32x256xbf16, #tpu.memory_space<vmem>>, vector<32x256xbf16>
    %cst_11 = arith.constant dense<0.000000e+00> : vector<256x256xf32>
    %10 = tpu.matmul %8, %9, %cst_11 {dimension_numbers = #tpu.dot_dimension_numbers<[1], [0], [0], [1], [0, 0, 1, 1], [], []>} : vector<256x32xbf16>, vector<32x256xbf16>, vector<256x256xf32> -> vector<256x256xf32>
    %c0_12 = arith.constant 0 : index
    %c0_13 = arith.constant 0 : index
    %11 = vector.load %arg9[%c0_12, %c0_13] : memref<1x256xf32, #tpu.memory_space<vmem>>, vector<1x256xf32>
    %12 = vector.broadcast %11 : vector<1x256xf32> to vector<256x256xf32>
    %13 = arith.addf %10, %12 : vector<256x256xf32>
    %14 = arith.negf %13 : vector<256x256xf32>
    %15 = math.exp %14 : vector<256x256xf32>
    %cst_14 = arith.constant 1.000000e+00 : f32
    %16 = vector.broadcast %cst_14 : f32 to vector<256x256xf32>
    %17 = arith.addf %16, %15 : vector<256x256xf32>
    %18 = arith.divf %16, %17 : vector<256x256xf32>
    %19 = arith.mulf %13, %18 : vector<256x256xf32>
    %20 = vector.extract_strided_slice %19 {offsets = [0, 0], sizes = [256, 128], strides = [1, 1]} : vector<256x256xf32> to vector<256x128xf32>
    %21 = vector.extract_strided_slice %19 {offsets = [0, 128], sizes = [256, 128], strides = [1, 1]} : vector<256x256xf32> to vector<256x128xf32>
    %22 = vector.broadcast %0 : vector<256x1xf32> to vector<256x128xf32>
    %23 = arith.mulf %21, %22 : vector<256x128xf32>
    %c0_15 = arith.constant 0 : index
    %c0_16 = arith.constant 0 : index
    %24 = vector.load %arg0[%c0_15, %c0_16] : memref<16x32xf32, #tpu.memory_space<vmem>>, vector<16x32xf32>
    %c0_17 = arith.constant 0 : index
    %c0_18 = arith.constant 0 : index
    %c0_19 = arith.constant 0 : index
    %25 = vector.load %arg6[%c0_17, %c0_18, %c0_19] : memref<3x32x96xbf16, #tpu.memory_space<vmem>>, vector<1x32x96xbf16>
    %26 = vector.shape_cast %25 : vector<1x32x96xbf16> to vector<32x96xbf16>
    %c0_20 = arith.constant 0 : index
    %c0_21 = arith.constant 0 : index
    %c0_22 = arith.constant 0 : index
    %27 = vector.load %arg7[%c0_20, %c0_21, %c0_22] : memref<3x32x32xbf16, #tpu.memory_space<vmem>>, vector<1x32x32xbf16>
    %28 = vector.shape_cast %27 : vector<1x32x32xbf16> to vector<32x32xbf16>
    %c0_23 = arith.constant 0 : index
    %c0_24 = arith.constant 0 : index
    %c0_25 = arith.constant 0 : index
    %29 = vector.load %arg10[%c0_23, %c0_24, %c0_25] : memref<3x8x32xf32, #tpu.memory_space<vmem>>, vector<1x8x32xf32>
    %30 = vector.shape_cast %29 : vector<1x8x32xf32> to vector<8x32xf32>
    %cst_26 = arith.constant dense<0.000000e+00> : vector<16xf32>
    %31 = vector.multi_reduction <add>, %24, %cst_26 [1] : vector<16x32xf32> to vector<16xf32>
    %32 = vector.shape_cast %31 : vector<16xf32> to vector<16x1xf32>
    %cst_27 = arith.constant 3.200000e+01 : f32
    %33 = vector.broadcast %cst_27 : f32 to vector<16x1xf32>
    %34 = arith.divf %32, %33 : vector<16x1xf32>
    %35 = vector.broadcast %34 : vector<16x1xf32> to vector<16x32xf32>
    %36 = arith.subf %24, %35 : vector<16x32xf32>
    %37 = arith.mulf %36, %36 : vector<16x32xf32>
    %cst_28 = arith.constant dense<0.000000e+00> : vector<16xf32>
    %38 = vector.multi_reduction <add>, %37, %cst_28 [1] : vector<16x32xf32> to vector<16xf32>
    %39 = vector.shape_cast %38 : vector<16xf32> to vector<16x1xf32>
    %cst_29 = arith.constant 3.200000e+01 : f32
    %40 = vector.broadcast %cst_29 : f32 to vector<16x1xf32>
    %41 = arith.divf %39, %40 : vector<16x1xf32>
    %42 = vector.broadcast %34 : vector<16x1xf32> to vector<16x32xf32>
    %43 = arith.subf %24, %42 : vector<16x32xf32>
    %cst_30 = arith.constant 9.99999974E-6 : f32
    %44 = vector.broadcast %cst_30 : f32 to vector<16x1xf32>
    %45 = arith.addf %41, %44 : vector<16x1xf32>
    %46 = math.rsqrt %45 : vector<16x1xf32>
    %47 = vector.broadcast %46 : vector<16x1xf32> to vector<16x32xf32>
    %48 = arith.mulf %43, %47 : vector<16x32xf32>
    %49 = vector.extract_strided_slice %30 {offsets = [4, 0], sizes = [1, 32], strides = [1, 1]} : vector<8x32xf32> to vector<1x32xf32>
    %50 = vector.broadcast %49 : vector<1x32xf32> to vector<16x32xf32>
    %51 = arith.mulf %48, %50 : vector<16x32xf32>
    %52 = vector.extract_strided_slice %30 {offsets = [5, 0], sizes = [1, 32], strides = [1, 1]} : vector<8x32xf32> to vector<1x32xf32>
    %53 = vector.broadcast %52 : vector<1x32xf32> to vector<16x32xf32>
    %54 = arith.addf %51, %53 : vector<16x32xf32>
    %55 = arith.truncf %54 : vector<16x32xf32> to vector<16x32xbf16>
    %cst_31 = arith.constant dense<0.000000e+00> : vector<16x96xf32>
    %56 = tpu.matmul %55, %26, %cst_31 {dimension_numbers = #tpu.dot_dimension_numbers<[1], [0], [0], [1], [0, 0, 1, 1], [], []>} : vector<16x32xbf16>, vector<32x96xbf16>, vector<16x96xf32> -> vector<16x96xf32>
    %57 = vector.extract_strided_slice %56 {offsets = [0, 0], sizes = [16, 32], strides = [1, 1]} : vector<16x96xf32> to vector<16x32xf32>
    %58 = vector.extract_strided_slice %30 {offsets = [0, 0], sizes = [1, 32], strides = [1, 1]} : vector<8x32xf32> to vector<1x32xf32>
    %59 = vector.broadcast %58 : vector<1x32xf32> to vector<16x32xf32>
    %60 = arith.addf %57, %59 : vector<16x32xf32>
    %61 = vector.extract_strided_slice %56 {offsets = [0, 32], sizes = [16, 32], strides = [1, 1]} : vector<16x96xf32> to vector<16x32xf32>
    %62 = vector.extract_strided_slice %30 {offsets = [1, 0], sizes = [1, 32], strides = [1, 1]} : vector<8x32xf32> to vector<1x32xf32>
    %63 = vector.broadcast %62 : vector<1x32xf32> to vector<16x32xf32>
    %64 = arith.addf %61, %63 : vector<16x32xf32>
    %65 = vector.extract_strided_slice %56 {offsets = [0, 64], sizes = [16, 32], strides = [1, 1]} : vector<16x96xf32> to vector<16x32xf32>
    %66 = vector.extract_strided_slice %30 {offsets = [2, 0], sizes = [1, 32], strides = [1, 1]} : vector<8x32xf32> to vector<1x32xf32>
    %67 = vector.broadcast %66 : vector<1x32xf32> to vector<16x32xf32>
    %68 = arith.addf %65, %67 : vector<16x32xf32>
    %69 = vector.extract_strided_slice %20 {offsets = [0, 0], sizes = [256, 32], strides = [1, 1]} : vector<256x128xf32> to vector<256x32xf32>
    %70 = vector.extract_strided_slice %23 {offsets = [0, 0], sizes = [256, 32], strides = [1, 1]} : vector<256x128xf32> to vector<256x32xf32>
    %71 = vector.shape_cast %60 : vector<16x32xf32> to vector<16x1x32xf32>
    %72 = vector.shape_cast %64 : vector<16x32xf32> to vector<1x16x32xf32>
    %73 = vector.broadcast %71 : vector<16x1x32xf32> to vector<16x16x32xf32>
    %74 = vector.broadcast %72 : vector<1x16x32xf32> to vector<16x16x32xf32>
    %75 = arith.mulf %73, %74 : vector<16x16x32xf32>
    %76 = vector.shape_cast %75 : vector<16x16x32xf32> to vector<256x32xf32>
    %77 = arith.mulf %76, %69 : vector<256x32xf32>
    %78 = arith.truncf %77 : vector<256x32xf32> to vector<256x32xbf16>
    %cst_32 = arith.constant dense<0.000000e+00> : vector<256x32xf32>
    %79 = tpu.matmul %78, %1, %cst_32 {dimension_numbers = #tpu.dot_dimension_numbers<[1], [0], [0], [1], [0, 0, 1, 1], [], []>} : vector<256x32xbf16>, vector<32x32xbf16>, vector<256x32xf32> -> vector<256x32xf32>
    %80 = arith.negf %79 : vector<256x32xf32>
    %81 = math.exp %80 : vector<256x32xf32>
    %cst_33 = arith.constant 1.000000e+00 : f32
    %82 = vector.broadcast %cst_33 : f32 to vector<256x32xf32>
    %83 = arith.addf %82, %81 : vector<256x32xf32>
    %84 = arith.divf %82, %83 : vector<256x32xf32>
    %85 = arith.mulf %79, %84 : vector<256x32xf32>
    %86 = vector.shape_cast %68 : vector<16x32xf32> to vector<1x16x32xf32>
    %87 = vector.shape_cast %86 : vector<1x16x32xf32> to vector<1x16x32xf32>
    %88 = vector.broadcast %87 : vector<1x16x32xf32> to vector<16x16x32xf32>
    %89 = vector.shape_cast %88 : vector<16x16x32xf32> to vector<256x32xf32>
    %90 = arith.mulf %89, %70 : vector<256x32xf32>
    %91 = arith.mulf %90, %85 : vector<256x32xf32>
    %92 = vector.shape_cast %91 : vector<256x32xf32> to vector<16x16x32xf32>
    %cst_34 = arith.constant dense<0.000000e+00> : vector<16x32xf32>
    %93 = vector.multi_reduction <add>, %92, %cst_34 [1] : vector<16x16x32xf32> to vector<16x32xf32>
    %94 = arith.truncf %93 : vector<16x32xf32> to vector<16x32xbf16>
    %cst_35 = arith.constant dense<0.000000e+00> : vector<16x32xf32>
    %95 = tpu.matmul %94, %28, %cst_35 {dimension_numbers = #tpu.dot_dimension_numbers<[1], [0], [0], [1], [0, 0, 1, 1], [], []>} : vector<16x32xbf16>, vector<32x32xbf16>, vector<16x32xf32> -> vector<16x32xf32>
    %96 = vector.extract_strided_slice %30 {offsets = [3, 0], sizes = [1, 32], strides = [1, 1]} : vector<8x32xf32> to vector<1x32xf32>
    %97 = vector.broadcast %96 : vector<1x32xf32> to vector<16x32xf32>
    %98 = arith.addf %95, %97 : vector<16x32xf32>
    %99 = arith.addf %24, %98 : vector<16x32xf32>
    %c1 = arith.constant 1 : index
    %c0_36 = arith.constant 0 : index
    %c0_37 = arith.constant 0 : index
    %100 = vector.load %arg6[%c1, %c0_36, %c0_37] : memref<3x32x96xbf16, #tpu.memory_space<vmem>>, vector<1x32x96xbf16>
    %101 = vector.shape_cast %100 : vector<1x32x96xbf16> to vector<32x96xbf16>
    %c1_38 = arith.constant 1 : index
    %c0_39 = arith.constant 0 : index
    %c0_40 = arith.constant 0 : index
    %102 = vector.load %arg7[%c1_38, %c0_39, %c0_40] : memref<3x32x32xbf16, #tpu.memory_space<vmem>>, vector<1x32x32xbf16>
    %103 = vector.shape_cast %102 : vector<1x32x32xbf16> to vector<32x32xbf16>
    %c1_41 = arith.constant 1 : index
    %c0_42 = arith.constant 0 : index
    %c0_43 = arith.constant 0 : index
    %104 = vector.load %arg10[%c1_41, %c0_42, %c0_43] : memref<3x8x32xf32, #tpu.memory_space<vmem>>, vector<1x8x32xf32>
    %105 = vector.shape_cast %104 : vector<1x8x32xf32> to vector<8x32xf32>
    %cst_44 = arith.constant dense<0.000000e+00> : vector<16xf32>
    %106 = vector.multi_reduction <add>, %99, %cst_44 [1] : vector<16x32xf32> to vector<16xf32>
    %107 = vector.shape_cast %106 : vector<16xf32> to vector<16x1xf32>
    %cst_45 = arith.constant 3.200000e+01 : f32
    %108 = vector.broadcast %cst_45 : f32 to vector<16x1xf32>
    %109 = arith.divf %107, %108 : vector<16x1xf32>
    %110 = vector.broadcast %109 : vector<16x1xf32> to vector<16x32xf32>
    %111 = arith.subf %99, %110 : vector<16x32xf32>
    %112 = arith.mulf %111, %111 : vector<16x32xf32>
    %cst_46 = arith.constant dense<0.000000e+00> : vector<16xf32>
    %113 = vector.multi_reduction <add>, %112, %cst_46 [1] : vector<16x32xf32> to vector<16xf32>
    %114 = vector.shape_cast %113 : vector<16xf32> to vector<16x1xf32>
    %cst_47 = arith.constant 3.200000e+01 : f32
    %115 = vector.broadcast %cst_47 : f32 to vector<16x1xf32>
    %116 = arith.divf %114, %115 : vector<16x1xf32>
    %117 = vector.broadcast %109 : vector<16x1xf32> to vector<16x32xf32>
    %118 = arith.subf %99, %117 : vector<16x32xf32>
    %cst_48 = arith.constant 9.99999974E-6 : f32
    %119 = vector.broadcast %cst_48 : f32 to vector<16x1xf32>
    %120 = arith.addf %116, %119 : vector<16x1xf32>
    %121 = math.rsqrt %120 : vector<16x1xf32>
    %122 = vector.broadcast %121 : vector<16x1xf32> to vector<16x32xf32>
    %123 = arith.mulf %118, %122 : vector<16x32xf32>
    %124 = vector.extract_strided_slice %105 {offsets = [4, 0], sizes = [1, 32], strides = [1, 1]} : vector<8x32xf32> to vector<1x32xf32>
    %125 = vector.broadcast %124 : vector<1x32xf32> to vector<16x32xf32>
    %126 = arith.mulf %123, %125 : vector<16x32xf32>
    %127 = vector.extract_strided_slice %105 {offsets = [5, 0], sizes = [1, 32], strides = [1, 1]} : vector<8x32xf32> to vector<1x32xf32>
    %128 = vector.broadcast %127 : vector<1x32xf32> to vector<16x32xf32>
    %129 = arith.addf %126, %128 : vector<16x32xf32>
    %130 = arith.truncf %129 : vector<16x32xf32> to vector<16x32xbf16>
    %cst_49 = arith.constant dense<0.000000e+00> : vector<16x96xf32>
    %131 = tpu.matmul %130, %101, %cst_49 {dimension_numbers = #tpu.dot_dimension_numbers<[1], [0], [0], [1], [0, 0, 1, 1], [], []>} : vector<16x32xbf16>, vector<32x96xbf16>, vector<16x96xf32> -> vector<16x96xf32>
    %132 = vector.extract_strided_slice %131 {offsets = [0, 0], sizes = [16, 32], strides = [1, 1]} : vector<16x96xf32> to vector<16x32xf32>
    %133 = vector.extract_strided_slice %105 {offsets = [0, 0], sizes = [1, 32], strides = [1, 1]} : vector<8x32xf32> to vector<1x32xf32>
    %134 = vector.broadcast %133 : vector<1x32xf32> to vector<16x32xf32>
    %135 = arith.addf %132, %134 : vector<16x32xf32>
    %136 = vector.extract_strided_slice %131 {offsets = [0, 32], sizes = [16, 32], strides = [1, 1]} : vector<16x96xf32> to vector<16x32xf32>
    %137 = vector.extract_strided_slice %105 {offsets = [1, 0], sizes = [1, 32], strides = [1, 1]} : vector<8x32xf32> to vector<1x32xf32>
    %138 = vector.broadcast %137 : vector<1x32xf32> to vector<16x32xf32>
    %139 = arith.addf %136, %138 : vector<16x32xf32>
    %140 = vector.extract_strided_slice %131 {offsets = [0, 64], sizes = [16, 32], strides = [1, 1]} : vector<16x96xf32> to vector<16x32xf32>
    %141 = vector.extract_strided_slice %105 {offsets = [2, 0], sizes = [1, 32], strides = [1, 1]} : vector<8x32xf32> to vector<1x32xf32>
    %142 = vector.broadcast %141 : vector<1x32xf32> to vector<16x32xf32>
    %143 = arith.addf %140, %142 : vector<16x32xf32>
    %144 = vector.extract_strided_slice %20 {offsets = [0, 32], sizes = [256, 32], strides = [1, 1]} : vector<256x128xf32> to vector<256x32xf32>
    %145 = vector.extract_strided_slice %23 {offsets = [0, 32], sizes = [256, 32], strides = [1, 1]} : vector<256x128xf32> to vector<256x32xf32>
    %146 = vector.shape_cast %135 : vector<16x32xf32> to vector<16x1x32xf32>
    %147 = vector.shape_cast %139 : vector<16x32xf32> to vector<1x16x32xf32>
    %148 = vector.broadcast %146 : vector<16x1x32xf32> to vector<16x16x32xf32>
    %149 = vector.broadcast %147 : vector<1x16x32xf32> to vector<16x16x32xf32>
    %150 = arith.mulf %148, %149 : vector<16x16x32xf32>
    %151 = vector.shape_cast %150 : vector<16x16x32xf32> to vector<256x32xf32>
    %152 = arith.mulf %151, %144 : vector<256x32xf32>
    %153 = arith.truncf %152 : vector<256x32xf32> to vector<256x32xbf16>
    %cst_50 = arith.constant dense<0.000000e+00> : vector<256x32xf32>
    %154 = tpu.matmul %153, %1, %cst_50 {dimension_numbers = #tpu.dot_dimension_numbers<[1], [0], [0], [1], [0, 0, 1, 1], [], []>} : vector<256x32xbf16>, vector<32x32xbf16>, vector<256x32xf32> -> vector<256x32xf32>
    %155 = arith.negf %154 : vector<256x32xf32>
    %156 = math.exp %155 : vector<256x32xf32>
    %cst_51 = arith.constant 1.000000e+00 : f32
    %157 = vector.broadcast %cst_51 : f32 to vector<256x32xf32>
    %158 = arith.addf %157, %156 : vector<256x32xf32>
    %159 = arith.divf %157, %158 : vector<256x32xf32>
    %160 = arith.mulf %154, %159 : vector<256x32xf32>
    %161 = vector.shape_cast %143 : vector<16x32xf32> to vector<1x16x32xf32>
    %162 = vector.shape_cast %161 : vector<1x16x32xf32> to vector<1x16x32xf32>
    %163 = vector.broadcast %162 : vector<1x16x32xf32> to vector<16x16x32xf32>
    %164 = vector.shape_cast %163 : vector<16x16x32xf32> to vector<256x32xf32>
    %165 = arith.mulf %164, %145 : vector<256x32xf32>
    %166 = arith.mulf %165, %160 : vector<256x32xf32>
    %167 = vector.shape_cast %166 : vector<256x32xf32> to vector<16x16x32xf32>
    %cst_52 = arith.constant dense<0.000000e+00> : vector<16x32xf32>
    %168 = vector.multi_reduction <add>, %167, %cst_52 [1] : vector<16x16x32xf32> to vector<16x32xf32>
    %169 = arith.truncf %168 : vector<16x32xf32> to vector<16x32xbf16>
    %cst_53 = arith.constant dense<0.000000e+00> : vector<16x32xf32>
    %170 = tpu.matmul %169, %103, %cst_53 {dimension_numbers = #tpu.dot_dimension_numbers<[1], [0], [0], [1], [0, 0, 1, 1], [], []>} : vector<16x32xbf16>, vector<32x32xbf16>, vector<16x32xf32> -> vector<16x32xf32>
    %171 = vector.extract_strided_slice %105 {offsets = [3, 0], sizes = [1, 32], strides = [1, 1]} : vector<8x32xf32> to vector<1x32xf32>
    %172 = vector.broadcast %171 : vector<1x32xf32> to vector<16x32xf32>
    %173 = arith.addf %170, %172 : vector<16x32xf32>
    %174 = arith.addf %99, %173 : vector<16x32xf32>
    %c2 = arith.constant 2 : index
    %c0_54 = arith.constant 0 : index
    %c0_55 = arith.constant 0 : index
    %175 = vector.load %arg6[%c2, %c0_54, %c0_55] : memref<3x32x96xbf16, #tpu.memory_space<vmem>>, vector<1x32x96xbf16>
    %176 = vector.shape_cast %175 : vector<1x32x96xbf16> to vector<32x96xbf16>
    %c2_56 = arith.constant 2 : index
    %c0_57 = arith.constant 0 : index
    %c0_58 = arith.constant 0 : index
    %177 = vector.load %arg7[%c2_56, %c0_57, %c0_58] : memref<3x32x32xbf16, #tpu.memory_space<vmem>>, vector<1x32x32xbf16>
    %178 = vector.shape_cast %177 : vector<1x32x32xbf16> to vector<32x32xbf16>
    %c2_59 = arith.constant 2 : index
    %c0_60 = arith.constant 0 : index
    %c0_61 = arith.constant 0 : index
    %179 = vector.load %arg10[%c2_59, %c0_60, %c0_61] : memref<3x8x32xf32, #tpu.memory_space<vmem>>, vector<1x8x32xf32>
    %180 = vector.shape_cast %179 : vector<1x8x32xf32> to vector<8x32xf32>
    %cst_62 = arith.constant dense<0.000000e+00> : vector<16xf32>
    %181 = vector.multi_reduction <add>, %174, %cst_62 [1] : vector<16x32xf32> to vector<16xf32>
    %182 = vector.shape_cast %181 : vector<16xf32> to vector<16x1xf32>
    %cst_63 = arith.constant 3.200000e+01 : f32
    %183 = vector.broadcast %cst_63 : f32 to vector<16x1xf32>
    %184 = arith.divf %182, %183 : vector<16x1xf32>
    %185 = vector.broadcast %184 : vector<16x1xf32> to vector<16x32xf32>
    %186 = arith.subf %174, %185 : vector<16x32xf32>
    %187 = arith.mulf %186, %186 : vector<16x32xf32>
    %cst_64 = arith.constant dense<0.000000e+00> : vector<16xf32>
    %188 = vector.multi_reduction <add>, %187, %cst_64 [1] : vector<16x32xf32> to vector<16xf32>
    %189 = vector.shape_cast %188 : vector<16xf32> to vector<16x1xf32>
    %cst_65 = arith.constant 3.200000e+01 : f32
    %190 = vector.broadcast %cst_65 : f32 to vector<16x1xf32>
    %191 = arith.divf %189, %190 : vector<16x1xf32>
    %192 = vector.broadcast %184 : vector<16x1xf32> to vector<16x32xf32>
    %193 = arith.subf %174, %192 : vector<16x32xf32>
    %cst_66 = arith.constant 9.99999974E-6 : f32
    %194 = vector.broadcast %cst_66 : f32 to vector<16x1xf32>
    %195 = arith.addf %191, %194 : vector<16x1xf32>
    %196 = math.rsqrt %195 : vector<16x1xf32>
    %197 = vector.broadcast %196 : vector<16x1xf32> to vector<16x32xf32>
    %198 = arith.mulf %193, %197 : vector<16x32xf32>
    %199 = vector.extract_strided_slice %180 {offsets = [4, 0], sizes = [1, 32], strides = [1, 1]} : vector<8x32xf32> to vector<1x32xf32>
    %200 = vector.broadcast %199 : vector<1x32xf32> to vector<16x32xf32>
    %201 = arith.mulf %198, %200 : vector<16x32xf32>
    %202 = vector.extract_strided_slice %180 {offsets = [5, 0], sizes = [1, 32], strides = [1, 1]} : vector<8x32xf32> to vector<1x32xf32>
    %203 = vector.broadcast %202 : vector<1x32xf32> to vector<16x32xf32>
    %204 = arith.addf %201, %203 : vector<16x32xf32>
    %205 = arith.truncf %204 : vector<16x32xf32> to vector<16x32xbf16>
    %cst_67 = arith.constant dense<0.000000e+00> : vector<16x96xf32>
    %206 = tpu.matmul %205, %176, %cst_67 {dimension_numbers = #tpu.dot_dimension_numbers<[1], [0], [0], [1], [0, 0, 1, 1], [], []>} : vector<16x32xbf16>, vector<32x96xbf16>, vector<16x96xf32> -> vector<16x96xf32>
    %207 = vector.extract_strided_slice %206 {offsets = [0, 0], sizes = [16, 32], strides = [1, 1]} : vector<16x96xf32> to vector<16x32xf32>
    %208 = vector.extract_strided_slice %180 {offsets = [0, 0], sizes = [1, 32], strides = [1, 1]} : vector<8x32xf32> to vector<1x32xf32>
    %209 = vector.broadcast %208 : vector<1x32xf32> to vector<16x32xf32>
    %210 = arith.addf %207, %209 : vector<16x32xf32>
    %211 = vector.extract_strided_slice %206 {offsets = [0, 32], sizes = [16, 32], strides = [1, 1]} : vector<16x96xf32> to vector<16x32xf32>
    %212 = vector.extract_strided_slice %180 {offsets = [1, 0], sizes = [1, 32], strides = [1, 1]} : vector<8x32xf32> to vector<1x32xf32>
    %213 = vector.broadcast %212 : vector<1x32xf32> to vector<16x32xf32>
    %214 = arith.addf %211, %213 : vector<16x32xf32>
    %215 = vector.extract_strided_slice %206 {offsets = [0, 64], sizes = [16, 32], strides = [1, 1]} : vector<16x96xf32> to vector<16x32xf32>
    %216 = vector.extract_strided_slice %180 {offsets = [2, 0], sizes = [1, 32], strides = [1, 1]} : vector<8x32xf32> to vector<1x32xf32>
    %217 = vector.broadcast %216 : vector<1x32xf32> to vector<16x32xf32>
    %218 = arith.addf %215, %217 : vector<16x32xf32>
    %219 = vector.extract_strided_slice %20 {offsets = [0, 64], sizes = [256, 32], strides = [1, 1]} : vector<256x128xf32> to vector<256x32xf32>
    %220 = vector.extract_strided_slice %23 {offsets = [0, 64], sizes = [256, 32], strides = [1, 1]} : vector<256x128xf32> to vector<256x32xf32>
    %221 = vector.shape_cast %210 : vector<16x32xf32> to vector<16x1x32xf32>
    %222 = vector.shape_cast %214 : vector<16x32xf32> to vector<1x16x32xf32>
    %223 = vector.broadcast %221 : vector<16x1x32xf32> to vector<16x16x32xf32>
    %224 = vector.broadcast %222 : vector<1x16x32xf32> to vector<16x16x32xf32>
    %225 = arith.mulf %223, %224 : vector<16x16x32xf32>
    %226 = vector.shape_cast %225 : vector<16x16x32xf32> to vector<256x32xf32>
    %227 = arith.mulf %226, %219 : vector<256x32xf32>
    %228 = arith.truncf %227 : vector<256x32xf32> to vector<256x32xbf16>
    %cst_68 = arith.constant dense<0.000000e+00> : vector<256x32xf32>
    %229 = tpu.matmul %228, %1, %cst_68 {dimension_numbers = #tpu.dot_dimension_numbers<[1], [0], [0], [1], [0, 0, 1, 1], [], []>} : vector<256x32xbf16>, vector<32x32xbf16>, vector<256x32xf32> -> vector<256x32xf32>
    %230 = arith.negf %229 : vector<256x32xf32>
    %231 = math.exp %230 : vector<256x32xf32>
    %cst_69 = arith.constant 1.000000e+00 : f32
    %232 = vector.broadcast %cst_69 : f32 to vector<256x32xf32>
    %233 = arith.addf %232, %231 : vector<256x32xf32>
    %234 = arith.divf %232, %233 : vector<256x32xf32>
    %235 = arith.mulf %229, %234 : vector<256x32xf32>
    %236 = vector.shape_cast %218 : vector<16x32xf32> to vector<1x16x32xf32>
    %237 = vector.shape_cast %236 : vector<1x16x32xf32> to vector<1x16x32xf32>
    %238 = vector.broadcast %237 : vector<1x16x32xf32> to vector<16x16x32xf32>
    %239 = vector.shape_cast %238 : vector<16x16x32xf32> to vector<256x32xf32>
    %240 = arith.mulf %239, %220 : vector<256x32xf32>
    %241 = arith.mulf %240, %235 : vector<256x32xf32>
    %242 = vector.shape_cast %241 : vector<256x32xf32> to vector<16x16x32xf32>
    %cst_70 = arith.constant dense<0.000000e+00> : vector<16x32xf32>
    %243 = vector.multi_reduction <add>, %242, %cst_70 [1] : vector<16x16x32xf32> to vector<16x32xf32>
    %244 = arith.truncf %243 : vector<16x32xf32> to vector<16x32xbf16>
    %cst_71 = arith.constant dense<0.000000e+00> : vector<16x32xf32>
    %245 = tpu.matmul %244, %178, %cst_71 {dimension_numbers = #tpu.dot_dimension_numbers<[1], [0], [0], [1], [0, 0, 1, 1], [], []>} : vector<16x32xbf16>, vector<32x32xbf16>, vector<16x32xf32> -> vector<16x32xf32>
    %246 = vector.extract_strided_slice %180 {offsets = [3, 0], sizes = [1, 32], strides = [1, 1]} : vector<8x32xf32> to vector<1x32xf32>
    %247 = vector.broadcast %246 : vector<1x32xf32> to vector<16x32xf32>
    %248 = arith.addf %245, %247 : vector<16x32xf32>
    %249 = arith.addf %174, %248 : vector<16x32xf32>
    %c0_72 = arith.constant 0 : index
    %c0_73 = arith.constant 0 : index
    %250 = vector.load %arg11[%c0_72, %c0_73] : memref<16x32xf32, #tpu.memory_space<vmem>>, vector<16x32xf32>
    tpu.vector_store %arg11[%c0_72, %c0_73], %249 {strides = array<i32>} : memref<16x32xf32, #tpu.memory_space<vmem>>, vector<16x32xf32>,
    return
  }
}

</mosaic_0001>

<llo_original>
// kernel: neg.2
$region0: #{neg.2}
  #allocation0 [shape = 's32[1]{0}', space=sflag, size = 0x4, scoped, tag = 'scoped memory for neg.2']
  %s0 = inlined_call_operand.vmem [shape: f32[16], index: 0, kind: input, shape index: {}]
  %s1 = inlined_call_operand.vmem [shape: f32[16], index: 1, kind: output, shape index: {}]
  %v2 = vld [vmem:[%s0] sm:$0x1]
  %3 = xla_tuple %v2
  %4 = xla_tuple %3
  %v5 = vxor.u32 %v2, 2147483648
  %6 = xla_tuple %v5
  %7 = vst [vmem:[%s1] sm:$0x1] %v5

// kernel: torchmd_s_forward.1
$region0: #{torchmd_s_forward.1}
  #allocation0 [shape = 'u32[]', space=smem, size = 0x4, offset = 0x4, fixed_abs, tag = 'smem constant byte address 0x4 - core index']
  #allocation1 [shape = 'u32[144,128]{1,0:T(1,128)}', space=vmem, size = 0x12000, scoped, tag = 'internal scratch']
  %s0 = inlined_call_operand.vmem [shape: f32[16,32], index: 0, kind: input, shape index: {}]
  %s1 = inlined_call_operand.vmem [shape: bf16[256,16], index: 1, kind: input, shape index: {}]
  %s2 = inlined_call_operand.vmem [shape: f32[256,1], index: 2, kind: input, shape index: {}]
  %s3 = inlined_call_operand.vmem [shape: bf16[32,32], index: 3, kind: input, shape index: {}]
  %s4 = inlined_call_operand.vmem [shape: bf16[16,32], index: 4, kind: input, shape index: {}]
  %s5 = inlined_call_operand.vmem [shape: f32[1,32], index: 5, kind: input, shape index: {}]
  %s6 = inlined_call_operand.vmem [shape: bf16[3,32,96], index: 6, kind: input, shape index: {}]
  %s7 = inlined_call_operand.vmem [shape: bf16[3,32,32], index: 7, kind: input, shape index: {}]
  %s8 = inlined_call_operand.vmem [shape: bf16[32,256], index: 8, kind: input, shape index: {}]
  %s9 = inlined_call_operand.vmem [shape: f32[1,256], index: 9, kind: input, shape index: {}]
  %s10 = inlined_call_operand.vmem [shape: f32[3,8,32], index: 10, kind: input, shape index: {}]
  %s11 = inlined_call_operand.vmem [shape: f32[16,32], index: 11, kind: output, shape index: {}]
  %s12 = sld [smem:[#allocation0]]
  $region54: #{torchmd_s_forward.1} parent=0
    _
  %s14 = ssub.s32 1, %s12
  %s15 = scalar_select 0, %s14, %s12
  // Predicated region
  $region2: #{torchmd_s_forward.1} parent=0 // pred_check
    _
  $region3: #{torchmd_s_forward.1} parent=0 // pred_check_branch
    %17 = sbr.rel (0) target = $region5
  $region4: #{torchmd_s_forward.1} parent=0 // pred_region
    _
  $region5: #{torchmd_s_forward.1} parent=0 // pred_fallthru
    _
  // Predicated region
  $region6: #{torchmd_s_forward.1} parent=0 // pred_check
    _
  $region7: #{torchmd_s_forward.1} parent=0 // pred_check_branch
    %19 = sbr.rel (0) target = $region9
  $region8: #{torchmd_s_forward.1} parent=0 // pred_region
    _
  $region9: #{torchmd_s_forward.1} parent=0 // pred_fallthru
    _
  // Predicated region
  $region10: #{torchmd_s_forward.1} parent=0 // pred_check
    _
  $region11: #{torchmd_s_forward.1} parent=0 // pred_check_branch
    %21 = sbr.rel (0) target = $region13
  $region12: #{torchmd_s_forward.1} parent=0 // pred_region
    _
  $region13: #{torchmd_s_forward.1} parent=0 // pred_fallthru
    _
  // Predicated region
  $region14: #{torchmd_s_forward.1} parent=0 // pred_check
    _
  $region15: #{torchmd_s_forward.1} parent=0 // pred_check_branch
    %23 = sbr.rel (0) target = $region17
  $region16: #{torchmd_s_forward.1} parent=0 // pred_region
    _
  $region17: #{torchmd_s_forward.1} parent=0 // pred_fallthru
    _
  // Predicated region
  $region18: #{torchmd_s_forward.1} parent=0 // pred_check
    _
  $region19: #{torchmd_s_forward.1} parent=0 // pred_check_branch
    %25 = sbr.rel (0) target = $region21
  $region20: #{torchmd_s_forward.1} parent=0 // pred_region
    _
  $region21: #{torchmd_s_forward.1} parent=0 // pred_fallthru
    _
  // Predicated region
  $region22: #{torchmd_s_forward.1} parent=0 // pred_check
    _
  $region23: #{torchmd_s_forward.1} parent=0 // pred_check_branch
    %27 = sbr.rel (0) target = $region25
  $region24: #{torchmd_s_forward.1} parent=0 // pred_region
    _
  $region25: #{torchmd_s_forward.1} parent=0 // pred_fallthru
    _
  // Predicated region
  $region26: #{torchmd_s_forward.1} parent=0 // pred_check
    _
  $region27: #{torchmd_s_forward.1} parent=0 // pred_check_branch
    %29 = sbr.rel (0) target = $region29
  $region28: #{torchmd_s_forward.1} parent=0 // pred_region
    _
  $region29: #{torchmd_s_forward.1} parent=0 // pred_fallthru
    _
  // Predicated region
  $region30: #{torchmd_s_forward.1} parent=0 // pred_check
    _
  $region31: #{torchmd_s_forward.1} parent=0 // pred_check_branch
    %31 = sbr.rel (0) target = $region33
  $region32: #{torchmd_s_forward.1} parent=0 // pred_region
    _
  $region33: #{torchmd_s_forward.1} parent=0 // pred_fallthru
    _
  // Predicated region
  $region34: #{torchmd_s_forward.1} parent=0 // pred_check
    _
  $region35: #{torchmd_s_forward.1} parent=0 // pred_check_branch
    %33 = sbr.rel (0) target = $region37
  $region36: #{torchmd_s_forward.1} parent=0 // pred_region
    _
  $region37: #{torchmd_s_forward.1} parent=0 // pred_fallthru
    _
  // Predicated region
  $region38: #{torchmd_s_forward.1} parent=0 // pred_check
    _
  $region39: #{torchmd_s_forward.1} parent=0 // pred_check_branch
    %35 = sbr.rel (0) target = $region41
  $region40: #{torchmd_s_forward.1} parent=0 // pred_region
    _
  $region41: #{torchmd_s_forward.1} parent=0 // pred_fallthru
    _
  // Predicated region
  $region42: #{torchmd_s_forward.1} parent=0 // pred_check
    _
  $region43: #{torchmd_s_forward.1} parent=0 // pred_check_branch
    %37 = sbr.rel (0) target = $region45
  $region44: #{torchmd_s_forward.1} parent=0 // pred_region
    _
  $region45: #{torchmd_s_forward.1} parent=0 // pred_fallthru
    _
  %v39 = vld [vmem:[%s2] sm:$0xff]
  %v40 = vld [vmem:[%s2 + $0x8] sm:$0xff]
  %v41 = vld [vmem:[%s2 + $0x10] sm:$0xff]
  %v42 = vld [vmem:[%s2 + $0x18] sm:$0xff]
  %v43 = vld [vmem:[%s2 + $0x20] sm:$0xff]
  %v44 = vld [vmem:[%s2 + $0x28] sm:$0xff]
  %v45 = vld [vmem:[%s2 + $0x30] sm:$0xff]
  %v46 = vld [vmem:[%s2 + $0x38] sm:$0xff]
  %v47 = vld [vmem:[%s2 + $0x40] sm:$0xff]
  %v48 = vld [vmem:[%s2 + $0x48] sm:$0xff]
  %v49 = vld [vmem:[%s2 + $0x50] sm:$0xff]
  %v50 = vld [vmem:[%s2 + $0x58] sm:$0xff]
  %v51 = vld [vmem:[%s2 + $0x60] sm:$0xff]
  %v52 = vld [vmem:[%s2 + $0x68] sm:$0xff]
  %v53 = vld [vmem:[%s2 + $0x70] sm:$0xff]
  %v54 = vld [vmem:[%s2 + $0x78] sm:$0xff]
  %v55 = vld [vmem:[%s2 + $0x80] sm:$0xff]
  %v56 = vld [vmem:[%s2 + $0x88] sm:$0xff]
  %v57 = vld [vmem:[%s2 + $0x90] sm:$0xff]
  %v58 = vld [vmem:[%s2 + $0x98] sm:$0xff]
  %v59 = vld [vmem:[%s2 + $0xa0] sm:$0xff]
  %v60 = vld [vmem:[%s2 + $0xa8] sm:$0xff]
  %v61 = vld [vmem:[%s2 + $0xb0] sm:$0xff]
  %v62 = vld [vmem:[%s2 + $0xb8] sm:$0xff]
  %v63 = vld [vmem:[%s2 + $0xc0] sm:$0xff]
  %v64 = vld [vmem:[%s2 + $0xc8] sm:$0xff]
  %v65 = vld [vmem:[%s2 + $0xd0] sm:$0xff]
  %v66 = vld [vmem:[%s2 + $0xd8] sm:$0xff]
  %v67 = vld [vmem:[%s2 + $0xe0] sm:$0xff]
  %v68 = vld [vmem:[%s2 + $0xe8] sm:$0xff]
  %v69 = vld [vmem:[%s2 + $0xf0] sm:$0xff]
  %v70 = vld [vmem:[%s2 + $0xf8] sm:$0xff]
  %v71 = vld [vmem:[%s3] sm:$0xf]
  %v72 = vld [vmem:[%s3 + $0x4] sm:$0xf]
  %v73 = vld [vmem:[%s3 + $0x8] sm:$0xf]
  %v74 = vld [vmem:[%s3 + $0xc] sm:$0xf]
  %v75 = vld [vmem:[%s1] sm:$0xf]
  %v76 = vld [vmem:[%s1 + $0x4] sm:$0xf]
  %v77 = vld [vmem:[%s1 + $0x8] sm:$0xf]
  %v78 = vld [vmem:[%s1 + $0xc] sm:$0xf]
  %v79 = vld [vmem:[%s1 + $0x10] sm:$0xf]
  %v80 = vld [vmem:[%s1 + $0x14] sm:$0xf]
  %v81 = vld [vmem:[%s1 + $0x18] sm:$0xf]
  %v82 = vld [vmem:[%s1 + $0x1c] sm:$0xf]
  %v83 = vld [vmem:[%s1 + $0x20] sm:$0xf]
  %v84 = vld [vmem:[%s1 + $0x24] sm:$0xf]
  %v85 = vld [vmem:[%s1 + $0x28] sm:$0xf]
  %v86 = vld [vmem:[%s1 + $0x2c] sm:$0xf]
  %v87 = vld [vmem:[%s1 + $0x30] sm:$0xf]
  %v88 = vld [vmem:[%s1 + $0x34] sm:$0xf]
  %v89 = vld [vmem:[%s1 + $0x38] sm:$0xf]
  %v90 = vld [vmem:[%s1 + $0x3c] sm:$0xf]
  %v91 = vld [vmem:[%s1 + $0x40] sm:$0xf]
  %v92 = vld [vmem:[%s1 + $0x44] sm:$0xf]
  %v93 = vld [vmem:[%s1 + $0x48] sm:$0xf]
  %v94 = vld [vmem:[%s1 + $0x4c] sm:$0xf]
  %v95 = vld [vmem:[%s1 + $0x50] sm:$0xf]
  %v96 = vld [vmem:[%s1 + $0x54] sm:$0xf]
  %v97 = vld [vmem:[%s1 + $0x58] sm:$0xf]
  %v98 = vld [vmem:[%s1 + $0x5c] sm:$0xf]
  %v99 = vld [vmem:[%s1 + $0x60] sm:$0xf]
  %v100 = vld [vmem:[%s1 + $0x64] sm:$0xf]
  %v101 = vld [vmem:[%s1 + $0x68] sm:$0xf]
  %v102 = vld [vmem:[%s1 + $0x6c] sm:$0xf]
  %v103 = vld [vmem:[%s1 + $0x70] sm:$0xf]
  %v104 = vld [vmem:[%s1 + $0x74] sm:$0xf]
  %v105 = vld [vmem:[%s1 + $0x78] sm:$0xf]
  %v106 = vld [vmem:[%s1 + $0x7c] sm:$0xf]
  %v107 = vld [vmem:[%s4] sm:$0xf]
  %v108 = vld [vmem:[%s4 + $0x4] sm:$0xf]
  %v109 = vld [vmem:[%s5] sm:$0x1]
  %v111 = vlaneseq
  %v112 = vshrl.u32 %v111, 7
  %v113 = vsub.s32 0, %v112
  %v114 = vrot.slane %v109, %v113
  %v148 = vunpack.c.l.b16 %v75
  %v149 = vunpack.c.l.b16 %v76
  %v150 = vunpack.c.l.b16 %v77
  %v151 = vunpack.c.l.b16 %v78
  %v152 = vunpack.c.l.b16 %v79
  %v153 = vunpack.c.l.b16 %v80
  %v154 = vunpack.c.l.b16 %v81
  %v155 = vunpack.c.l.b16 %v82
  %v156 = vunpack.c.l.b16 %v83
  %v157 = vunpack.c.l.b16 %v84
  %v158 = vunpack.c.l.b16 %v85
  %v159 = vunpack.c.l.b16 %v86
  %v160 = vunpack.c.l.b16 %v87
  %v161 = vunpack.c.l.b16 %v88
  %v162 = vunpack.c.l.b16 %v89
  %v163 = vunpack.c.l.b16 %v90
  %v164 = vunpack.c.l.b16 %v91
  %v165 = vunpack.c.l.b16 %v92
  %v166 = vunpack.c.l.b16 %v93
  %v167 = vunpack.c.l.b16 %v94
  %v168 = vunpack.c.l.b16 %v95
  %v169 = vunpack.c.l.b16 %v96
  %v170 = vunpack.c.l.b16 %v97
  %v171 = vunpack.c.l.b16 %v98
  %v172 = vunpack.c.l.b16 %v99
  %v173 = vunpack.c.l.b16 %v100
  %v174 = vunpack.c.l.b16 %v101
  %v175 = vunpack.c.l.b16 %v102
  %v176 = vunpack.c.l.b16 %v103
  %v177 = vunpack.c.l.b16 %v104
  %v178 = vunpack.c.l.b16 %v105
  %v179 = vunpack.c.l.b16 %v106
  %v180 = vpack.c.b16 %v149, %v148
  %v181 = vpack.c.b16 %v151, %v150
  %v182 = vpack.c.b16 %v153, %v152
  %v183 = vpack.c.b16 %v155, %v154
  %v184 = vpack.c.b16 %v157, %v156
  %v185 = vpack.c.b16 %v159, %v158
  %v186 = vpack.c.b16 %v161, %v160
  %v187 = vpack.c.b16 %v163, %v162
  %v188 = vpack.c.b16 %v165, %v164
  %v189 = vpack.c.b16 %v167, %v166
  %v190 = vpack.c.b16 %v169, %v168
  %v191 = vpack.c.b16 %v171, %v170
  %v192 = vpack.c.b16 %v173, %v172
  %v193 = vpack.c.b16 %v175, %v174
  %v194 = vpack.c.b16 %v177, %v176
  %v195 = vpack.c.b16 %v179, %v178
  %v198 = vunpack.c.l.b16 %v107
  %v199 = vunpack.c.l.b16 %v108
  %v200 = vpack.c.b16 %v199, %v198
  %vm202 = vcmask 130048
  %v204 = vsel %vm202, %v180, 0
  %v207 = vsel %vm202, %v181, 0
  %v210 = vsel %vm202, %v182, 0
  %v213 = vsel %vm202, %v183, 0
  %v216 = vsel %vm202, %v184, 0
  %v219 = vsel %vm202, %v185, 0
  %v222 = vsel %vm202, %v186, 0
  %v225 = vsel %vm202, %v187, 0
  %v228 = vsel %vm202, %v188, 0
  %v231 = vsel %vm202, %v189, 0
  %v234 = vsel %vm202, %v190, 0
  %v237 = vsel %vm202, %v191, 0
  %v240 = vsel %vm202, %v192, 0
  %v243 = vsel %vm202, %v193, 0
  %v246 = vsel %vm202, %v194, 0
  %v249 = vsel %vm202, %v195, 0
  %251 = vmatprep.subr.bf16.mxu0 0
  %252 = vmatpush1.bf16.msra.mxu0 0
  %253 = vmatprep.subr.bf16.mxu0 0
  %254 = vmatpush1.bf16.msra.mxu0 0
  %255 = vmatprep.subr.bf16.mxu0 0
  %256 = vmatpush1.bf16.msra.mxu0 0
  %257 = vmatprep.subr.bf16.mxu0 0
  %258 = vmatpush1.bf16.msra.mxu0 0
  %259 = vmatprep.subr.bf16.mxu0 0
  %260 = vmatpush1.bf16.msra.mxu0 0
  %261 = vmatprep.subr.bf16.mxu0 0
  %262 = vmatpush1.bf16.msra.mxu0 0
  %263 = vmatprep.subr.bf16.mxu0 0
  %264 = vmatpush1.bf16.msra.mxu0 0
  %265 = vmatprep.subr.bf16.mxu0 0
  %266 = vmatpush1.bf16.msra.mxu0 %v200
  %267 = vmatprep.subr.bf16.mxu0 0
  %268 = vmatpush2.bf16.msra.mxu0 0
  %269 = vmatprep.subr.bf16.mxu0 0
  %270 = vmatpush2.bf16.msra.mxu0 0
  %271 = vmatprep.subr.bf16.mxu0 0
  %272 = vmatpush2.bf16.msra.mxu0 0
  %273 = vmatprep.subr.bf16.mxu0 0
  %274 = vmatpush2.bf16.msra.mxu0 0
  %275 = vmatprep.subr.bf16.mxu0 0
  %276 = vmatpush2.bf16.msra.mxu0 0
  %277 = vmatprep.subr.bf16.mxu0 0
  %278 = vmatpush2.bf16.msra.mxu0 0
  %279 = vmatprep.subr.bf16.mxu0 0
  %280 = vmatpush2.bf16.msra.mxu0 0
  %281 = vmatprep.subr.bf16.mxu0 0
  %282 = vmatpush2.bf16.msra.mxu0 0
  %283 = vmatprep.mubr.bf16.mxu0 0
  %284 = vmatmul.mubr.bf16.gmra.mxu0 %v204
  %v285 = vpop.f32.mrf.mxu0
  %v286 = vadd.f32 %v114, %v285
  %v287 = vpop.f32.mrf.mxu0
  %v288 = vpop.f32.mrf.mxu0
  %v289 = vadd.f32 %v114, %v288
  %v290 = vpop.f32.mrf.mxu0
  %291 = vmatprep.mubr.bf16.mxu0 0
  %292 = vmatmul.mubr.bf16.gmra.mxu0 %v207
  %v293 = vpop.f32.mrf.mxu0
  %v294 = vadd.f32 %v114, %v293
  %v295 = vpop.f32.mrf.mxu0
  %v296 = vpop.f32.mrf.mxu0
  %v297 = vadd.f32 %v114, %v296
  %v298 = vpop.f32.mrf.mxu0
  %299 = vmatprep.mubr.bf16.mxu0 0
  %300 = vmatmul.mubr.bf16.gmra.mxu0 %v210
  %v301 = vpop.f32.mrf.mxu0
  %v302 = vadd.f32 %v114, %v301
  %v303 = vpop.f32.mrf.mxu0
  %v304 = vpop.f32.mrf.mxu0
  %v305 = vadd.f32 %v114, %v304
  %v306 = vpop.f32.mrf.mxu0
  %307 = vmatprep.mubr.bf16.mxu0 0
  %308 = vmatmul.mubr.bf16.gmra.mxu0 %v213
  %v309 = vpop.f32.mrf.mxu0
  %v310 = vadd.f32 %v114, %v309
  %v311 = vpop.f32.mrf.mxu0
  %v312 = vpop.f32.mrf.mxu0
  %v313 = vadd.f32 %v114, %v312
  %v314 = vpop.f32.mrf.mxu0
  %315 = vmatprep.mubr.bf16.mxu0 0
  %316 = vmatmul.mubr.bf16.gmra.mxu0 %v216
  %v317 = vpop.f32.mrf.mxu0
  %v318 = vadd.f32 %v114, %v317
  %v319 = vpop.f32.mrf.mxu0
  %v320 = vpop.f32.mrf.mxu0
  %v321 = vadd.f32 %v114, %v320
  %v322 = vpop.f32.mrf.mxu0
  %323 = vmatprep.mubr.bf16.mxu0 0
  %324 = vmatmul.mubr.bf16.gmra.mxu0 %v219
  %v325 = vpop.f32.mrf.mxu0
  %v326 = vadd.f32 %v114, %v325
  %v327 = vpop.f32.mrf.mxu0
  %v328 = vpop.f32.mrf.mxu0
  %v329 = vadd.f32 %v114, %v328
  %v330 = vpop.f32.mrf.mxu0
  %331 = vmatprep.mubr.bf16.mxu0 0
  %332 = vmatmul.mubr.bf16.gmra.mxu0 %v222
  %v333 = vpop.f32.mrf.mxu0
  %v334 = vadd.f32 %v114, %v333
  %v335 = vpop.f32.mrf.mxu0
  %v336 = vpop.f32.mrf.mxu0
  %v337 = vadd.f32 %v114, %v336
  %v338 = vpop.f32.mrf.mxu0
  %339 = vmatprep.mubr.bf16.mxu0 0
  %340 = vmatmul.mubr.bf16.gmra.mxu0 %v225
  %v341 = vpop.f32.mrf.mxu0
  %v342 = vadd.f32 %v114, %v341
  %v343 = vpop.f32.mrf.mxu0
  %v344 = vpop.f32.mrf.mxu0
  %v345 = vadd.f32 %v114, %v344
  %v346 = vpop.f32.mrf.mxu0
  %347 = vmatprep.mubr.bf16.mxu0 0
  %348 = vmatmul.mubr.bf16.gmra.mxu0 %v228
  %v349 = vpop.f32.mrf.mxu0
  %v350 = vadd.f32 %v114, %v349
  %v351 = vpop.f32.mrf.mxu0
  %v352 = vpop.f32.mrf.mxu0
  %v353 = vadd.f32 %v114, %v352
  %v354 = vpop.f32.mrf.mxu0
  %355 = vmatprep.mubr.bf16.mxu0 0
  %356 = vmatmul.mubr.bf16.gmra.mxu0 %v231
  %v357 = vpop.f32.mrf.mxu0
  %v358 = vadd.f32 %v114, %v357
  %v359 = vpop.f32.mrf.mxu0
  %v360 = vpop.f32.mrf.mxu0
  %v361 = vadd.f32 %v114, %v360
  %v362 = vpop.f32.mrf.mxu0
  %363 = vmatprep.mubr.bf16.mxu0 0
  %364 = vmatmul.mubr.bf16.gmra.mxu0 %v234
  %v365 = vpop.f32.mrf.mxu0
  %v366 = vadd.f32 %v114, %v365
  %v367 = vpop.f32.mrf.mxu0
  %v368 = vpop.f32.mrf.mxu0
  %v369 = vadd.f32 %v114, %v368
  %v370 = vpop.f32.mrf.mxu0
  %371 = vmatprep.mubr.bf16.mxu0 0
  %372 = vmatmul.mubr.bf16.gmra.mxu0 %v237
  %v373 = vpop.f32.mrf.mxu0
  %v374 = vadd.f32 %v114, %v373
  %v375 = vpop.f32.mrf.mxu0
  %v376 = vpop.f32.mrf.mxu0
  %v377 = vadd.f32 %v114, %v376
  %v378 = vpop.f32.mrf.mxu0
  %379 = vmatprep.mubr.bf16.mxu0 0
  %380 = vmatmul.mubr.bf16.gmra.mxu0 %v240
  %v381 = vpop.f32.mrf.mxu0
  %v382 = vadd.f32 %v114, %v381
  %v383 = vpop.f32.mrf.mxu0
  %v384 = vpop.f32.mrf.mxu0
  %v385 = vadd.f32 %v114, %v384
  %v386 = vpop.f32.mrf.mxu0
  %387 = vmatprep.mubr.bf16.mxu0 0
  %388 = vmatmul.mubr.bf16.gmra.mxu0 %v243
  %v389 = vpop.f32.mrf.mxu0
  %v390 = vadd.f32 %v114, %v389
  %v391 = vpop.f32.mrf.mxu0
  %v392 = vpop.f32.mrf.mxu0
  %v393 = vadd.f32 %v114, %v392
  %v394 = vpop.f32.mrf.mxu0
  %395 = vmatprep.mubr.bf16.mxu0 0
  %396 = vmatmul.mubr.bf16.gmra.mxu0 %v246
  %v397 = vpop.f32.mrf.mxu0
  %v398 = vadd.f32 %v114, %v397
  %v399 = vpop.f32.mrf.mxu0
  %v400 = vpop.f32.mrf.mxu0
  %v401 = vadd.f32 %v114, %v400
  %v402 = vpop.f32.mrf.mxu0
  %403 = vmatprep.mubr.bf16.mxu0 0
  %404 = vmatmul.mubr.bf16.gmra.mxu0 %v249
  %v405 = vpop.f32.mrf.mxu0
  %v406 = vadd.f32 %v114, %v405
  %v407 = vpop.f32.mrf.mxu0
  %v408 = vpop.f32.mrf.mxu0
  %v409 = vadd.f32 %v114, %v408
  %v410 = vpop.f32.mrf.mxu0
  %411 = vdwg.mxu0
  %v412 = vpack.c.bf16 %v289, %v286
  %v413 = vpack.c.bf16 %v297, %v294
  %v414 = vpack.c.bf16 %v305, %v302
  %v415 = vpack.c.bf16 %v313, %v310
  %v416 = vpack.c.bf16 %v321, %v318
  %v417 = vpack.c.bf16 %v329, %v326
  %v418 = vpack.c.bf16 %v337, %v334
  %v419 = vpack.c.bf16 %v345, %v342
  %v420 = vpack.c.bf16 %v353, %v350
  %v421 = vpack.c.bf16 %v361, %v358
  %v422 = vpack.c.bf16 %v369, %v366
  %v423 = vpack.c.bf16 %v377, %v374
  %v424 = vpack.c.bf16 %v385, %v382
  %v425 = vpack.c.bf16 %v393, %v390
  %v426 = vpack.c.bf16 %v401, %v398
  %v427 = vpack.c.bf16 %v409, %v406
  %v428 = vld [vmem:[%s8] sm:$0xff]
  %v429 = vld [vmem:[%s8 + $0x8] sm:$0xff]
  %v430 = vld [vmem:[%s8 + $0x10] sm:$0xff]
  %v431 = vld [vmem:[%s8 + $0x18] sm:$0xff]
  %v432 = vld [vmem:[%s9] sm:$0x3]
  %v434 = vlaneseq
  %v435 = vshrl.u32 %v434, 7
  %v436 = vsub.s32 0, %v435
  %v437 = vrot.slane %v432, %v436
  %v438 = vlaneseq
  %v439 = vshrl.u32 %v438, 7
  %v440 = vsub.s32 1, %v439
  %v441 = vrot.slane %v432, %v440
  %v448 = vunpack.c.l.b16 %v428
  %v449 = vunpack.c.h.b16 %v428
  %v450 = vunpack.c.l.b16 %v429
  %v451 = vunpack.c.h.b16 %v429
  %v452 = vunpack.c.l.b16 %v430
  %v453 = vunpack.c.h.b16 %v430
  %v454 = vunpack.c.l.b16 %v431
  %v455 = vunpack.c.h.b16 %v431
  %v456 = vpack.c.b16 %v450, %v448
  %v457 = vpack.c.b16 %v451, %v449
  %v458 = vpack.c.b16 %v454, %v452
  %v459 = vpack.c.b16 %v455, %v453
  %vm464 = vcmask 261120
  %v466 = vsel %vm464, %v412, 0
  %v469 = vsel %vm464, %v413, 0
  %v472 = vsel %vm464, %v414, 0
  %v475 = vsel %vm464, %v415, 0
  %v478 = vsel %vm464, %v416, 0
  %v481 = vsel %vm464, %v417, 0
  %v484 = vsel %vm464, %v418, 0
  %v487 = vsel %vm464, %v419, 0
  %v490 = vsel %vm464, %v420, 0
  %v493 = vsel %vm464, %v421, 0
  %v496 = vsel %vm464, %v422, 0
  %v499 = vsel %vm464, %v423, 0
  %v502 = vsel %vm464, %v424, 0
  %v505 = vsel %vm464, %v425, 0
  %v508 = vsel %vm464, %v426, 0
  %v511 = vsel %vm464, %v427, 0
  %513 = vmatprep.subr.bf16.mxu0 0
  %514 = vmatpush1.bf16.msra.mxu0 0
  %515 = vmatprep.subr.bf16.mxu0 0
  %516 = vmatpush1.bf16.msra.mxu0 0
  %517 = vmatprep.subr.bf16.mxu0 0
  %518 = vmatpush1.bf16.msra.mxu0 0
  %519 = vmatprep.subr.bf16.mxu0 0
  %520 = vmatpush1.bf16.msra.mxu0 0
  %521 = vmatprep.subr.bf16.mxu0 0
  %522 = vmatpush1.bf16.msra.mxu0 0
  %523 = vmatprep.subr.bf16.mxu0 0
  %524 = vmatpush1.bf16.msra.mxu0 0
  %525 = vmatprep.subr.bf16.mxu0 %v459
  %526 = vmatpush1.bf16.msra.mxu0 %v458
  %527 = vmatprep.subr.bf16.mxu0 %v457
  %528 = vmatpush1.bf16.msra.mxu0 %v456
  %529 = vmatprep.subr.bf16.mxu0 0
  %530 = vmatpush2.bf16.msra.mxu0 0
  %531 = vmatprep.subr.bf16.mxu0 0
  %532 = vmatpush2.bf16.msra.mxu0 0
  %533 = vmatprep.subr.bf16.mxu0 0
  %534 = vmatpush2.bf16.msra.mxu0 0
  %535 = vmatprep.subr.bf16.mxu0 0
  %536 = vmatpush2.bf16.msra.mxu0 0
  %537 = vmatprep.subr.bf16.mxu0 0
  %538 = vmatpush2.bf16.msra.mxu0 0
  %539 = vmatprep.subr.bf16.mxu0 0
  %540 = vmatpush2.bf16.msra.mxu0 0
  %541 = vmatprep.subr.bf16.mxu0 0
  %542 = vmatpush2.bf16.msra.mxu0 0
  %543 = vmatprep.subr.bf16.mxu0 0
  %544 = vmatpush2.bf16.msra.mxu0 0
  %545 = vmatprep.mubr.bf16.mxu0 0
  %546 = vmatmul.mubr.bf16.gmra.mxu0 %v466
  %v547 = vpop.f32.mrf.mxu0
  %v548 = vadd.f32 %v437, %v547
  %v549 = vpop.f32.mrf.mxu0
  %v550 = vadd.f32 %v441, %v549
  %v551 = vpop.f32.mrf.mxu0
  %v552 = vadd.f32 %v437, %v551
  %v553 = vpop.f32.mrf.mxu0
  %v554 = vadd.f32 %v441, %v553
  %555 = vmatprep.mubr.bf16.mxu0 0
  %556 = vmatmul.mubr.bf16.gmra.mxu0 %v469
  %v557 = vpop.f32.mrf.mxu0
  %v558 = vadd.f32 %v437, %v557
  %v559 = vpop.f32.mrf.mxu0
  %v560 = vadd.f32 %v441, %v559
  %v561 = vpop.f32.mrf.mxu0
  %v562 = vadd.f32 %v437, %v561
  %v563 = vpop.f32.mrf.mxu0
  %v564 = vadd.f32 %v441, %v563
  %565 = vmatprep.mubr.bf16.mxu0 0
  %566 = vmatmul.mubr.bf16.gmra.mxu0 %v472
  %v567 = vpop.f32.mrf.mxu0
  %v568 = vadd.f32 %v437, %v567
  %v569 = vpop.f32.mrf.mxu0
  %v570 = vadd.f32 %v441, %v569
  %v571 = vpop.f32.mrf.mxu0
  %v572 = vadd.f32 %v437, %v571
  %v573 = vpop.f32.mrf.mxu0
  %v574 = vadd.f32 %v441, %v573
  %575 = vmatprep.mubr.bf16.mxu0 0
  %576 = vmatmul.mubr.bf16.gmra.mxu0 %v475
  %v577 = vpop.f32.mrf.mxu0
  %v578 = vadd.f32 %v437, %v577
  %v579 = vpop.f32.mrf.mxu0
  %v580 = vadd.f32 %v441, %v579
  %v581 = vpop.f32.mrf.mxu0
  %v582 = vadd.f32 %v437, %v581
  %v583 = vpop.f32.mrf.mxu0
  %v584 = vadd.f32 %v441, %v583
  %585 = vmatprep.mubr.bf16.mxu0 0
  %586 = vmatmul.mubr.bf16.gmra.mxu0 %v478
  %v587 = vpop.f32.mrf.mxu0
  %v588 = vadd.f32 %v437, %v587
  %v589 = vpop.f32.mrf.mxu0
  %v590 = vadd.f32 %v441, %v589
  %v591 = vpop.f32.mrf.mxu0
  %v592 = vadd.f32 %v437, %v591
  %v593 = vpop.f32.mrf.mxu0
  %v594 = vadd.f32 %v441, %v593
  %595 = vmatprep.mubr.bf16.mxu0 0
  %596 = vmatmul.mubr.bf16.gmra.mxu0 %v481
  %v597 = vpop.f32.mrf.mxu0
  %v598 = vadd.f32 %v437, %v597
  %v599 = vpop.f32.mrf.mxu0
  %v600 = vadd.f32 %v441, %v599
  %v601 = vpop.f32.mrf.mxu0
  %v602 = vadd.f32 %v437, %v601
  %v603 = vpop.f32.mrf.mxu0
  %v604 = vadd.f32 %v441, %v603
  %605 = vmatprep.mubr.bf16.mxu0 0
  %606 = vmatmul.mubr.bf16.gmra.mxu0 %v484
  %v607 = vpop.f32.mrf.mxu0
  %v608 = vadd.f32 %v437, %v607
  %v609 = vpop.f32.mrf.mxu0
  %v610 = vadd.f32 %v441, %v609
  %v611 = vpop.f32.mrf.mxu0
  %v612 = vadd.f32 %v437, %v611
  %v613 = vpop.f32.mrf.mxu0
  %v614 = vadd.f32 %v441, %v613
  %615 = vmatprep.mubr.bf16.mxu0 0
  %616 = vmatmul.mubr.bf16.gmra.mxu0 %v487
  %v617 = vpop.f32.mrf.mxu0
  %v618 = vadd.f32 %v437, %v617
  %v619 = vpop.f32.mrf.mxu0
  %v620 = vadd.f32 %v441, %v619
  %v621 = vpop.f32.mrf.mxu0
  %v622 = vadd.f32 %v437, %v621
  %v623 = vpop.f32.mrf.mxu0
  %v624 = vadd.f32 %v441, %v623
  %625 = vmatprep.mubr.bf16.mxu0 0
  %626 = vmatmul.mubr.bf16.gmra.mxu0 %v490
  %v627 = vpop.f32.mrf.mxu0
  %v628 = vadd.f32 %v437, %v627
  %v629 = vpop.f32.mrf.mxu0
  %v630 = vadd.f32 %v441, %v629
  %v631 = vpop.f32.mrf.mxu0
  %v632 = vadd.f32 %v437, %v631
  %v633 = vpop.f32.mrf.mxu0
  %v634 = vadd.f32 %v441, %v633
  %635 = vmatprep.mubr.bf16.mxu0 0
  %636 = vmatmul.mubr.bf16.gmra.mxu0 %v493
  %v637 = vpop.f32.mrf.mxu0
  %v638 = vadd.f32 %v437, %v637
  %v639 = vpop.f32.mrf.mxu0
  %v640 = vadd.f32 %v441, %v639
  %v641 = vpop.f32.mrf.mxu0
  %v642 = vadd.f32 %v437, %v641
  %v643 = vpop.f32.mrf.mxu0
  %v644 = vadd.f32 %v441, %v643
  %645 = vmatprep.mubr.bf16.mxu0 0
  %646 = vmatmul.mubr.bf16.gmra.mxu0 %v496
  %v647 = vpop.f32.mrf.mxu0
  %v648 = vadd.f32 %v437, %v647
  %v649 = vpop.f32.mrf.mxu0
  %v650 = vadd.f32 %v441, %v649
  %v651 = vpop.f32.mrf.mxu0
  %v652 = vadd.f32 %v437, %v651
  %v653 = vpop.f32.mrf.mxu0
  %v654 = vadd.f32 %v441, %v653
  %655 = vmatprep.mubr.bf16.mxu0 0
  %656 = vmatmul.mubr.bf16.gmra.mxu0 %v499
  %v657 = vpop.f32.mrf.mxu0
  %v658 = vadd.f32 %v437, %v657
  %v659 = vpop.f32.mrf.mxu0
  %v660 = vadd.f32 %v441, %v659
  %v661 = vpop.f32.mrf.mxu0
  %v662 = vadd.f32 %v437, %v661
  %v663 = vpop.f32.mrf.mxu0
  %v664 = vadd.f32 %v441, %v663
  %665 = vmatprep.mubr.bf16.mxu0 0
  %666 = vmatmul.mubr.bf16.gmra.mxu0 %v502
  %v667 = vpop.f32.mrf.mxu0
  %v668 = vadd.f32 %v437, %v667
  %v669 = vpop.f32.mrf.mxu0
  %v670 = vadd.f32 %v441, %v669
  %v671 = vpop.f32.mrf.mxu0
  %v672 = vadd.f32 %v437, %v671
  %v673 = vpop.f32.mrf.mxu0
  %v674 = vadd.f32 %v441, %v673
  %675 = vmatprep.mubr.bf16.mxu0 0
  %676 = vmatmul.mubr.bf16.gmra.mxu0 %v505
  %v677 = vpop.f32.mrf.mxu0
  %v678 = vadd.f32 %v437, %v677
  %v679 = vpop.f32.mrf.mxu0
  %v680 = vadd.f32 %v441, %v679
  %v681 = vpop.f32.mrf.mxu0
  %v682 = vadd.f32 %v437, %v681
  %v683 = vpop.f32.mrf.mxu0
  %v684 = vadd.f32 %v441, %v683
  %685 = vmatprep.mubr.bf16.mxu0 0
  %686 = vmatmul.mubr.bf16.gmra.mxu0 %v508
  %v687 = vpop.f32.mrf.mxu0
  %v688 = vadd.f32 %v437, %v687
  %v689 = vpop.f32.mrf.mxu0
  %v690 = vadd.f32 %v441, %v689
  %v691 = vpop.f32.mrf.mxu0
  %v692 = vadd.f32 %v437, %v691
  %v693 = vpop.f32.mrf.mxu0
  %v694 = vadd.f32 %v441, %v693
  %695 = vmatprep.mubr.bf16.mxu0 0
  %696 = vmatmul.mubr.bf16.gmra.mxu0 %v511
  %v697 = vpop.f32.mrf.mxu0
  %v698 = vadd.f32 %v437, %v697
  %v699 = vpop.f32.mrf.mxu0
  %v700 = vadd.f32 %v441, %v699
  %v701 = vpop.f32.mrf.mxu0
  %v702 = vadd.f32 %v437, %v701
  %v703 = vpop.f32.mrf.mxu0
  %v704 = vadd.f32 %v441, %v703
  %705 = vdwg.mxu0
  %v706 = vxor.u32 %v548, 2147483648
  %v707 = vxor.u32 %v550, 2147483648
  %v708 = vxor.u32 %v552, 2147483648
  %v709 = vxor.u32 %v554, 2147483648
  %v710 = vxor.u32 %v558, 2147483648
  %v711 = vxor.u32 %v560, 2147483648
  %v712 = vxor.u32 %v562, 2147483648
  %v713 = vxor.u32 %v564, 2147483648
  %v714 = vxor.u32 %v568, 2147483648
  %v715 = vxor.u32 %v570, 2147483648
  %v716 = vxor.u32 %v572, 2147483648
  %v717 = vxor.u32 %v574, 2147483648
  %v718 = vxor.u32 %v578, 2147483648
  %v719 = vxor.u32 %v580, 2147483648
  %v720 = vxor.u32 %v582, 2147483648
  %v721 = vxor.u32 %v584, 2147483648
  %v722 = vxor.u32 %v588, 2147483648
  %v723 = vxor.u32 %v590, 2147483648
  %v724 = vxor.u32 %v592, 2147483648
  %v725 = vxor.u32 %v594, 2147483648
  %v726 = vxor.u32 %v598, 2147483648
  %v727 = vxor.u32 %v600, 2147483648
  %v728 = vxor.u32 %v602, 2147483648
  %v729 = vxor.u32 %v604, 2147483648
  %v730 = vxor.u32 %v608, 2147483648
  %v731 = vxor.u32 %v610, 2147483648
  %v732 = vxor.u32 %v612, 2147483648
  %v733 = vxor.u32 %v614, 2147483648
  %v734 = vxor.u32 %v618, 2147483648
  %v735 = vxor.u32 %v620, 2147483648
  %v736 = vxor.u32 %v622, 2147483648
  %v737 = vxor.u32 %v624, 2147483648
  %v738 = vxor.u32 %v628, 2147483648
  %v739 = vxor.u32 %v630, 2147483648
  %v740 = vxor.u32 %v632, 2147483648
  %v741 = vxor.u32 %v634, 2147483648
  %v742 = vxor.u32 %v638, 2147483648
  %v743 = vxor.u32 %v640, 2147483648
  %v744 = vxor.u32 %v642, 2147483648
  %v745 = vxor.u32 %v644, 2147483648
  %v746 = vxor.u32 %v648, 2147483648
  %v747 = vxor.u32 %v650, 2147483648
  %v748 = vxor.u32 %v652, 2147483648
  %v749 = vxor.u32 %v654, 2147483648
  %v750 = vxor.u32 %v658, 2147483648
  %v751 = vxor.u32 %v660, 2147483648
  %v752 = vxor.u32 %v662, 2147483648
  %v753 = vxor.u32 %v664, 2147483648
  %v754 = vxor.u32 %v668, 2147483648
  %v755 = vxor.u32 %v670, 2147483648
  %v756 = vxor.u32 %v672, 2147483648
  %v757 = vxor.u32 %v674, 2147483648
  %v758 = vxor.u32 %v678, 2147483648
  %v759 = vxor.u32 %v680, 2147483648
  %v760 = vxor.u32 %v682, 2147483648
  %v761 = vxor.u32 %v684, 2147483648
  %v762 = vxor.u32 %v688, 2147483648
  %v763 = vxor.u32 %v690, 2147483648
  %v764 = vxor.u32 %v692, 2147483648
  %v765 = vxor.u32 %v694, 2147483648
  %v766 = vxor.u32 %v698, 2147483648
  %v767 = vxor.u32 %v700, 2147483648
  %v768 = vxor.u32 %v702, 2147483648
  %v769 = vxor.u32 %v704, 2147483648
  %v770 = vmul.f32 %v706, 1.442695
  %v771 = vpow.pop %v770
  %v772 = vmul.f32 %v707, 1.442695
  %v773 = vpow.pop %v772
  %v774 = vmul.f32 %v708, 1.442695
  %v775 = vpow.pop %v774
  %v776 = vmul.f32 %v709, 1.442695
  %v777 = vpow.pop %v776
  %v778 = vmul.f32 %v710, 1.442695
  %v779 = vpow.pop %v778
  %v780 = vmul.f32 %v711, 1.442695
  %v781 = vpow.pop %v780
  %v782 = vmul.f32 %v712, 1.442695
  %v783 = vpow.pop %v782
  %v784 = vmul.f32 %v713, 1.442695
  %v785 = vpow.pop %v784
  %v786 = vmul.f32 %v714, 1.442695
  %v787 = vpow.pop %v786
  %v788 = vmul.f32 %v715, 1.442695
  %v789 = vpow.pop %v788
  %v790 = vmul.f32 %v716, 1.442695
  %v791 = vpow.pop %v790
  %v792 = vmul.f32 %v717, 1.442695
  %v793 = vpow.pop %v792
  %v794 = vmul.f32 %v718, 1.442695
  %v795 = vpow.pop %v794
  %v796 = vmul.f32 %v719, 1.442695
  %v797 = vpow.pop %v796
  %v798 = vmul.f32 %v720, 1.442695
  %v799 = vpow.pop %v798
  %v800 = vmul.f32 %v721, 1.442695
  %v801 = vpow.pop %v800
  %v802 = vmul.f32 %v722, 1.442695
  %v803 = vpow.pop %v802
  %v804 = vmul.f32 %v723, 1.442695
  %v805 = vpow.pop %v804
  %v806 = vmul.f32 %v724, 1.442695
  %v807 = vpow.pop %v806
  %v808 = vmul.f32 %v725, 1.442695
  %v809 = vpow.pop %v808
  %v810 = vmul.f32 %v726, 1.442695
  %v811 = vpow.pop %v810
  %v812 = vmul.f32 %v727, 1.442695
  %v813 = vpow.pop %v812
  %v814 = vmul.f32 %v728, 1.442695
  %v815 = vpow.pop %v814
  %v816 = vmul.f32 %v729, 1.442695
  %v817 = vpow.pop %v816
  %v818 = vmul.f32 %v730, 1.442695
  %v819 = vpow.pop %v818
  %v820 = vmul.f32 %v731, 1.442695
  %v821 = vpow.pop %v820
  %v822 = vmul.f32 %v732, 1.442695
  %v823 = vpow.pop %v822
  %v824 = vmul.f32 %v733, 1.442695
  %v825 = vpow.pop %v824
  %v826 = vmul.f32 %v734, 1.442695
  %v827 = vpow.pop %v826
  %v828 = vmul.f32 %v735, 1.442695
  %v829 = vpow.pop %v828
  %v830 = vmul.f32 %v736, 1.442695
  %v831 = vpow.pop %v830
  %v832 = vmul.f32 %v737, 1.442695
  %v833 = vpow.pop %v832
  %v834 = vmul.f32 %v738, 1.442695
  %v835 = vpow.pop %v834
  %v836 = vmul.f32 %v739, 1.442695
  %v837 = vpow.pop %v836
  %v838 = vmul.f32 %v740, 1.442695
  %v839 = vpow.pop %v838
  %v840 = vmul.f32 %v741, 1.442695
  %v841 = vpow.pop %v840
  %v842 = vmul.f32 %v742, 1.442695
  %v843 = vpow.pop %v842
  %v844 = vmul.f32 %v743, 1.442695
  %v845 = vpow.pop %v844
  %v846 = vmul.f32 %v744, 1.442695
  %v847 = vpow.pop %v846
  %v848 = vmul.f32 %v745, 1.442695
  %v849 = vpow.pop %v848
  %v850 = vmul.f32 %v746, 1.442695
  %v851 = vpow.pop %v850
  %v852 = vmul.f32 %v747, 1.442695
  %v853 = vpow.pop %v852
  %v854 = vmul.f32 %v748, 1.442695
  %v855 = vpow.pop %v854
  %v856 = vmul.f32 %v749, 1.442695
  %v857 = vpow.pop %v856
  %v858 = vmul.f32 %v750, 1.442695
  %v859 = vpow.pop %v858
  %v860 = vmul.f32 %v751, 1.442695
  %v861 = vpow.pop %v860
  %v862 = vmul.f32 %v752, 1.442695
  %v863 = vpow.pop %v862
  %v864 = vmul.f32 %v753, 1.442695
  %v865 = vpow.pop %v864
  %v866 = vmul.f32 %v754, 1.442695
  %v867 = vpow.pop %v866
  %v868 = vmul.f32 %v755, 1.442695
  %v869 = vpow.pop %v868
  %v870 = vmul.f32 %v756, 1.442695
  %v871 = vpow.pop %v870
  %v872 = vmul.f32 %v757, 1.442695
  %v873 = vpow.pop %v872
  %v874 = vmul.f32 %v758, 1.442695
  %v875 = vpow.pop %v874
  %v876 = vmul.f32 %v759, 1.442695
  %v877 = vpow.pop %v876
  %v878 = vmul.f32 %v760, 1.442695
  %v879 = vpow.pop %v878
  %v880 = vmul.f32 %v761, 1.442695
  %v881 = vpow.pop %v880
  %v882 = vmul.f32 %v762, 1.442695
  %v883 = vpow.pop %v882
  %v884 = vmul.f32 %v763, 1.442695
  %v885 = vpow.pop %v884
  %v886 = vmul.f32 %v764, 1.442695
  %v887 = vpow.pop %v886
  %v888 = vmul.f32 %v765, 1.442695
  %v889 = vpow.pop %v888
  %v890 = vmul.f32 %v766, 1.442695
  %v891 = vpow.pop %v890
  %v892 = vmul.f32 %v767, 1.442695
  %v893 = vpow.pop %v892
  %v894 = vmul.f32 %v768, 1.442695
  %v895 = vpow.pop %v894
  %v896 = vmul.f32 %v769, 1.442695
  %v897 = vpow.pop %v896
  %v898 = vadd.f32 %v771, 1.0
  %v899 = vadd.f32 %v773, 1.0
  %v900 = vadd.f32 %v775, 1.0
  %v901 = vadd.f32 %v777, 1.0
  %v902 = vadd.f32 %v779, 1.0
  %v903 = vadd.f32 %v781, 1.0
  %v904 = vadd.f32 %v783, 1.0
  %v905 = vadd.f32 %v785, 1.0
  %v906 = vadd.f32 %v787, 1.0
  %v907 = vadd.f32 %v789, 1.0
  %v908 = vadd.f32 %v791, 1.0
  %v909 = vadd.f32 %v793, 1.0
  %v910 = vadd.f32 %v795, 1.0
  %v911 = vadd.f32 %v797, 1.0
  %v912 = vadd.f32 %v799, 1.0
  %v913 = vadd.f32 %v801, 1.0
  %v914 = vadd.f32 %v803, 1.0
  %v915 = vadd.f32 %v805, 1.0
  %v916 = vadd.f32 %v807, 1.0
  %v917 = vadd.f32 %v809, 1.0
  %v918 = vadd.f32 %v811, 1.0
  %v919 = vadd.f32 %v813, 1.0
  %v920 = vadd.f32 %v815, 1.0
  %v921 = vadd.f32 %v817, 1.0
  %v922 = vadd.f32 %v819, 1.0
  %v923 = vadd.f32 %v821, 1.0
  %v924 = vadd.f32 %v823, 1.0
  %v925 = vadd.f32 %v825, 1.0
  %v926 = vadd.f32 %v827, 1.0
  %v927 = vadd.f32 %v829, 1.0
  %v928 = vadd.f32 %v831, 1.0
  %v929 = vadd.f32 %v833, 1.0
  %v930 = vadd.f32 %v835, 1.0
  %v931 = vadd.f32 %v837, 1.0
  %v932 = vadd.f32 %v839, 1.0
  %v933 = vadd.f32 %v841, 1.0
  %v934 = vadd.f32 %v843, 1.0
  %v935 = vadd.f32 %v845, 1.0
  %v936 = vadd.f32 %v847, 1.0
  %v937 = vadd.f32 %v849, 1.0
  %v938 = vadd.f32 %v851, 1.0
  %v939 = vadd.f32 %v853, 1.0
  %v940 = vadd.f32 %v855, 1.0
  %v941 = vadd.f32 %v857, 1.0
  %v942 = vadd.f32 %v859, 1.0
  %v943 = vadd.f32 %v861, 1.0
  %v944 = vadd.f32 %v863, 1.0
  %v945 = vadd.f32 %v865, 1.0
  %v946 = vadd.f32 %v867, 1.0
  %v947 = vadd.f32 %v869, 1.0
  %v948 = vadd.f32 %v871, 1.0
  %v949 = vadd.f32 %v873, 1.0
  %v950 = vadd.f32 %v875, 1.0
  %v951 = vadd.f32 %v877, 1.0
  %v952 = vadd.f32 %v879, 1.0
  %v953 = vadd.f32 %v881, 1.0
  %v954 = vadd.f32 %v883, 1.0
  %v955 = vadd.f32 %v885, 1.0
  %v956 = vadd.f32 %v887, 1.0
  %v957 = vadd.f32 %v889, 1.0
  %v958 = vadd.f32 %v891, 1.0
  %v959 = vadd.f32 %v893, 1.0
  %v960 = vadd.f32 %v895, 1.0
  %v961 = vadd.f32 %v897, 1.0
  %v962 = vrcp.pop %v898
  %v963 = vmul.f32 1.0, %v962
  %v964 = vrcp.pop %v899
  %v965 = vmul.f32 1.0, %v964
  %v966 = vrcp.pop %v900
  %v967 = vmul.f32 1.0, %v966
  %v968 = vrcp.pop %v901
  %v969 = vmul.f32 1.0, %v968
  %v970 = vrcp.pop %v902
  %v971 = vmul.f32 1.0, %v970
  %v972 = vrcp.pop %v903
  %v973 = vmul.f32 1.0, %v972
  %v974 = vrcp.pop %v904
  %v975 = vmul.f32 1.0, %v974
  %v976 = vrcp.pop %v905
  %v977 = vmul.f32 1.0, %v976
  %v978 = vrcp.pop %v906
  %v979 = vmul.f32 1.0, %v978
  %v980 = vrcp.pop %v907
  %v981 = vmul.f32 1.0, %v980
  %v982 = vrcp.pop %v908
  %v983 = vmul.f32 1.0, %v982
  %v984 = vrcp.pop %v909
  %v985 = vmul.f32 1.0, %v984
  %v986 = vrcp.pop %v910
  %v987 = vmul.f32 1.0, %v986
  %v988 = vrcp.pop %v911
  %v989 = vmul.f32 1.0, %v988
  %v990 = vrcp.pop %v912
  %v991 = vmul.f32 1.0, %v990
  %v992 = vrcp.pop %v913
  %v993 = vmul.f32 1.0, %v992
  %v994 = vrcp.pop %v914
  %v995 = vmul.f32 1.0, %v994
  %v996 = vrcp.pop %v915
  %v997 = vmul.f32 1.0, %v996
  %v998 = vrcp.pop %v916
  %v999 = vmul.f32 1.0, %v998
  %v1000 = vrcp.pop %v917
  %v1001 = vmul.f32 1.0, %v1000
  %v1002 = vrcp.pop %v918
  %v1003 = vmul.f32 1.0, %v1002
  %v1004 = vrcp.pop %v919
  %v1005 = vmul.f32 1.0, %v1004
  %v1006 = vrcp.pop %v920
  %v1007 = vmul.f32 1.0, %v1006
  %v1008 = vrcp.pop %v921
  %v1009 = vmul.f32 1.0, %v1008
  %v1010 = vrcp.pop %v922
  %v1011 = vmul.f32 1.0, %v1010
  %v1012 = vrcp.pop %v923
  %v1013 = vmul.f32 1.0, %v1012
  %v1014 = vrcp.pop %v924
  %v1015 = vmul.f32 1.0, %v1014
  %v1016 = vrcp.pop %v925
  %v1017 = vmul.f32 1.0, %v1016
  %v1018 = vrcp.pop %v926
  %v1019 = vmul.f32 1.0, %v1018
  %v1020 = vrcp.pop %v927
  %v1021 = vmul.f32 1.0, %v1020
  %v1022 = vrcp.pop %v928
  %v1023 = vmul.f32 1.0, %v1022
  %v1024 = vrcp.pop %v929
  %v1025 = vmul.f32 1.0, %v1024
  %v1026 = vrcp.pop %v930
  %v1027 = vmul.f32 1.0, %v1026
  %v1028 = vrcp.pop %v931
  %v1029 = vmul.f32 1.0, %v1028
  %v1030 = vrcp.pop %v932
  %v1031 = vmul.f32 1.0, %v1030
  %v1032 = vrcp.pop %v933
  %v1033 = vmul.f32 1.0, %v1032
  %v1034 = vrcp.pop %v934
  %v1035 = vmul.f32 1.0, %v1034
  %v1036 = vrcp.pop %v935
  %v1037 = vmul.f32 1.0, %v1036
  %v1038 = vrcp.pop %v936
  %v1039 = vmul.f32 1.0, %v1038
  %v1040 = vrcp.pop %v937
  %v1041 = vmul.f32 1.0, %v1040
  %v1042 = vrcp.pop %v938
  %v1043 = vmul.f32 1.0, %v1042
  %v1044 = vrcp.pop %v939
  %v1045 = vmul.f32 1.0, %v1044
  %v1046 = vrcp.pop %v940
  %v1047 = vmul.f32 1.0, %v1046
  %v1048 = vrcp.pop %v941
  %v1049 = vmul.f32 1.0, %v1048
  %v1050 = vrcp.pop %v942
  %v1051 = vmul.f32 1.0, %v1050
  %v1052 = vrcp.pop %v943
  %v1053 = vmul.f32 1.0, %v1052
  %v1054 = vrcp.pop %v944
  %v1055 = vmul.f32 1.0, %v1054
  %v1056 = vrcp.pop %v945
  %v1057 = vmul.f32 1.0, %v1056
  %v1058 = vrcp.pop %v946
  %v1059 = vmul.f32 1.0, %v1058
  %v1060 = vrcp.pop %v947
  %v1061 = vmul.f32 1.0, %v1060
  %v1062 = vrcp.pop %v948
  %v1063 = vmul.f32 1.0, %v1062
  %v1064 = vrcp.pop %v949
  %v1065 = vmul.f32 1.0, %v1064
  %v1066 = vrcp.pop %v950
  %v1067 = vmul.f32 1.0, %v1066
  %v1068 = vrcp.pop %v951
  %v1069 = vmul.f32 1.0, %v1068
  %v1070 = vrcp.pop %v952
  %v1071 = vmul.f32 1.0, %v1070
  %v1072 = vrcp.pop %v953
  %v1073 = vmul.f32 1.0, %v1072
  %v1074 = vrcp.pop %v954
  %v1075 = vmul.f32 1.0, %v1074
  %v1076 = vrcp.pop %v955
  %v1077 = vmul.f32 1.0, %v1076
  %v1078 = vrcp.pop %v956
  %v1079 = vmul.f32 1.0, %v1078
  %v1080 = vrcp.pop %v957
  %v1081 = vmul.f32 1.0, %v1080
  %v1082 = vrcp.pop %v958
  %v1083 = vmul.f32 1.0, %v1082
  %v1084 = vrcp.pop %v959
  %v1085 = vmul.f32 1.0, %v1084
  %v1086 = vrcp.pop %v960
  %v1087 = vmul.f32 1.0, %v1086
  %v1088 = vrcp.pop %v961
  %v1089 = vmul.f32 1.0, %v1088
  %v1090 = vmul.f32 %v548, %v963
  %v1091 = vmul.f32 %v550, %v965
  %v1092 = vmul.f32 %v552, %v967
  %v1093 = vmul.f32 %v554, %v969
  %v1094 = vmul.f32 %v558, %v971
  %v1095 = vmul.f32 %v560, %v973
  %v1096 = vmul.f32 %v562, %v975
  %v1097 = vmul.f32 %v564, %v977
  %v1098 = vmul.f32 %v568, %v979
  %v1099 = vmul.f32 %v570, %v981
  %v1100 = vmul.f32 %v572, %v983
  %v1101 = vmul.f32 %v574, %v985
  %v1102 = vmul.f32 %v578, %v987
  %v1103 = vmul.f32 %v580, %v989
  %v1104 = vmul.f32 %v582, %v991
  %v1105 = vmul.f32 %v584, %v993
  %v1106 = vmul.f32 %v588, %v995
  %v1107 = vmul.f32 %v590, %v997
  %v1108 = vmul.f32 %v592, %v999
  %v1109 = vmul.f32 %v594, %v1001
  %v1110 = vmul.f32 %v598, %v1003
  %v1111 = vmul.f32 %v600, %v1005
  %v1112 = vmul.f32 %v602, %v1007
  %v1113 = vmul.f32 %v604, %v1009
  %v1114 = vmul.f32 %v608, %v1011
  %v1115 = vmul.f32 %v610, %v1013
  %v1116 = vmul.f32 %v612, %v1015
  %v1117 = vmul.f32 %v614, %v1017
  %v1118 = vmul.f32 %v618, %v1019
  %v1119 = vmul.f32 %v620, %v1021
  %v1120 = vmul.f32 %v622, %v1023
  %v1121 = vmul.f32 %v624, %v1025
  %v1122 = vmul.f32 %v628, %v1027
  %v1123 = vmul.f32 %v630, %v1029
  %v1124 = vmul.f32 %v632, %v1031
  %v1125 = vmul.f32 %v634, %v1033
  %v1126 = vmul.f32 %v638, %v1035
  %v1127 = vmul.f32 %v640, %v1037
  %v1128 = vmul.f32 %v642, %v1039
  %v1129 = vmul.f32 %v644, %v1041
  %v1130 = vmul.f32 %v648, %v1043
  %v1131 = vmul.f32 %v650, %v1045
  %v1132 = vmul.f32 %v652, %v1047
  %v1133 = vmul.f32 %v654, %v1049
  %v1134 = vmul.f32 %v658, %v1051
  %v1135 = vmul.f32 %v660, %v1053
  %v1136 = vmul.f32 %v662, %v1055
  %v1137 = vmul.f32 %v664, %v1057
  %v1138 = vmul.f32 %v668, %v1059
  %v1139 = vmul.f32 %v670, %v1061
  %v1140 = vmul.f32 %v672, %v1063
  %v1141 = vmul.f32 %v674, %v1065
  %v1142 = vmul.f32 %v678, %v1067
  %v1143 = vmul.f32 %v680, %v1069
  %v1144 = vmul.f32 %v682, %v1071
  %v1145 = vmul.f32 %v684, %v1073
  %v1146 = vmul.f32 %v688, %v1075
  %v1147 = vmul.f32 %v690, %v1077
  %v1148 = vmul.f32 %v692, %v1079
  %v1149 = vmul.f32 %v694, %v1081
  %v1150 = vmul.f32 %v698, %v1083
  %v1151 = vmul.f32 %v700, %v1085
  %v1152 = vmul.f32 %v702, %v1087
  %v1153 = vmul.f32 %v704, %v1089
  %1155 = vset.pattern.permute.xlu0 0
  %1156 = vperm.xlu0 %1155, %v39
  %v1157 = vpop.permute.xlu0 %1156
  %1160 = vset.pattern.permute.xlu0 0
  %1161 = vperm.xlu0 %1160, %v40
  %v1162 = vpop.permute.xlu0 %1161
  %1165 = vset.pattern.permute.xlu0 0
  %1166 = vperm.xlu0 %1165, %v41
  %v1167 = vpop.permute.xlu0 %1166
  %1170 = vset.pattern.permute.xlu0 0
  %1171 = vperm.xlu0 %1170, %v42
  %v1172 = vpop.permute.xlu0 %1171
  %1175 = vset.pattern.permute.xlu0 0
  %1176 = vperm.xlu0 %1175, %v43
  %v1177 = vpop.permute.xlu0 %1176
  %1180 = vset.pattern.permute.xlu0 0
  %1181 = vperm.xlu0 %1180, %v44
  %v1182 = vpop.permute.xlu0 %1181
  %1185 = vset.pattern.permute.xlu0 0
  %1186 = vperm.xlu0 %1185, %v45
  %v1187 = vpop.permute.xlu0 %1186
  %1190 = vset.pattern.permute.xlu0 0
  %1191 = vperm.xlu0 %1190, %v46
  %v1192 = vpop.permute.xlu0 %1191
  %1195 = vset.pattern.permute.xlu0 0
  %1196 = vperm.xlu0 %1195, %v47
  %v1197 = vpop.permute.xlu0 %1196
  %1200 = vset.pattern.permute.xlu0 0
  %1201 = vperm.xlu0 %1200, %v48
  %v1202 = vpop.permute.xlu0 %1201
  %1205 = vset.pattern.permute.xlu0 0
  %1206 = vperm.xlu0 %1205, %v49
  %v1207 = vpop.permute.xlu0 %1206
  %1210 = vset.pattern.permute.xlu0 0
  %1211 = vperm.xlu0 %1210, %v50
  %v1212 = vpop.permute.xlu0 %1211
  %1215 = vset.pattern.permute.xlu0 0
  %1216 = vperm.xlu0 %1215, %v51
  %v1217 = vpop.permute.xlu0 %1216
  %1220 = vset.pattern.permute.xlu0 0
  %1221 = vperm.xlu0 %1220, %v52
  %v1222 = vpop.permute.xlu0 %1221
  %1225 = vset.pattern.permute.xlu0 0
  %1226 = vperm.xlu0 %1225, %v53
  %v1227 = vpop.permute.xlu0 %1226
  %1230 = vset.pattern.permute.xlu0 0
  %1231 = vperm.xlu0 %1230, %v54
  %v1232 = vpop.permute.xlu0 %1231
  %1235 = vset.pattern.permute.xlu0 0
  %1236 = vperm.xlu0 %1235, %v55
  %v1237 = vpop.permute.xlu0 %1236
  %1240 = vset.pattern.permute.xlu0 0
  %1241 = vperm.xlu0 %1240, %v56
  %v1242 = vpop.permute.xlu0 %1241
  %1245 = vset.pattern.permute.xlu0 0
  %1246 = vperm.xlu0 %1245, %v57
  %v1247 = vpop.permute.xlu0 %1246
  %1250 = vset.pattern.permute.xlu0 0
  %1251 = vperm.xlu0 %1250, %v58
  %v1252 = vpop.permute.xlu0 %1251
  %1255 = vset.pattern.permute.xlu0 0
  %1256 = vperm.xlu0 %1255, %v59
  %v1257 = vpop.permute.xlu0 %1256
  %1260 = vset.pattern.permute.xlu0 0
  %1261 = vperm.xlu0 %1260, %v60
  %v1262 = vpop.permute.xlu0 %1261
  %1265 = vset.pattern.permute.xlu0 0
  %1266 = vperm.xlu0 %1265, %v61
  %v1267 = vpop.permute.xlu0 %1266
  %1270 = vset.pattern.permute.xlu0 0
  %1271 = vperm.xlu0 %1270, %v62
  %v1272 = vpop.permute.xlu0 %1271
  %1275 = vset.pattern.permute.xlu0 0
  %1276 = vperm.xlu0 %1275, %v63
  %v1277 = vpop.permute.xlu0 %1276
  %1280 = vset.pattern.permute.xlu0 0
  %1281 = vperm.xlu0 %1280, %v64
  %v1282 = vpop.permute.xlu0 %1281
  %1285 = vset.pattern.permute.xlu0 0
  %1286 = vperm.xlu0 %1285, %v65
  %v1287 = vpop.permute.xlu0 %1286
  %1290 = vset.pattern.permute.xlu0 0
  %1291 = vperm.xlu0 %1290, %v66
  %v1292 = vpop.permute.xlu0 %1291
  %1295 = vset.pattern.permute.xlu0 0
  %1296 = vperm.xlu0 %1295, %v67
  %v1297 = vpop.permute.xlu0 %1296
  %1300 = vset.pattern.permute.xlu0 0
  %1301 = vperm.xlu0 %1300, %v68
  %v1302 = vpop.permute.xlu0 %1301
  %1305 = vset.pattern.permute.xlu0 0
  %1306 = vperm.xlu0 %1305, %v69
  %v1307 = vpop.permute.xlu0 %1306
  %1310 = vset.pattern.permute.xlu0 0
  %1311 = vperm.xlu0 %1310, %v70
  %v1312 = vpop.permute.xlu0 %1311
  %v1314 = vmul.f32 %v1091, %v1157
  %v1315 = vmul.f32 %v1093, %v1162
  %v1316 = vmul.f32 %v1095, %v1167
  %v1317 = vmul.f32 %v1097, %v1172
  %v1318 = vmul.f32 %v1099, %v1177
  %v1319 = vmul.f32 %v1101, %v1182
  %v1320 = vmul.f32 %v1103, %v1187
  %v1321 = vmul.f32 %v1105, %v1192
  %v1322 = vmul.f32 %v1107, %v1197
  %v1323 = vmul.f32 %v1109, %v1202
  %v1324 = vmul.f32 %v1111, %v1207
  %v1325 = vmul.f32 %v1113, %v1212
  %v1326 = vmul.f32 %v1115, %v1217
  %v1327 = vmul.f32 %v1117, %v1222
  %v1328 = vmul.f32 %v1119, %v1227
  %v1329 = vmul.f32 %v1121, %v1232
  %v1330 = vmul.f32 %v1123, %v1237
  %v1331 = vmul.f32 %v1125, %v1242
  %v1332 = vmul.f32 %v1127, %v1247
  %v1333 = vmul.f32 %v1129, %v1252
  %v1334 = vmul.f32 %v1131, %v1257
  %v1335 = vmul.f32 %v1133, %v1262
  %v1336 = vmul.f32 %v1135, %v1267
  %v1337 = vmul.f32 %v1137, %v1272
  %v1338 = vmul.f32 %v1139, %v1277
  %v1339 = vmul.f32 %v1141, %v1282
  %v1340 = vmul.f32 %v1143, %v1287
  %v1341 = vmul.f32 %v1145, %v1292
  %v1342 = vmul.f32 %v1147, %v1297
  %v1343 = vmul.f32 %v1149, %v1302
  %v1344 = vmul.f32 %v1151, %v1307
  %v1345 = vmul.f32 %v1153, %v1312
  %v1346 = vld [vmem:[%s0] sm:$0xff]
  %v1347 = vld [vmem:[%s0 + $0x8] sm:$0xff]
  %v1348 = vld [vmem:[%s6] sm:$0xf]
  %v1349 = vld [vmem:[%s6 + $0x4] sm:$0xf]
  %v1350 = vld [vmem:[%s6 + $0x8] sm:$0xf]
  %v1351 = vld [vmem:[%s6 + $0xc] sm:$0xf]
  %v1352 = vld [vmem:[%s7] sm:$0xf]
  %v1353 = vld [vmem:[%s7 + $0x4] sm:$0xf]
  %v1354 = vld [vmem:[%s7 + $0x8] sm:$0xf]
  %v1355 = vld [vmem:[%s7 + $0xc] sm:$0xf]
  %v1356 = vld [vmem:[%s10] sm:$0xff]
  %v1357 = vsel %vm464, %v1346, 0.0
  %1358 = vadd.xlane.f32.xlu0 %v1357
  %v1359 = vpop.xlane.xlu0 %1358
  %v1360 = vsel %vm464, %v1347, 0.0
  %1361 = vadd.xlane.f32.xlu0 %v1360
  %v1362 = vpop.xlane.xlu0 %1361
  %v1363 = vrcp.pop 32.0
  %v1364 = vmul.f32 %v1359, %v1363
  %v1365 = vmul.f32 %v1362, %v1363
  %v1366 = vsub.f32 %v1346, %v1364
  %v1367 = vsub.f32 %v1347, %v1365
  %v1368 = vmul.f32 %v1366, %v1366
  %v1369 = vmul.f32 %v1367, %v1367
  %v1370 = vsel %vm464, %v1368, 0.0
  %1371 = vadd.xlane.f32.xlu0 %v1370
  %v1372 = vpop.xlane.xlu0 %1371
  %v1373 = vsel %vm464, %v1369, 0.0
  %1374 = vadd.xlane.f32.xlu0 %v1373
  %v1375 = vpop.xlane.xlu0 %1374
  %v1376 = vmul.f32 %v1372, %v1363
  %v1377 = vmul.f32 %v1375, %v1363
  %v1378 = vadd.f32 %v1376, 1e-05
  %v1379 = vadd.f32 %v1377, 1e-05
  %v1380 = vrsqrt.pop %v1378
  %v1381 = vrsqrt.pop %v1379
  %v1382 = vmul.f32 %v1366, %v1380
  %v1383 = vmul.f32 %v1367, %v1381
  %v1384 = vlaneseq
  %v1385 = vshrl.u32 %v1384, 7
  %v1386 = vsub.s32 4, %v1385
  %v1387 = vrot.slane %v1356, %v1386
  %v1388 = vmul.f32 %v1382, %v1387
  %v1389 = vmul.f32 %v1383, %v1387
  %v1390 = vlaneseq
  %v1391 = vshrl.u32 %v1390, 7
  %v1392 = vsub.s32 5, %v1391
  %v1393 = vrot.slane %v1356, %v1392
  %v1394 = vadd.f32 %v1388, %v1393
  %v1395 = vadd.f32 %v1389, %v1393
  %v1396 = vpack.c.bf16 %v1395, %v1394
  %v1401 = vunpack.c.l.b16 %v1348
  %v1402 = vunpack.c.l.b16 %v1349
  %v1403 = vunpack.c.l.b16 %v1350
  %v1404 = vunpack.c.l.b16 %v1351
  %v1405 = vpack.c.b16 %v1402, %v1401
  %v1406 = vpack.c.b16 %v1404, %v1403
  %v1410 = vsel %vm464, %v1396, 0
  %1412 = vmatprep.subr.bf16.mxu0 0
  %1413 = vmatpush1.bf16.msra.mxu0 0
  %1414 = vmatprep.subr.bf16.mxu0 0
  %1415 = vmatpush1.bf16.msra.mxu0 0
  %1416 = vmatprep.subr.bf16.mxu0 0
  %1417 = vmatpush1.bf16.msra.mxu0 0
  %1418 = vmatprep.subr.bf16.mxu0 0
  %1419 = vmatpush1.bf16.msra.mxu0 0
  %1420 = vmatprep.subr.bf16.mxu0 0
  %1421 = vmatpush1.bf16.msra.mxu0 0
  %1422 = vmatprep.subr.bf16.mxu0 0
  %1423 = vmatpush1.bf16.msra.mxu0 0
  %1424 = vmatprep.subr.bf16.mxu0 0
  %1425 = vmatpush1.bf16.msra.mxu0 %v1406
  %1426 = vmatprep.subr.bf16.mxu0 0
  %1427 = vmatpush1.bf16.msra.mxu0 %v1405
  %1428 = vmatprep.subr.bf16.mxu0 0
  %1429 = vmatpush2.bf16.msra.mxu0 0
  %1430 = vmatprep.subr.bf16.mxu0 0
  %1431 = vmatpush2.bf16.msra.mxu0 0
  %1432 = vmatprep.subr.bf16.mxu0 0
  %1433 = vmatpush2.bf16.msra.mxu0 0
  %1434 = vmatprep.subr.bf16.mxu0 0
  %1435 = vmatpush2.bf16.msra.mxu0 0
  %1436 = vmatprep.subr.bf16.mxu0 0
  %1437 = vmatpush2.bf16.msra.mxu0 0
  %1438 = vmatprep.subr.bf16.mxu0 0
  %1439 = vmatpush2.bf16.msra.mxu0 0
  %1440 = vmatprep.subr.bf16.mxu0 0
  %1441 = vmatpush2.bf16.msra.mxu0 0
  %1442 = vmatprep.subr.bf16.mxu0 0
  %1443 = vmatpush2.bf16.msra.mxu0 0
  %1444 = vmatprep.mubr.bf16.mxu0 0
  %1445 = vmatmul.mubr.bf16.gmra.mxu0 %v1410
  %v1446 = vpop.f32.mrf.mxu0
  %v1447 = vadd.f32 0.0, %v1446
  %v1448 = vpop.f32.mrf.mxu0
  %v1449 = vpop.f32.mrf.mxu0
  %v1450 = vadd.f32 0.0, %v1449
  %v1451 = vpop.f32.mrf.mxu0
  %1452 = vdwg.mxu0
  %v1453 = vlaneseq
  %v1454 = vshrl.u32 %v1453, 7
  %v1455 = vsub.s32 0, %v1454
  %v1456 = vrot.slane %v1356, %v1455
  %v1457 = vadd.f32 %v1447, %v1456
  %v1458 = vadd.f32 %v1450, %v1456
  %v1459 = vlaneseq
  %v1460 = vshrl.u32 %v1459, 7
  %v1461 = vsub.s32 1, %v1460
  %v1462 = vrot.slane %v1356, %v1461
  %1464 = vrot.lane.b32.xlu0 %v1462, 32
  %v1465 = vpop.permute.xlu0 %1464
  %v1467 = vadd.f32 %v1447, %v1465
  %v1468 = vadd.f32 %v1450, %v1465
  %v1469 = vlaneseq
  %v1470 = vshrl.u32 %v1469, 7
  %v1471 = vsub.s32 2, %v1470
  %v1472 = vrot.slane %v1356, %v1471
  %1474 = vrot.lane.b32.xlu0 %v1472, 64
  %v1475 = vpop.permute.xlu0 %1474
  %v1477 = vadd.f32 %v1447, %v1475
  %v1478 = vadd.f32 %v1450, %v1475
  %v1481 = vcombine.high %v1457, %v1457
  %v1483 = vunpack.c.l.s4 1966171168
  %v1484 = vunpack.c.0.s8 %v1483
  %v1485 = vlaneseq
  %v1486 = vshrl.u32 %v1485, 7
  %v1487 = vsub.s32 %v1484, %v1486
  %v1488 = vrot.slane %v1457, %v1487
  %v1490 = vunpack.c.l.s4 1966171168
  %v1491 = vunpack.c.0.s8 %v1490
  %v1492 = vlaneseq
  %v1493 = vshrl.u32 %v1492, 7
  %v1494 = vsub.s32 %v1491, %v1493
  %v1495 = vrot.slane %v1481, %v1494
  %v1496 = vcombine.high %v1488, %v1488
  %v1497 = vcombine.high %v1495, %v1495
  %v1499 = vunpack.c.l.s4 1966171168
  %v1500 = vunpack.c.0.s8 %v1499
  %v1501 = vlaneseq
  %v1502 = vshrl.u32 %v1501, 7
  %v1503 = vsub.s32 %v1500, %v1502
  %v1504 = vrot.slane %v1488, %v1503
  %v1506 = vunpack.c.l.s4 1966171168
  %v1507 = vunpack.c.0.s8 %v1506
  %v1508 = vlaneseq
  %v1509 = vshrl.u32 %v1508, 7
  %v1510 = vsub.s32 %v1507, %v1509
  %v1511 = vrot.slane %v1495, %v1510
  %v1513 = vunpack.c.l.s4 1966171168
  %v1514 = vunpack.c.0.s8 %v1513
  %v1515 = vlaneseq
  %v1516 = vshrl.u32 %v1515, 7
  %v1517 = vsub.s32 %v1514, %v1516
  %v1518 = vrot.slane %v1496, %v1517
  %v1520 = vunpack.c.l.s4 1966171168
  %v1521 = vunpack.c.0.s8 %v1520
  %v1522 = vlaneseq
  %v1523 = vshrl.u32 %v1522, 7
  %v1524 = vsub.s32 %v1521, %v1523
  %v1525 = vrot.slane %v1497, %v1524
  %v1526 = vcombine.high %v1504, %v1504
  %v1527 = vcombine.high %v1511, %v1511
  %v1528 = vcombine.high %v1518, %v1518
  %v1529 = vcombine.high %v1525, %v1525
  %v1530 = vcombine.high %v1458, %v1458
  %v1532 = vunpack.c.l.s4 1966171168
  %v1533 = vunpack.c.0.s8 %v1532
  %v1534 = vlaneseq
  %v1535 = vshrl.u32 %v1534, 7
  %v1536 = vsub.s32 %v1533, %v1535
  %v1537 = vrot.slane %v1458, %v1536
  %v1539 = vunpack.c.l.s4 1966171168
  %v1540 = vunpack.c.0.s8 %v1539
  %v1541 = vlaneseq
  %v1542 = vshrl.u32 %v1541, 7
  %v1543 = vsub.s32 %v1540, %v1542
  %v1544 = vrot.slane %v1530, %v1543
  %v1545 = vcombine.high %v1537, %v1537
  %v1546 = vcombine.high %v1544, %v1544
  %v1548 = vunpack.c.l.s4 1966171168
  %v1549 = vunpack.c.0.s8 %v1548
  %v1550 = vlaneseq
  %v1551 = vshrl.u32 %v1550, 7
  %v1552 = vsub.s32 %v1549, %v1551
  %v1553 = vrot.slane %v1537, %v1552
  %v1555 = vunpack.c.l.s4 1966171168
  %v1556 = vunpack.c.0.s8 %v1555
  %v1557 = vlaneseq
  %v1558 = vshrl.u32 %v1557, 7
  %v1559 = vsub.s32 %v1556, %v1558
  %v1560 = vrot.slane %v1544, %v1559
  %v1562 = vunpack.c.l.s4 1966171168
  %v1563 = vunpack.c.0.s8 %v1562
  %v1564 = vlaneseq
  %v1565 = vshrl.u32 %v1564, 7
  %v1566 = vsub.s32 %v1563, %v1565
  %v1567 = vrot.slane %v1545, %v1566
  %v1569 = vunpack.c.l.s4 1966171168
  %v1570 = vunpack.c.0.s8 %v1569
  %v1571 = vlaneseq
  %v1572 = vshrl.u32 %v1571, 7
  %v1573 = vsub.s32 %v1570, %v1572
  %v1574 = vrot.slane %v1546, %v1573
  %v1575 = vcombine.high %v1553, %v1553
  %v1576 = vcombine.high %v1560, %v1560
  %v1577 = vcombine.high %v1567, %v1567
  %v1578 = vcombine.high %v1574, %v1574
  %v1579 = vlaneseq
  %v1580 = vshrl.u32 %v1579, 7
  %v1581 = vsub.s32 0, %v1580
  %v1582 = vrot.slane %v1504, %v1581
  %v1583 = vlaneseq
  %v1584 = vshrl.u32 %v1583, 7
  %v1585 = vsub.s32 0, %v1584
  %v1586 = vrot.slane %v1518, %v1585
  %v1587 = vlaneseq
  %v1588 = vshrl.u32 %v1587, 7
  %v1589 = vsub.s32 0, %v1588
  %v1590 = vrot.slane %v1526, %v1589
  %v1591 = vlaneseq
  %v1592 = vshrl.u32 %v1591, 7
  %v1593 = vsub.s32 0, %v1592
  %v1594 = vrot.slane %v1528, %v1593
  %v1595 = vlaneseq
  %v1596 = vshrl.u32 %v1595, 7
  %v1597 = vsub.s32 0, %v1596
  %v1598 = vrot.slane %v1511, %v1597
  %v1599 = vlaneseq
  %v1600 = vshrl.u32 %v1599, 7
  %v1601 = vsub.s32 0, %v1600
  %v1602 = vrot.slane %v1525, %v1601
  %v1603 = vlaneseq
  %v1604 = vshrl.u32 %v1603, 7
  %v1605 = vsub.s32 0, %v1604
  %v1606 = vrot.slane %v1527, %v1605
  %v1607 = vlaneseq
  %v1608 = vshrl.u32 %v1607, 7
  %v1609 = vsub.s32 0, %v1608
  %v1610 = vrot.slane %v1529, %v1609
  %v1611 = vlaneseq
  %v1612 = vshrl.u32 %v1611, 7
  %v1613 = vsub.s32 0, %v1612
  %v1614 = vrot.slane %v1553, %v1613
  %v1615 = vlaneseq
  %v1616 = vshrl.u32 %v1615, 7
  %v1617 = vsub.s32 0, %v1616
  %v1618 = vrot.slane %v1567, %v1617
  %v1619 = vlaneseq
  %v1620 = vshrl.u32 %v1619, 7
  %v1621 = vsub.s32 0, %v1620
  %v1622 = vrot.slane %v1575, %v1621
  %v1623 = vlaneseq
  %v1624 = vshrl.u32 %v1623, 7
  %v1625 = vsub.s32 0, %v1624
  %v1626 = vrot.slane %v1577, %v1625
  %v1627 = vlaneseq
  %v1628 = vshrl.u32 %v1627, 7
  %v1629 = vsub.s32 0, %v1628
  %v1630 = vrot.slane %v1560, %v1629
  %v1631 = vlaneseq
  %v1632 = vshrl.u32 %v1631, 7
  %v1633 = vsub.s32 0, %v1632
  %v1634 = vrot.slane %v1574, %v1633
  %v1635 = vlaneseq
  %v1636 = vshrl.u32 %v1635, 7
  %v1637 = vsub.s32 0, %v1636
  %v1638 = vrot.slane %v1576, %v1637
  %v1639 = vlaneseq
  %v1640 = vshrl.u32 %v1639, 7
  %v1641 = vsub.s32 0, %v1640
  %v1642 = vrot.slane %v1578, %v1641
  %1661 = vrot.lane.b32.xlu0 %v1467, 96
  %v1662 = vpop.permute.xlu0 %1661
  %1663 = vrot.lane.b32.xlu0 %v1468, 96
  %v1664 = vpop.permute.xlu0 %1663
  %v1667 = vmul.f32 %v1582, %v1662
  %v1668 = vmul.f32 %v1582, %v1664
  %v1669 = vmul.f32 %v1586, %v1662
  %v1670 = vmul.f32 %v1586, %v1664
  %v1671 = vmul.f32 %v1590, %v1662
  %v1672 = vmul.f32 %v1590, %v1664
  %v1673 = vmul.f32 %v1594, %v1662
  %v1674 = vmul.f32 %v1594, %v1664
  %v1675 = vmul.f32 %v1598, %v1662
  %v1676 = vmul.f32 %v1598, %v1664
  %v1677 = vmul.f32 %v1602, %v1662
  %v1678 = vmul.f32 %v1602, %v1664
  %v1679 = vmul.f32 %v1606, %v1662
  %v1680 = vmul.f32 %v1606, %v1664
  %v1681 = vmul.f32 %v1610, %v1662
  %v1682 = vmul.f32 %v1610, %v1664
  %v1683 = vmul.f32 %v1614, %v1662
  %v1684 = vmul.f32 %v1614, %v1664
  %v1685 = vmul.f32 %v1618, %v1662
  %v1686 = vmul.f32 %v1618, %v1664
  %v1687 = vmul.f32 %v1622, %v1662
  %v1688 = vmul.f32 %v1622, %v1664
  %v1689 = vmul.f32 %v1626, %v1662
  %v1690 = vmul.f32 %v1626, %v1664
  %v1691 = vmul.f32 %v1630, %v1662
  %v1692 = vmul.f32 %v1630, %v1664
  %v1693 = vmul.f32 %v1634, %v1662
  %v1694 = vmul.f32 %v1634, %v1664
  %v1695 = vmul.f32 %v1638, %v1662
  %v1696 = vmul.f32 %v1638, %v1664
  %v1697 = vmul.f32 %v1642, %v1662
  %v1698 = vmul.f32 %v1642, %v1664
  %v1699 = vmul.f32 %v1667, %v1090
  %v1700 = vmul.f32 %v1668, %v1092
  %v1701 = vmul.f32 %v1669, %v1094
  %v1702 = vmul.f32 %v1670, %v1096
  %v1703 = vmul.f32 %v1671, %v1098
  %v1704 = vmul.f32 %v1672, %v1100
  %v1705 = vmul.f32 %v1673, %v1102
  %v1706 = vmul.f32 %v1674, %v1104
  %v1707 = vmul.f32 %v1675, %v1106
  %v1708 = vmul.f32 %v1676, %v1108
  %v1709 = vmul.f32 %v1677, %v1110
  %v1710 = vmul.f32 %v1678, %v1112
  %v1711 = vmul.f32 %v1679, %v1114
  %v1712 = vmul.f32 %v1680, %v1116
  %v1713 = vmul.f32 %v1681, %v1118
  %v1714 = vmul.f32 %v1682, %v1120
  %v1715 = vmul.f32 %v1683, %v1122
  %v1716 = vmul.f32 %v1684, %v1124
  %v1717 = vmul.f32 %v1685, %v1126
  %v1718 = vmul.f32 %v1686, %v1128
  %v1719 = vmul.f32 %v1687, %v1130
  %v1720 = vmul.f32 %v1688, %v1132
  %v1721 = vmul.f32 %v1689, %v1134
  %v1722 = vmul.f32 %v1690, %v1136
  %v1723 = vmul.f32 %v1691, %v1138
  %v1724 = vmul.f32 %v1692, %v1140
  %v1725 = vmul.f32 %v1693, %v1142
  %v1726 = vmul.f32 %v1694, %v1144
  %v1727 = vmul.f32 %v1695, %v1146
  %v1728 = vmul.f32 %v1696, %v1148
  %v1729 = vmul.f32 %v1697, %v1150
  %v1730 = vmul.f32 %v1698, %v1152
  %v1731 = vpack.c.bf16 %v1700, %v1699
  %v1732 = vpack.c.bf16 %v1702, %v1701
  %v1733 = vpack.c.bf16 %v1704, %v1703
  %v1734 = vpack.c.bf16 %v1706, %v1705
  %v1735 = vpack.c.bf16 %v1708, %v1707
  %v1736 = vpack.c.bf16 %v1710, %v1709
  %v1737 = vpack.c.bf16 %v1712, %v1711
  %v1738 = vpack.c.bf16 %v1714, %v1713
  %v1739 = vpack.c.bf16 %v1716, %v1715
  %v1740 = vpack.c.bf16 %v1718, %v1717
  %v1741 = vpack.c.bf16 %v1720, %v1719
  %v1742 = vpack.c.bf16 %v1722, %v1721
  %v1743 = vpack.c.bf16 %v1724, %v1723
  %v1744 = vpack.c.bf16 %v1726, %v1725
  %v1745 = vpack.c.bf16 %v1728, %v1727
  %v1746 = vpack.c.bf16 %v1730, %v1729
  %v1751 = vunpack.c.l.b16 %v71
  %v1752 = vunpack.c.l.b16 %v72
  %v1753 = vunpack.c.l.b16 %v73
  %v1754 = vunpack.c.l.b16 %v74
  %v1755 = vpack.c.b16 %v1752, %v1751
  %v1756 = vpack.c.b16 %v1754, %v1753
  %v1760 = vsel %vm464, %v1731, 0
  %v1763 = vsel %vm464, %v1732, 0
  %v1766 = vsel %vm464, %v1733, 0
  %v1769 = vsel %vm464, %v1734, 0
  %v1772 = vsel %vm464, %v1735, 0
  %v1775 = vsel %vm464, %v1736, 0
  %v1778 = vsel %vm464, %v1737, 0
  %v1781 = vsel %vm464, %v1738, 0
  %v1784 = vsel %vm464, %v1739, 0
  %v1787 = vsel %vm464, %v1740, 0
  %v1790 = vsel %vm464, %v1741, 0
  %v1793 = vsel %vm464, %v1742, 0
  %v1796 = vsel %vm464, %v1743, 0
  %v1799 = vsel %vm464, %v1744, 0
  %v1802 = vsel %vm464, %v1745, 0
  %v1805 = vsel %vm464, %v1746, 0
  %1807 = vmatprep.subr.bf16.mxu0 0
  %1808 = vmatpush1.bf16.msra.mxu0 0
  %1809 = vmatprep.subr.bf16.mxu0 0
  %1810 = vmatpush1.bf16.msra.mxu0 0
  %1811 = vmatprep.subr.bf16.mxu0 0
  %1812 = vmatpush1.bf16.msra.mxu0 0
  %1813 = vmatprep.subr.bf16.mxu0 0
  %1814 = vmatpush1.bf16.msra.mxu0 0
  %1815 = vmatprep.subr.bf16.mxu0 0
  %1816 = vmatpush1.bf16.msra.mxu0 0
  %1817 = vmatprep.subr.bf16.mxu0 0
  %1818 = vmatpush1.bf16.msra.mxu0 0
  %1819 = vmatprep.subr.bf16.mxu0 0
  %1820 = vmatpush1.bf16.msra.mxu0 %v1756
  %1821 = vmatprep.subr.bf16.mxu0 0
  %1822 = vmatpush1.bf16.msra.mxu0 %v1755
  %1823 = vmatprep.subr.bf16.mxu0 0
  %1824 = vmatpush2.bf16.msra.mxu0 0
  %1825 = vmatprep.subr.bf16.mxu0 0
  %1826 = vmatpush2.bf16.msra.mxu0 0
  %1827 = vmatprep.subr.bf16.mxu0 0
  %1828 = vmatpush2.bf16.msra.mxu0 0
  %1829 = vmatprep.subr.bf16.mxu0 0
  %1830 = vmatpush2.bf16.msra.mxu0 0
  %1831 = vmatprep.subr.bf16.mxu0 0
  %1832 = vmatpush2.bf16.msra.mxu0 0
  %1833 = vmatprep.subr.bf16.mxu0 0
  %1834 = vmatpush2.bf16.msra.mxu0 0
  %1835 = vmatprep.subr.bf16.mxu0 0
  %1836 = vmatpush2.bf16.msra.mxu0 0
  %1837 = vmatprep.subr.bf16.mxu0 0
  %1838 = vmatpush2.bf16.msra.mxu0 0
  %1839 = vmatprep.mubr.bf16.mxu0 0
  %1840 = vmatmul.mubr.bf16.gmra.mxu0 %v1760
  %v1841 = vpop.f32.mrf.mxu0
  %v1842 = vadd.f32 0.0, %v1841
  %v1843 = vpop.f32.mrf.mxu0
  %v1844 = vpop.f32.mrf.mxu0
  %v1845 = vadd.f32 0.0, %v1844
  %v1846 = vpop.f32.mrf.mxu0
  %1847 = vmatprep.mubr.bf16.mxu0 0
  %1848 = vmatmul.mubr.bf16.gmra.mxu0 %v1763
  %v1849 = vpop.f32.mrf.mxu0
  %v1850 = vadd.f32 0.0, %v1849
  %v1851 = vpop.f32.mrf.mxu0
  %v1852 = vpop.f32.mrf.mxu0
  %v1853 = vadd.f32 0.0, %v1852
  %v1854 = vpop.f32.mrf.mxu0
  %1855 = vmatprep.mubr.bf16.mxu0 0
  %1856 = vmatmul.mubr.bf16.gmra.mxu0 %v1766
  %v1857 = vpop.f32.mrf.mxu0
  %v1858 = vadd.f32 0.0, %v1857
  %v1859 = vpop.f32.mrf.mxu0
  %v1860 = vpop.f32.mrf.mxu0
  %v1861 = vadd.f32 0.0, %v1860
  %v1862 = vpop.f32.mrf.mxu0
  %1863 = vmatprep.mubr.bf16.mxu0 0
  %1864 = vmatmul.mubr.bf16.gmra.mxu0 %v1769
  %v1865 = vpop.f32.mrf.mxu0
  %v1866 = vadd.f32 0.0, %v1865
  %v1867 = vpop.f32.mrf.mxu0
  %v1868 = vpop.f32.mrf.mxu0
  %v1869 = vadd.f32 0.0, %v1868
  %v1870 = vpop.f32.mrf.mxu0
  %1871 = vmatprep.mubr.bf16.mxu0 0
  %1872 = vmatmul.mubr.bf16.gmra.mxu0 %v1772
  %v1873 = vpop.f32.mrf.mxu0
  %v1874 = vadd.f32 0.0, %v1873
  %v1875 = vpop.f32.mrf.mxu0
  %v1876 = vpop.f32.mrf.mxu0
  %v1877 = vadd.f32 0.0, %v1876
  %v1878 = vpop.f32.mrf.mxu0
  %1879 = vmatprep.mubr.bf16.mxu0 0
  %1880 = vmatmul.mubr.bf16.gmra.mxu0 %v1775
  %v1881 = vpop.f32.mrf.mxu0
  %v1882 = vadd.f32 0.0, %v1881
  %v1883 = vpop.f32.mrf.mxu0
  %v1884 = vpop.f32.mrf.mxu0
  %v1885 = vadd.f32 0.0, %v1884
  %v1886 = vpop.f32.mrf.mxu0
  %1887 = vmatprep.mubr.bf16.mxu0 0
  %1888 = vmatmul.mubr.bf16.gmra.mxu0 %v1778
  %v1889 = vpop.f32.mrf.mxu0
  %v1890 = vadd.f32 0.0, %v1889
  %v1891 = vpop.f32.mrf.mxu0
  %v1892 = vpop.f32.mrf.mxu0
  %v1893 = vadd.f32 0.0, %v1892
  %v1894 = vpop.f32.mrf.mxu0
  %1895 = vmatprep.mubr.bf16.mxu0 0
  %1896 = vmatmul.mubr.bf16.gmra.mxu0 %v1781
  %v1897 = vpop.f32.mrf.mxu0
  %v1898 = vadd.f32 0.0, %v1897
  %v1899 = vpop.f32.mrf.mxu0
  %v1900 = vpop.f32.mrf.mxu0
  %v1901 = vadd.f32 0.0, %v1900
  %v1902 = vpop.f32.mrf.mxu0
  %1903 = vmatprep.mubr.bf16.mxu0 0
  %1904 = vmatmul.mubr.bf16.gmra.mxu0 %v1784
  %v1905 = vpop.f32.mrf.mxu0
  %v1906 = vadd.f32 0.0, %v1905
  %v1907 = vpop.f32.mrf.mxu0
  %v1908 = vpop.f32.mrf.mxu0
  %v1909 = vadd.f32 0.0, %v1908
  %v1910 = vpop.f32.mrf.mxu0
  %1911 = vmatprep.mubr.bf16.mxu0 0
  %1912 = vmatmul.mubr.bf16.gmra.mxu0 %v1787
  %v1913 = vpop.f32.mrf.mxu0
  %v1914 = vadd.f32 0.0, %v1913
  %v1915 = vpop.f32.mrf.mxu0
  %v1916 = vpop.f32.mrf.mxu0
  %v1917 = vadd.f32 0.0, %v1916
  %v1918 = vpop.f32.mrf.mxu0
  %1919 = vmatprep.mubr.bf16.mxu0 0
  %1920 = vmatmul.mubr.bf16.gmra.mxu0 %v1790
  %v1921 = vpop.f32.mrf.mxu0
  %v1922 = vadd.f32 0.0, %v1921
  %v1923 = vpop.f32.mrf.mxu0
  %v1924 = vpop.f32.mrf.mxu0
  %v1925 = vadd.f32 0.0, %v1924
  %v1926 = vpop.f32.mrf.mxu0
  %1927 = vmatprep.mubr.bf16.mxu0 0
  %1928 = vmatmul.mubr.bf16.gmra.mxu0 %v1793
  %v1929 = vpop.f32.mrf.mxu0
  %v1930 = vadd.f32 0.0, %v1929
  %v1931 = vpop.f32.mrf.mxu0
  %v1932 = vpop.f32.mrf.mxu0
  %v1933 = vadd.f32 0.0, %v1932
  %v1934 = vpop.f32.mrf.mxu0
  %1935 = vmatprep.mubr.bf16.mxu0 0
  %1936 = vmatmul.mubr.bf16.gmra.mxu0 %v1796
  %v1937 = vpop.f32.mrf.mxu0
  %v1938 = vadd.f32 0.0, %v1937
  %v1939 = vpop.f32.mrf.mxu0
  %v1940 = vpop.f32.mrf.mxu0
  %v1941 = vadd.f32 0.0, %v1940
  %v1942 = vpop.f32.mrf.mxu0
  %1943 = vmatprep.mubr.bf16.mxu0 0
  %1944 = vmatmul.mubr.bf16.gmra.mxu0 %v1799
  %v1945 = vpop.f32.mrf.mxu0
  %v1946 = vadd.f32 0.0, %v1945
  %v1947 = vpop.f32.mrf.mxu0
  %v1948 = vpop.f32.mrf.mxu0
  %v1949 = vadd.f32 0.0, %v1948
  %v1950 = vpop.f32.mrf.mxu0
  %1951 = vmatprep.mubr.bf16.mxu0 0
  %1952 = vmatmul.mubr.bf16.gmra.mxu0 %v1802
  %v1953 = vpop.f32.mrf.mxu0
  %v1954 = vadd.f32 0.0, %v1953
  %v1955 = vpop.f32.mrf.mxu0
  %v1956 = vpop.f32.mrf.mxu0
  %v1957 = vadd.f32 0.0, %v1956
  %v1958 = vpop.f32.mrf.mxu0
  %1959 = vmatprep.mubr.bf16.mxu0 0
  %1960 = vmatmul.mubr.bf16.gmra.mxu0 %v1805
  %v1961 = vpop.f32.mrf.mxu0
  %v1962 = vadd.f32 0.0, %v1961
  %v1963 = vpop.f32.mrf.mxu0
  %v1964 = vpop.f32.mrf.mxu0
  %v1965 = vadd.f32 0.0, %v1964
  %v1966 = vpop.f32.mrf.mxu0
  %1967 = vdwg.mxu0
  %v1968 = vxor.u32 %v1842, 2147483648
  %v1969 = vxor.u32 %v1845, 2147483648
  %v1970 = vxor.u32 %v1850, 2147483648
  %v1971 = vxor.u32 %v1853, 2147483648
  %v1972 = vxor.u32 %v1858, 2147483648
  %v1973 = vxor.u32 %v1861, 2147483648
  %v1974 = vxor.u32 %v1866, 2147483648
  %v1975 = vxor.u32 %v1869, 2147483648
  %v1976 = vxor.u32 %v1874, 2147483648
  %v1977 = vxor.u32 %v1877, 2147483648
  %v1978 = vxor.u32 %v1882, 2147483648
  %v1979 = vxor.u32 %v1885, 2147483648
  %v1980 = vxor.u32 %v1890, 2147483648
  %v1981 = vxor.u32 %v1893, 2147483648
  %v1982 = vxor.u32 %v1898, 2147483648
  %v1983 = vxor.u32 %v1901, 2147483648
  %v1984 = vxor.u32 %v1906, 2147483648
  %v1985 = vxor.u32 %v1909, 2147483648
  %v1986 = vxor.u32 %v1914, 2147483648
  %v1987 = vxor.u32 %v1917, 2147483648
  %v1988 = vxor.u32 %v1922, 2147483648
  %v1989 = vxor.u32 %v1925, 2147483648
  %v1990 = vxor.u32 %v1930, 2147483648
  %v1991 = vxor.u32 %v1933, 2147483648
  %v1992 = vxor.u32 %v1938, 2147483648
  %v1993 = vxor.u32 %v1941, 2147483648
  %v1994 = vxor.u32 %v1946, 2147483648
  %v1995 = vxor.u32 %v1949, 2147483648
  %v1996 = vxor.u32 %v1954, 2147483648
  %v1997 = vxor.u32 %v1957, 2147483648
  %v1998 = vxor.u32 %v1962, 2147483648
  %v1999 = vxor.u32 %v1965, 2147483648
  %v2000 = vmul.f32 %v1968, 1.442695
  %v2001 = vpow.pop %v2000
  %v2002 = vmul.f32 %v1969, 1.442695
  %v2003 = vpow.pop %v2002
  %v2004 = vmul.f32 %v1970, 1.442695
  %v2005 = vpow.pop %v2004
  %v2006 = vmul.f32 %v1971, 1.442695
  %v2007 = vpow.pop %v2006
  %v2008 = vmul.f32 %v1972, 1.442695
  %v2009 = vpow.pop %v2008
  %v2010 = vmul.f32 %v1973, 1.442695
  %v2011 = vpow.pop %v2010
  %v2012 = vmul.f32 %v1974, 1.442695
  %v2013 = vpow.pop %v2012
  %v2014 = vmul.f32 %v1975, 1.442695
  %v2015 = vpow.pop %v2014
  %v2016 = vmul.f32 %v1976, 1.442695
  %v2017 = vpow.pop %v2016
  %v2018 = vmul.f32 %v1977, 1.442695
  %v2019 = vpow.pop %v2018
  %v2020 = vmul.f32 %v1978, 1.442695
  %v2021 = vpow.pop %v2020
  %v2022 = vmul.f32 %v1979, 1.442695
  %v2023 = vpow.pop %v2022
  %v2024 = vmul.f32 %v1980, 1.442695
  %v2025 = vpow.pop %v2024
  %v2026 = vmul.f32 %v1981, 1.442695
  %v2027 = vpow.pop %v2026
  %v2028 = vmul.f32 %v1982, 1.442695
  %v2029 = vpow.pop %v2028
  %v2030 = vmul.f32 %v1983, 1.442695
  %v2031 = vpow.pop %v2030
  %v2032 = vmul.f32 %v1984, 1.442695
  %v2033 = vpow.pop %v2032
  %v2034 = vmul.f32 %v1985, 1.442695
  %v2035 = vpow.pop %v2034
  %v2036 = vmul.f32 %v1986, 1.442695
  %v2037 = vpow.pop %v2036
  %v2038 = vmul.f32 %v1987, 1.442695
  %v2039 = vpow.pop %v2038
  %v2040 = vmul.f32 %v1988, 1.442695
  %v2041 = vpow.pop %v2040
  %v2042 = vmul.f32 %v1989, 1.442695
  %v2043 = vpow.pop %v2042
  %v2044 = vmul.f32 %v1990, 1.442695
  %v2045 = vpow.pop %v2044
  %v2046 = vmul.f32 %v1991, 1.442695
  %v2047 = vpow.pop %v2046
  %v2048 = vmul.f32 %v1992, 1.442695
  %v2049 = vpow.pop %v2048
  %v2050 = vmul.f32 %v1993, 1.442695
  %v2051 = vpow.pop %v2050
  %v2052 = vmul.f32 %v1994, 1.442695
  %v2053 = vpow.pop %v2052
  %v2054 = vmul.f32 %v1995, 1.442695
  %v2055 = vpow.pop %v2054
  %v2056 = vmul.f32 %v1996, 1.442695
  %v2057 = vpow.pop %v2056
  %v2058 = vmul.f32 %v1997, 1.442695
  %v2059 = vpow.pop %v2058
  %v2060 = vmul.f32 %v1998, 1.442695
  %v2061 = vpow.pop %v2060
  %v2062 = vmul.f32 %v1999, 1.442695
  %v2063 = vpow.pop %v2062
  %v2064 = vadd.f32 %v2001, 1.0
  %v2065 = vadd.f32 %v2003, 1.0
  %v2066 = vadd.f32 %v2005, 1.0
  %v2067 = vadd.f32 %v2007, 1.0
  %v2068 = vadd.f32 %v2009, 1.0
  %v2069 = vadd.f32 %v2011, 1.0
  %v2070 = vadd.f32 %v2013, 1.0
  %v2071 = vadd.f32 %v2015, 1.0
  %v2072 = vadd.f32 %v2017, 1.0
  %v2073 = vadd.f32 %v2019, 1.0
  %v2074 = vadd.f32 %v2021, 1.0
  %v2075 = vadd.f32 %v2023, 1.0
  %v2076 = vadd.f32 %v2025, 1.0
  %v2077 = vadd.f32 %v2027, 1.0
  %v2078 = vadd.f32 %v2029, 1.0
  %v2079 = vadd.f32 %v2031, 1.0
  %v2080 = vadd.f32 %v2033, 1.0
  %v2081 = vadd.f32 %v2035, 1.0
  %v2082 = vadd.f32 %v2037, 1.0
  %v2083 = vadd.f32 %v2039, 1.0
  %v2084 = vadd.f32 %v2041, 1.0
  %v2085 = vadd.f32 %v2043, 1.0
  %v2086 = vadd.f32 %v2045, 1.0
  %v2087 = vadd.f32 %v2047, 1.0
  %v2088 = vadd.f32 %v2049, 1.0
  %v2089 = vadd.f32 %v2051, 1.0
  %v2090 = vadd.f32 %v2053, 1.0
  %v2091 = vadd.f32 %v2055, 1.0
  %v2092 = vadd.f32 %v2057, 1.0
  %v2093 = vadd.f32 %v2059, 1.0
  %v2094 = vadd.f32 %v2061, 1.0
  %v2095 = vadd.f32 %v2063, 1.0
  %v2096 = vrcp.pop %v2064
  %v2097 = vmul.f32 1.0, %v2096
  %v2098 = vrcp.pop %v2065
  %v2099 = vmul.f32 1.0, %v2098
  %v2100 = vrcp.pop %v2066
  %v2101 = vmul.f32 1.0, %v2100
  %v2102 = vrcp.pop %v2067
  %v2103 = vmul.f32 1.0, %v2102
  %v2104 = vrcp.pop %v2068
  %v2105 = vmul.f32 1.0, %v2104
  %v2106 = vrcp.pop %v2069
  %v2107 = vmul.f32 1.0, %v2106
  %v2108 = vrcp.pop %v2070
  %v2109 = vmul.f32 1.0, %v2108
  %v2110 = vrcp.pop %v2071
  %v2111 = vmul.f32 1.0, %v2110
  %v2112 = vrcp.pop %v2072
  %v2113 = vmul.f32 1.0, %v2112
  %v2114 = vrcp.pop %v2073
  %v2115 = vmul.f32 1.0, %v2114
  %v2116 = vrcp.pop %v2074
  %v2117 = vmul.f32 1.0, %v2116
  %v2118 = vrcp.pop %v2075
  %v2119 = vmul.f32 1.0, %v2118
  %v2120 = vrcp.pop %v2076
  %v2121 = vmul.f32 1.0, %v2120
  %v2122 = vrcp.pop %v2077
  %v2123 = vmul.f32 1.0, %v2122
  %v2124 = vrcp.pop %v2078
  %v2125 = vmul.f32 1.0, %v2124
  %v2126 = vrcp.pop %v2079
  %v2127 = vmul.f32 1.0, %v2126
  %v2128 = vrcp.pop %v2080
  %v2129 = vmul.f32 1.0, %v2128
  %v2130 = vrcp.pop %v2081
  %v2131 = vmul.f32 1.0, %v2130
  %v2132 = vrcp.pop %v2082
  %v2133 = vmul.f32 1.0, %v2132
  %v2134 = vrcp.pop %v2083
  %v2135 = vmul.f32 1.0, %v2134
  %v2136 = vrcp.pop %v2084
  %v2137 = vmul.f32 1.0, %v2136
  %v2138 = vrcp.pop %v2085
  %v2139 = vmul.f32 1.0, %v2138
  %v2140 = vrcp.pop %v2086
  %v2141 = vmul.f32 1.0, %v2140
  %v2142 = vrcp.pop %v2087
  %v2143 = vmul.f32 1.0, %v2142
  %v2144 = vrcp.pop %v2088
  %v2145 = vmul.f32 1.0, %v2144
  %v2146 = vrcp.pop %v2089
  %v2147 = vmul.f32 1.0, %v2146
  %v2148 = vrcp.pop %v2090
  %v2149 = vmul.f32 1.0, %v2148
  %v2150 = vrcp.pop %v2091
  %v2151 = vmul.f32 1.0, %v2150
  %v2152 = vrcp.pop %v2092
  %v2153 = vmul.f32 1.0, %v2152
  %v2154 = vrcp.pop %v2093
  %v2155 = vmul.f32 1.0, %v2154
  %v2156 = vrcp.pop %v2094
  %v2157 = vmul.f32 1.0, %v2156
  %v2158 = vrcp.pop %v2095
  %v2159 = vmul.f32 1.0, %v2158
  %v2160 = vmul.f32 %v1842, %v2097
  %v2161 = vmul.f32 %v1845, %v2099
  %v2162 = vmul.f32 %v1850, %v2101
  %v2163 = vmul.f32 %v1853, %v2103
  %v2164 = vmul.f32 %v1858, %v2105
  %v2165 = vmul.f32 %v1861, %v2107
  %v2166 = vmul.f32 %v1866, %v2109
  %v2167 = vmul.f32 %v1869, %v2111
  %v2168 = vmul.f32 %v1874, %v2113
  %v2169 = vmul.f32 %v1877, %v2115
  %v2170 = vmul.f32 %v1882, %v2117
  %v2171 = vmul.f32 %v1885, %v2119
  %v2172 = vmul.f32 %v1890, %v2121
  %v2173 = vmul.f32 %v1893, %v2123
  %v2174 = vmul.f32 %v1898, %v2125
  %v2175 = vmul.f32 %v1901, %v2127
  %v2176 = vmul.f32 %v1906, %v2129
  %v2177 = vmul.f32 %v1909, %v2131
  %v2178 = vmul.f32 %v1914, %v2133
  %v2179 = vmul.f32 %v1917, %v2135
  %v2180 = vmul.f32 %v1922, %v2137
  %v2181 = vmul.f32 %v1925, %v2139
  %v2182 = vmul.f32 %v1930, %v2141
  %v2183 = vmul.f32 %v1933, %v2143
  %v2184 = vmul.f32 %v1938, %v2145
  %v2185 = vmul.f32 %v1941, %v2147
  %v2186 = vmul.f32 %v1946, %v2149
  %v2187 = vmul.f32 %v1949, %v2151
  %v2188 = vmul.f32 %v1954, %v2153
  %v2189 = vmul.f32 %v1957, %v2155
  %v2190 = vmul.f32 %v1962, %v2157
  %v2191 = vmul.f32 %v1965, %v2159
  %2224 = vrot.lane.b32.xlu0 %v1314, 64
  %v2225 = vpop.permute.xlu0 %2224
  %2226 = vrot.lane.b32.xlu0 %v1315, 64
  %v2227 = vpop.permute.xlu0 %2226
  %2228 = vrot.lane.b32.xlu0 %v1316, 64
  %v2229 = vpop.permute.xlu0 %2228
  %2230 = vrot.lane.b32.xlu0 %v1317, 64
  %v2231 = vpop.permute.xlu0 %2230
  %2232 = vrot.lane.b32.xlu0 %v1318, 64
  %v2233 = vpop.permute.xlu0 %2232
  %2234 = vrot.lane.b32.xlu0 %v1319, 64
  %v2235 = vpop.permute.xlu0 %2234
  %2236 = vrot.lane.b32.xlu0 %v1320, 64
  %v2237 = vpop.permute.xlu0 %2236
  %2238 = vrot.lane.b32.xlu0 %v1321, 64
  %v2239 = vpop.permute.xlu0 %2238
  %2240 = vrot.lane.b32.xlu0 %v1322, 64
  %v2241 = vpop.permute.xlu0 %2240
  %2242 = vrot.lane.b32.xlu0 %v1323, 64
  %v2243 = vpop.permute.xlu0 %2242
  %2244 = vrot.lane.b32.xlu0 %v1324, 64
  %v2245 = vpop.permute.xlu0 %2244
  %2246 = vrot.lane.b32.xlu0 %v1325, 64
  %v2247 = vpop.permute.xlu0 %2246
  %2248 = vrot.lane.b32.xlu0 %v1326, 64
  %v2249 = vpop.permute.xlu0 %2248
  %2250 = vrot.lane.b32.xlu0 %v1327, 64
  %v2251 = vpop.permute.xlu0 %2250
  %2252 = vrot.lane.b32.xlu0 %v1328, 64
  %v2253 = vpop.permute.xlu0 %2252
  %2254 = vrot.lane.b32.xlu0 %v1329, 64
  %v2255 = vpop.permute.xlu0 %2254
  %2256 = vrot.lane.b32.xlu0 %v1330, 64
  %v2257 = vpop.permute.xlu0 %2256
  %2258 = vrot.lane.b32.xlu0 %v1331, 64
  %v2259 = vpop.permute.xlu0 %2258
  %2260 = vrot.lane.b32.xlu0 %v1332, 64
  %v2261 = vpop.permute.xlu0 %2260
  %2262 = vrot.lane.b32.xlu0 %v1333, 64
  %v2263 = vpop.permute.xlu0 %2262
  %2264 = vrot.lane.b32.xlu0 %v1334, 64
  %v2265 = vpop.permute.xlu0 %2264
  %2266 = vrot.lane.b32.xlu0 %v1335, 64
  %v2267 = vpop.permute.xlu0 %2266
  %2268 = vrot.lane.b32.xlu0 %v1336, 64
  %v2269 = vpop.permute.xlu0 %2268
  %2270 = vrot.lane.b32.xlu0 %v1337, 64
  %v2271 = vpop.permute.xlu0 %2270
  %2272 = vrot.lane.b32.xlu0 %v1338, 64
  %v2273 = vpop.permute.xlu0 %2272
  %2274 = vrot.lane.b32.xlu0 %v1339, 64
  %v2275 = vpop.permute.xlu0 %2274
  %2276 = vrot.lane.b32.xlu0 %v1340, 64
  %v2277 = vpop.permute.xlu0 %2276
  %2278 = vrot.lane.b32.xlu0 %v1341, 64
  %v2279 = vpop.permute.xlu0 %2278
  %2280 = vrot.lane.b32.xlu0 %v1342, 64
  %v2281 = vpop.permute.xlu0 %2280
  %2282 = vrot.lane.b32.xlu0 %v1343, 64
  %v2283 = vpop.permute.xlu0 %2282
  %2284 = vrot.lane.b32.xlu0 %v1344, 64
  %v2285 = vpop.permute.xlu0 %2284
  %2286 = vrot.lane.b32.xlu0 %v1345, 64
  %v2287 = vpop.permute.xlu0 %2286
  %v2320 = vmul.f32 %v1477, %v2225
  %v2321 = vmul.f32 %v1478, %v2227
  %v2322 = vmul.f32 %v1477, %v2229
  %v2323 = vmul.f32 %v1478, %v2231
  %v2324 = vmul.f32 %v1477, %v2233
  %v2325 = vmul.f32 %v1478, %v2235
  %v2326 = vmul.f32 %v1477, %v2237
  %v2327 = vmul.f32 %v1478, %v2239
  %v2328 = vmul.f32 %v1477, %v2241
  %v2329 = vmul.f32 %v1478, %v2243
  %v2330 = vmul.f32 %v1477, %v2245
  %v2331 = vmul.f32 %v1478, %v2247
  %v2332 = vmul.f32 %v1477, %v2249
  %v2333 = vmul.f32 %v1478, %v2251
  %v2334 = vmul.f32 %v1477, %v2253
  %v2335 = vmul.f32 %v1478, %v2255
  %v2336 = vmul.f32 %v1477, %v2257
  %v2337 = vmul.f32 %v1478, %v2259
  %v2338 = vmul.f32 %v1477, %v2261
  %v2339 = vmul.f32 %v1478, %v2263
  %v2340 = vmul.f32 %v1477, %v2265
  %v2341 = vmul.f32 %v1478, %v2267
  %v2342 = vmul.f32 %v1477, %v2269
  %v2343 = vmul.f32 %v1478, %v2271
  %v2344 = vmul.f32 %v1477, %v2273
  %v2345 = vmul.f32 %v1478, %v2275
  %v2346 = vmul.f32 %v1477, %v2277
  %v2347 = vmul.f32 %v1478, %v2279
  %v2348 = vmul.f32 %v1477, %v2281
  %v2349 = vmul.f32 %v1478, %v2283
  %v2350 = vmul.f32 %v1477, %v2285
  %v2351 = vmul.f32 %v1478, %v2287
  %2384 = vrot.lane.b32.xlu0 %v2160, 64
  %v2385 = vpop.permute.xlu0 %2384
  %2386 = vrot.lane.b32.xlu0 %v2161, 64
  %v2387 = vpop.permute.xlu0 %2386
  %2388 = vrot.lane.b32.xlu0 %v2162, 64
  %v2389 = vpop.permute.xlu0 %2388
  %2390 = vrot.lane.b32.xlu0 %v2163, 64
  %v2391 = vpop.permute.xlu0 %2390
  %2392 = vrot.lane.b32.xlu0 %v2164, 64
  %v2393 = vpop.permute.xlu0 %2392
  %2394 = vrot.lane.b32.xlu0 %v2165, 64
  %v2395 = vpop.permute.xlu0 %2394
  %2396 = vrot.lane.b32.xlu0 %v2166, 64
  %v2397 = vpop.permute.xlu0 %2396
  %2398 = vrot.lane.b32.xlu0 %v2167, 64
  %v2399 = vpop.permute.xlu0 %2398
  %2400 = vrot.lane.b32.xlu0 %v2168, 64
  %v2401 = vpop.permute.xlu0 %2400
  %2402 = vrot.lane.b32.xlu0 %v2169, 64
  %v2403 = vpop.permute.xlu0 %2402
  %2404 = vrot.lane.b32.xlu0 %v2170, 64
  %v2405 = vpop.permute.xlu0 %2404
  %2406 = vrot.lane.b32.xlu0 %v2171, 64
  %v2407 = vpop.permute.xlu0 %2406
  %2408 = vrot.lane.b32.xlu0 %v2172, 64
  %v2409 = vpop.permute.xlu0 %2408
  %2410 = vrot.lane.b32.xlu0 %v2173, 64
  %v2411 = vpop.permute.xlu0 %2410
  %2412 = vrot.lane.b32.xlu0 %v2174, 64
  %v2413 = vpop.permute.xlu0 %2412
  %2414 = vrot.lane.b32.xlu0 %v2175, 64
  %v2415 = vpop.permute.xlu0 %2414
  %2416 = vrot.lane.b32.xlu0 %v2176, 64
  %v2417 = vpop.permute.xlu0 %2416
  %2418 = vrot.lane.b32.xlu0 %v2177, 64
  %v2419 = vpop.permute.xlu0 %2418
  %2420 = vrot.lane.b32.xlu0 %v2178, 64
  %v2421 = vpop.permute.xlu0 %2420
  %2422 = vrot.lane.b32.xlu0 %v2179, 64
  %v2423 = vpop.permute.xlu0 %2422
  %2424 = vrot.lane.b32.xlu0 %v2180, 64
  %v2425 = vpop.permute.xlu0 %2424
  %2426 = vrot.lane.b32.xlu0 %v2181, 64
  %v2427 = vpop.permute.xlu0 %2426
  %2428 = vrot.lane.b32.xlu0 %v2182, 64
  %v2429 = vpop.permute.xlu0 %2428
  %2430 = vrot.lane.b32.xlu0 %v2183, 64
  %v2431 = vpop.permute.xlu0 %2430
  %2432 = vrot.lane.b32.xlu0 %v2184, 64
  %v2433 = vpop.permute.xlu0 %2432
  %2434 = vrot.lane.b32.xlu0 %v2185, 64
  %v2435 = vpop.permute.xlu0 %2434
  %2436 = vrot.lane.b32.xlu0 %v2186, 64
  %v2437 = vpop.permute.xlu0 %2436
  %2438 = vrot.lane.b32.xlu0 %v2187, 64
  %v2439 = vpop.permute.xlu0 %2438
  %2440 = vrot.lane.b32.xlu0 %v2188, 64
  %v2441 = vpop.permute.xlu0 %2440
  %2442 = vrot.lane.b32.xlu0 %v2189, 64
  %v2443 = vpop.permute.xlu0 %2442
  %2444 = vrot.lane.b32.xlu0 %v2190, 64
  %v2445 = vpop.permute.xlu0 %2444
  %2446 = vrot.lane.b32.xlu0 %v2191, 64
  %v2447 = vpop.permute.xlu0 %2446
  %v2480 = vmul.f32 %v2320, %v2385
  %v2481 = vmul.f32 %v2321, %v2387
  %v2482 = vmul.f32 %v2322, %v2389
  %v2483 = vmul.f32 %v2323, %v2391
  %v2484 = vmul.f32 %v2324, %v2393
  %v2485 = vmul.f32 %v2325, %v2395
  %v2486 = vmul.f32 %v2326, %v2397
  %v2487 = vmul.f32 %v2327, %v2399
  %v2488 = vmul.f32 %v2328, %v2401
  %v2489 = vmul.f32 %v2329, %v2403
  %v2490 = vmul.f32 %v2330, %v2405
  %v2491 = vmul.f32 %v2331, %v2407
  %v2492 = vmul.f32 %v2332, %v2409
  %v2493 = vmul.f32 %v2333, %v2411
  %v2494 = vmul.f32 %v2334, %v2413
  %v2495 = vmul.f32 %v2335, %v2415
  %v2496 = vmul.f32 %v2336, %v2417
  %v2497 = vmul.f32 %v2337, %v2419
  %v2498 = vmul.f32 %v2338, %v2421
  %v2499 = vmul.f32 %v2339, %v2423
  %v2500 = vmul.f32 %v2340, %v2425
  %v2501 = vmul.f32 %v2341, %v2427
  %v2502 = vmul.f32 %v2342, %v2429
  %v2503 = vmul.f32 %v2343, %v2431
  %v2504 = vmul.f32 %v2344, %v2433
  %v2505 = vmul.f32 %v2345, %v2435
  %v2506 = vmul.f32 %v2346, %v2437
  %v2507 = vmul.f32 %v2347, %v2439
  %v2508 = vmul.f32 %v2348, %v2441
  %v2509 = vmul.f32 %v2349, %v2443
  %v2510 = vmul.f32 %v2350, %v2445
  %v2511 = vmul.f32 %v2351, %v2447
  %vm2512 = vcmask 785920
  %v2513 = vsel %vm2512, %v2480, 0.0
  %v2514 = vsel %vm2512, %v2481, 0.0
  %v2515 = vadd.f32 %v2513, %v2514
  %v2516 = vrot.slane %v2515, 4
  %v2517 = vadd.f32 %v2515, %v2516
  %v2518 = vrot.slane %v2517, 2
  %v2519 = vadd.f32 %v2517, %v2518
  %v2520 = vrot.slane %v2519, 1
  %v2521 = vadd.f32 %v2519, %v2520
  %v2522 = vsel %vm2512, %v2482, 0.0
  %v2523 = vsel %vm2512, %v2483, 0.0
  %v2524 = vadd.f32 %v2522, %v2523
  %v2525 = vrot.slane %v2524, 4
  %v2526 = vadd.f32 %v2524, %v2525
  %v2527 = vrot.slane %v2526, 2
  %v2528 = vadd.f32 %v2526, %v2527
  %v2529 = vrot.slane %v2528, 1
  %v2530 = vadd.f32 %v2528, %v2529
  %v2531 = vsel %vm2512, %v2484, 0.0
  %v2532 = vsel %vm2512, %v2485, 0.0
  %v2533 = vadd.f32 %v2531, %v2532
  %v2534 = vrot.slane %v2533, 4
  %v2535 = vadd.f32 %v2533, %v2534
  %v2536 = vrot.slane %v2535, 2
  %v2537 = vadd.f32 %v2535, %v2536
  %v2538 = vrot.slane %v2537, 1
  %v2539 = vadd.f32 %v2537, %v2538
  %v2540 = vsel %vm2512, %v2486, 0.0
  %v2541 = vsel %vm2512, %v2487, 0.0
  %v2542 = vadd.f32 %v2540, %v2541
  %v2543 = vrot.slane %v2542, 4
  %v2544 = vadd.f32 %v2542, %v2543
  %v2545 = vrot.slane %v2544, 2
  %v2546 = vadd.f32 %v2544, %v2545
  %v2547 = vrot.slane %v2546, 1
  %v2548 = vadd.f32 %v2546, %v2547
  %v2549 = vsel %vm2512, %v2488, 0.0
  %v2550 = vsel %vm2512, %v2489, 0.0
  %v2551 = vadd.f32 %v2549, %v2550
  %v2552 = vrot.slane %v2551, 4
  %v2553 = vadd.f32 %v2551, %v2552
  %v2554 = vrot.slane %v2553, 2
  %v2555 = vadd.f32 %v2553, %v2554
  %v2556 = vrot.slane %v2555, 1
  %v2557 = vadd.f32 %v2555, %v2556
  %v2558 = vsel %vm2512, %v2490, 0.0
  %v2559 = vsel %vm2512, %v2491, 0.0
  %v2560 = vadd.f32 %v2558, %v2559
  %v2561 = vrot.slane %v2560, 4
  %v2562 = vadd.f32 %v2560, %v2561
  %v2563 = vrot.slane %v2562, 2
  %v2564 = vadd.f32 %v2562, %v2563
  %v2565 = vrot.slane %v2564, 1
  %v2566 = vadd.f32 %v2564, %v2565
  %v2567 = vsel %vm2512, %v2492, 0.0
  %v2568 = vsel %vm2512, %v2493, 0.0
  %v2569 = vadd.f32 %v2567, %v2568
  %v2570 = vrot.slane %v2569, 4
  %v2571 = vadd.f32 %v2569, %v2570
  %v2572 = vrot.slane %v2571, 2
  %v2573 = vadd.f32 %v2571, %v2572
  %v2574 = vrot.slane %v2573, 1
  %v2575 = vadd.f32 %v2573, %v2574
  %v2576 = vsel %vm2512, %v2494, 0.0
  %v2577 = vsel %vm2512, %v2495, 0.0
  %v2578 = vadd.f32 %v2576, %v2577
  %v2579 = vrot.slane %v2578, 4
  %v2580 = vadd.f32 %v2578, %v2579
  %v2581 = vrot.slane %v2580, 2
  %v2582 = vadd.f32 %v2580, %v2581
  %v2583 = vrot.slane %v2582, 1
  %v2584 = vadd.f32 %v2582, %v2583
  %v2585 = vsel %vm2512, %v2496, 0.0
  %v2586 = vsel %vm2512, %v2497, 0.0
  %v2587 = vadd.f32 %v2585, %v2586
  %v2588 = vrot.slane %v2587, 4
  %v2589 = vadd.f32 %v2587, %v2588
  %v2590 = vrot.slane %v2589, 2
  %v2591 = vadd.f32 %v2589, %v2590
  %v2592 = vrot.slane %v2591, 1
  %v2593 = vadd.f32 %v2591, %v2592
  %v2594 = vsel %vm2512, %v2498, 0.0
  %v2595 = vsel %vm2512, %v2499, 0.0
  %v2596 = vadd.f32 %v2594, %v2595
  %v2597 = vrot.slane %v2596, 4
  %v2598 = vadd.f32 %v2596, %v2597
  %v2599 = vrot.slane %v2598, 2
  %v2600 = vadd.f32 %v2598, %v2599
  %v2601 = vrot.slane %v2600, 1
  %v2602 = vadd.f32 %v2600, %v2601
  %v2603 = vsel %vm2512, %v2500, 0.0
  %v2604 = vsel %vm2512, %v2501, 0.0
  %v2605 = vadd.f32 %v2603, %v2604
  %v2606 = vrot.slane %v2605, 4
  %v2607 = vadd.f32 %v2605, %v2606
  %v2608 = vrot.slane %v2607, 2
  %v2609 = vadd.f32 %v2607, %v2608
  %v2610 = vrot.slane %v2609, 1
  %v2611 = vadd.f32 %v2609, %v2610
  %v2612 = vsel %vm2512, %v2502, 0.0
  %v2613 = vsel %vm2512, %v2503, 0.0
  %v2614 = vadd.f32 %v2612, %v2613
  %v2615 = vrot.slane %v2614, 4
  %v2616 = vadd.f32 %v2614, %v2615
  %v2617 = vrot.slane %v2616, 2
  %v2618 = vadd.f32 %v2616, %v2617
  %v2619 = vrot.slane %v2618, 1
  %v2620 = vadd.f32 %v2618, %v2619
  %v2621 = vsel %vm2512, %v2504, 0.0
  %v2622 = vsel %vm2512, %v2505, 0.0
  %v2623 = vadd.f32 %v2621, %v2622
  %v2624 = vrot.slane %v2623, 4
  %v2625 = vadd.f32 %v2623, %v2624
  %v2626 = vrot.slane %v2625, 2
  %v2627 = vadd.f32 %v2625, %v2626
  %v2628 = vrot.slane %v2627, 1
  %v2629 = vadd.f32 %v2627, %v2628
  %v2630 = vsel %vm2512, %v2506, 0.0
  %v2631 = vsel %vm2512, %v2507, 0.0
  %v2632 = vadd.f32 %v2630, %v2631
  %v2633 = vrot.slane %v2632, 4
  %v2634 = vadd.f32 %v2632, %v2633
  %v2635 = vrot.slane %v2634, 2
  %v2636 = vadd.f32 %v2634, %v2635
  %v2637 = vrot.slane %v2636, 1
  %v2638 = vadd.f32 %v2636, %v2637
  %v2639 = vsel %vm2512, %v2508, 0.0
  %v2640 = vsel %vm2512, %v2509, 0.0
  %v2641 = vadd.f32 %v2639, %v2640
  %v2642 = vrot.slane %v2641, 4
  %v2643 = vadd.f32 %v2641, %v2642
  %v2644 = vrot.slane %v2643, 2
  %v2645 = vadd.f32 %v2643, %v2644
  %v2646 = vrot.slane %v2645, 1
  %v2647 = vadd.f32 %v2645, %v2646
  %v2648 = vsel %vm2512, %v2510, 0.0
  %v2649 = vsel %vm2512, %v2511, 0.0
  %v2650 = vadd.f32 %v2648, %v2649
  %v2651 = vrot.slane %v2650, 4
  %v2652 = vadd.f32 %v2650, %v2651
  %v2653 = vrot.slane %v2652, 2
  %v2654 = vadd.f32 %v2652, %v2653
  %v2655 = vrot.slane %v2654, 1
  %v2656 = vadd.f32 %v2654, %v2655
  %v2657 = vpack.c.bf16 %v2521, %v2521
  %v2658 = vpack.c.bf16 %v2530, %v2530
  %v2659 = vpack.c.bf16 %v2539, %v2539
  %v2660 = vpack.c.bf16 %v2548, %v2548
  %v2661 = vpack.c.bf16 %v2557, %v2557
  %v2662 = vpack.c.bf16 %v2566, %v2566
  %v2663 = vpack.c.bf16 %v2575, %v2575
  %v2664 = vpack.c.bf16 %v2584, %v2584
  %v2665 = vpack.c.bf16 %v2593, %v2593
  %v2666 = vpack.c.bf16 %v2602, %v2602
  %v2667 = vpack.c.bf16 %v2611, %v2611
  %v2668 = vpack.c.bf16 %v2620, %v2620
  %v2669 = vpack.c.bf16 %v2629, %v2629
  %v2670 = vpack.c.bf16 %v2638, %v2638
  %v2671 = vpack.c.bf16 %v2647, %v2647
  %v2672 = vpack.c.bf16 %v2656, %v2656
  %v2673 = vlaneseq
  %v2674 = vshrl.u32 %v2673, 7
  %v2675 = vsub.s32 3, %v2674
  %v2676 = vrot.slane %v1356, %v2675
  %v2693 = vunpack.c.l.b16 %v2657
  %v2694 = vunpack.c.l.b16 %v2658
  %v2695 = vunpack.c.l.b16 %v2659
  %v2696 = vunpack.c.l.b16 %v2660
  %v2697 = vunpack.c.l.b16 %v2661
  %v2698 = vunpack.c.l.b16 %v2662
  %v2699 = vunpack.c.l.b16 %v2663
  %v2700 = vunpack.c.l.b16 %v2664
  %v2701 = vunpack.c.l.b16 %v2665
  %v2702 = vunpack.c.l.b16 %v2666
  %v2703 = vunpack.c.l.b16 %v2667
  %v2704 = vunpack.c.l.b16 %v2668
  %v2705 = vunpack.c.l.b16 %v2669
  %v2706 = vunpack.c.l.b16 %v2670
  %v2707 = vunpack.c.l.b16 %v2671
  %v2708 = vunpack.c.l.b16 %v2672
  %vm2709 = vcmask 1041409
  %v2710 = vsel %vm2709, %v2694, %v2693
  %vm2711 = vcmask 1042434
  %v2712 = vsel %vm2711, %v2695, %v2710
  %vm2713 = vcmask 1043459
  %v2714 = vsel %vm2713, %v2696, %v2712
  %vm2715 = vcmask 1044484
  %v2716 = vsel %vm2715, %v2697, %v2714
  %vm2717 = vcmask 1045509
  %v2718 = vsel %vm2717, %v2698, %v2716
  %vm2719 = vcmask 1046534
  %v2720 = vsel %vm2719, %v2699, %v2718
  %vm2721 = vcmask 1047559
  %v2722 = vsel %vm2721, %v2700, %v2720
  %v2723 = vsel %vm2709, %v2702, %v2701
  %v2724 = vsel %vm2711, %v2703, %v2723
  %v2725 = vsel %vm2713, %v2704, %v2724
  %v2726 = vsel %vm2715, %v2705, %v2725
  %v2727 = vsel %vm2717, %v2706, %v2726
  %v2728 = vsel %vm2719, %v2707, %v2727
  %v2729 = vsel %vm2721, %v2708, %v2728
  %v2730 = vpack.c.b16 %v2729, %v2722
  %2731 = vrot.lane.b32.xlu0 %v2730, 64
  %v2732 = vpop.permute.xlu0 %2731
  %v2737 = vunpack.c.l.b16 %v1352
  %v2738 = vunpack.c.l.b16 %v1353
  %v2739 = vunpack.c.l.b16 %v1354
  %v2740 = vunpack.c.l.b16 %v1355
  %v2741 = vpack.c.b16 %v2738, %v2737
  %v2742 = vpack.c.b16 %v2740, %v2739
  %v2746 = vsel %vm464, %v2732, 0
  %2748 = vmatprep.subr.bf16.mxu0 0
  %2749 = vmatpush1.bf16.msra.mxu0 0
  %2750 = vmatprep.subr.bf16.mxu0 0
  %2751 = vmatpush1.bf16.msra.mxu0 0
  %2752 = vmatprep.subr.bf16.mxu0 0
  %2753 = vmatpush1.bf16.msra.mxu0 0
  %2754 = vmatprep.subr.bf16.mxu0 0
  %2755 = vmatpush1.bf16.msra.mxu0 0
  %2756 = vmatprep.subr.bf16.mxu0 0
  %2757 = vmatpush1.bf16.msra.mxu0 0
  %2758 = vmatprep.subr.bf16.mxu0 0
  %2759 = vmatpush1.bf16.msra.mxu0 0
  %2760 = vmatprep.subr.bf16.mxu0 0
  %2761 = vmatpush1.bf16.msra.mxu0 %v2742
  %2762 = vmatprep.subr.bf16.mxu0 0
  %2763 = vmatpush1.bf16.msra.mxu0 %v2741
  %2764 = vmatprep.subr.bf16.mxu0 0
  %2765 = vmatpush2.bf16.msra.mxu0 0
  %2766 = vmatprep.subr.bf16.mxu0 0
  %2767 = vmatpush2.bf16.msra.mxu0 0
  %2768 = vmatprep.subr.bf16.mxu0 0
  %2769 = vmatpush2.bf16.msra.mxu0 0
  %2770 = vmatprep.subr.bf16.mxu0 0
  %2771 = vmatpush2.bf16.msra.mxu0 0
  %2772 = vmatprep.subr.bf16.mxu0 0
  %2773 = vmatpush2.bf16.msra.mxu0 0
  %2774 = vmatprep.subr.bf16.mxu0 0
  %2775 = vmatpush2.bf16.msra.mxu0 0
  %2776 = vmatprep.subr.bf16.mxu0 0
  %2777 = vmatpush2.bf16.msra.mxu0 0
  %2778 = vmatprep.subr.bf16.mxu0 0
  %2779 = vmatpush2.bf16.msra.mxu0 0
  %2780 = vmatprep.mubr.bf16.mxu0 0
  %2781 = vmatmul.mubr.bf16.gmra.mxu0 %v2746
  %v2782 = vpop.f32.mrf.mxu0
  %v2783 = vadd.f32 %v2676, %v2782
  %v2784 = vpop.f32.mrf.mxu0
  %v2785 = vpop.f32.mrf.mxu0
  %v2786 = vadd.f32 %v2676, %v2785
  %v2787 = vpop.f32.mrf.mxu0
  %2788 = vdwg.mxu0
  %v2789 = vadd.f32 %v1346, %v2783
  %v2790 = vadd.f32 %v1347, %v2786
  %s2791 = scalar_lea.vmem %s6, 16
  %v2792 = vld [vmem:[%s2791] sm:$0xf]
  %v2793 = vld [vmem:[%s2791 + $0x4] sm:$0xf]
  %v2794 = vld [vmem:[%s2791 + $0x8] sm:$0xf]
  %v2795 = vld [vmem:[%s2791 + $0xc] sm:$0xf]
  %s2796 = scalar_lea.vmem %s7, 16
  %v2797 = vld [vmem:[%s2796] sm:$0xf]
  %v2798 = vld [vmem:[%s2796 + $0x4] sm:$0xf]
  %v2799 = vld [vmem:[%s2796 + $0x8] sm:$0xf]
  %v2800 = vld [vmem:[%s2796 + $0xc] sm:$0xf]
  %s2801 = scalar_lea.vmem %s10, 8
  %v2802 = vld [vmem:[%s2801] sm:$0xff]
  %v2803 = vsel %vm464, %v2789, 0.0
  %2804 = vadd.xlane.f32.xlu0 %v2803
  %v2805 = vpop.xlane.xlu0 %2804
  %v2806 = vsel %vm464, %v2790, 0.0
  %2807 = vadd.xlane.f32.xlu0 %v2806
  %v2808 = vpop.xlane.xlu0 %2807
  %v2809 = vmul.f32 %v2805, %v1363
  %v2810 = vmul.f32 %v2808, %v1363
  %v2811 = vsub.f32 %v2789, %v2809
  %v2812 = vsub.f32 %v2790, %v2810
  %v2813 = vmul.f32 %v2811, %v2811
  %v2814 = vmul.f32 %v2812, %v2812
  %v2815 = vsel %vm464, %v2813, 0.0
  %2816 = vadd.xlane.f32.xlu0 %v2815
  %v2817 = vpop.xlane.xlu0 %2816
  %v2818 = vsel %vm464, %v2814, 0.0
  %2819 = vadd.xlane.f32.xlu0 %v2818
  %v2820 = vpop.xlane.xlu0 %2819
  %v2821 = vmul.f32 %v2817, %v1363
  %v2822 = vmul.f32 %v2820, %v1363
  %v2823 = vadd.f32 %v2821, 1e-05
  %v2824 = vadd.f32 %v2822, 1e-05
  %v2825 = vrsqrt.pop %v2823
  %v2826 = vrsqrt.pop %v2824
  %v2827 = vmul.f32 %v2811, %v2825
  %v2828 = vmul.f32 %v2812, %v2826
  %v2829 = vlaneseq
  %v2830 = vshrl.u32 %v2829, 7
  %v2831 = vsub.s32 4, %v2830
  %v2832 = vrot.slane %v2802, %v2831
  %v2833 = vmul.f32 %v2827, %v2832
  %v2834 = vmul.f32 %v2828, %v2832
  %v2835 = vlaneseq
  %v2836 = vshrl.u32 %v2835, 7
  %v2837 = vsub.s32 5, %v2836
  %v2838 = vrot.slane %v2802, %v2837
  %v2839 = vadd.f32 %v2833, %v2838
  %v2840 = vadd.f32 %v2834, %v2838
  %v2841 = vpack.c.bf16 %v2840, %v2839
  %v2846 = vunpack.c.l.b16 %v2792
  %v2847 = vunpack.c.l.b16 %v2793
  %v2848 = vunpack.c.l.b16 %v2794
  %v2849 = vunpack.c.l.b16 %v2795
  %v2850 = vpack.c.b16 %v2847, %v2846
  %v2851 = vpack.c.b16 %v2849, %v2848
  %v2855 = vsel %vm464, %v2841, 0
  %2857 = vmatprep.subr.bf16.mxu0 0
  %2858 = vmatpush1.bf16.msra.mxu0 0
  %2859 = vmatprep.subr.bf16.mxu0 0
  %2860 = vmatpush1.bf16.msra.mxu0 0
  %2861 = vmatprep.subr.bf16.mxu0 0
  %2862 = vmatpush1.bf16.msra.mxu0 0
  %2863 = vmatprep.subr.bf16.mxu0 0
  %2864 = vmatpush1.bf16.msra.mxu0 0
  %2865 = vmatprep.subr.bf16.mxu0 0
  %2866 = vmatpush1.bf16.msra.mxu0 0
  %2867 = vmatprep.subr.bf16.mxu0 0
  %2868 = vmatpush1.bf16.msra.mxu0 0
  %2869 = vmatprep.subr.bf16.mxu0 0
  %2870 = vmatpush1.bf16.msra.mxu0 %v2851
  %2871 = vmatprep.subr.bf16.mxu0 0
  %2872 = vmatpush1.bf16.msra.mxu0 %v2850
  %2873 = vmatprep.subr.bf16.mxu0 0
  %2874 = vmatpush2.bf16.msra.mxu0 0
  %2875 = vmatprep.subr.bf16.mxu0 0
  %2876 = vmatpush2.bf16.msra.mxu0 0
  %2877 = vmatprep.subr.bf16.mxu0 0
  %2878 = vmatpush2.bf16.msra.mxu0 0
  %2879 = vmatprep.subr.bf16.mxu0 0
  %2880 = vmatpush2.bf16.msra.mxu0 0
  %2881 = vmatprep.subr.bf16.mxu0 0
  %2882 = vmatpush2.bf16.msra.mxu0 0
  %2883 = vmatprep.subr.bf16.mxu0 0
  %2884 = vmatpush2.bf16.msra.mxu0 0
  %2885 = vmatprep.subr.bf16.mxu0 0
  %2886 = vmatpush2.bf16.msra.mxu0 0
  %2887 = vmatprep.subr.bf16.mxu0 0
  %2888 = vmatpush2.bf16.msra.mxu0 0
  %2889 = vmatprep.mubr.bf16.mxu0 0
  %2890 = vmatmul.mubr.bf16.gmra.mxu0 %v2855
  %v2891 = vpop.f32.mrf.mxu0
  %v2892 = vadd.f32 0.0, %v2891
  %v2893 = vpop.f32.mrf.mxu0
  %v2894 = vpop.f32.mrf.mxu0
  %v2895 = vadd.f32 0.0, %v2894
  %v2896 = vpop.f32.mrf.mxu0
  %2897 = vdwg.mxu0
  %v2898 = vlaneseq
  %v2899 = vshrl.u32 %v2898, 7
  %v2900 = vsub.s32 0, %v2899
  %v2901 = vrot.slane %v2802, %v2900
  %v2902 = vadd.f32 %v2892, %v2901
  %v2903 = vadd.f32 %v2895, %v2901
  %v2904 = vlaneseq
  %v2905 = vshrl.u32 %v2904, 7
  %v2906 = vsub.s32 1, %v2905
  %v2907 = vrot.slane %v2802, %v2906
  %2909 = vrot.lane.b32.xlu0 %v2907, 32
  %v2910 = vpop.permute.xlu0 %2909
  %v2912 = vadd.f32 %v2892, %v2910
  %v2913 = vadd.f32 %v2895, %v2910
  %v2914 = vlaneseq
  %v2915 = vshrl.u32 %v2914, 7
  %v2916 = vsub.s32 2, %v2915
  %v2917 = vrot.slane %v2802, %v2916
  %2919 = vrot.lane.b32.xlu0 %v2917, 64
  %v2920 = vpop.permute.xlu0 %2919
  %v2922 = vadd.f32 %v2892, %v2920
  %v2923 = vadd.f32 %v2895, %v2920
  %v2926 = vcombine.high %v2902, %v2902
  %v2928 = vunpack.c.l.s4 1966171168
  %v2929 = vunpack.c.0.s8 %v2928
  %v2930 = vlaneseq
  %v2931 = vshrl.u32 %v2930, 7
  %v2932 = vsub.s32 %v2929, %v2931
  %v2933 = vrot.slane %v2902, %v2932
  %v2935 = vunpack.c.l.s4 1966171168
  %v2936 = vunpack.c.0.s8 %v2935
  %v2937 = vlaneseq
  %v2938 = vshrl.u32 %v2937, 7
  %v2939 = vsub.s32 %v2936, %v2938
  %v2940 = vrot.slane %v2926, %v2939
  %v2941 = vcombine.high %v2933, %v2933
  %v2942 = vcombine.high %v2940, %v2940
  %v2944 = vunpack.c.l.s4 1966171168
  %v2945 = vunpack.c.0.s8 %v2944
  %v2946 = vlaneseq
  %v2947 = vshrl.u32 %v2946, 7
  %v2948 = vsub.s32 %v2945, %v2947
  %v2949 = vrot.slane %v2933, %v2948
  %v2951 = vunpack.c.l.s4 1966171168
  %v2952 = vunpack.c.0.s8 %v2951
  %v2953 = vlaneseq
  %v2954 = vshrl.u32 %v2953, 7
  %v2955 = vsub.s32 %v2952, %v2954
  %v2956 = vrot.slane %v2940, %v2955
  %v2958 = vunpack.c.l.s4 1966171168
  %v2959 = vunpack.c.0.s8 %v2958
  %v2960 = vlaneseq
  %v2961 = vshrl.u32 %v2960, 7
  %v2962 = vsub.s32 %v2959, %v2961
  %v2963 = vrot.slane %v2941, %v2962
  %v2965 = vunpack.c.l.s4 1966171168
  %v2966 = vunpack.c.0.s8 %v2965
  %v2967 = vlaneseq
  %v2968 = vshrl.u32 %v2967, 7
  %v2969 = vsub.s32 %v2966, %v2968
  %v2970 = vrot.slane %v2942, %v2969
  %v2971 = vcombine.high %v2949, %v2949
  %v2972 = vcombine.high %v2956, %v2956
  %v2973 = vcombine.high %v2963, %v2963
  %v2974 = vcombine.high %v2970, %v2970
  %v2975 = vcombine.high %v2903, %v2903
  %v2977 = vunpack.c.l.s4 1966171168
  %v2978 = vunpack.c.0.s8 %v2977
  %v2979 = vlaneseq
  %v2980 = vshrl.u32 %v2979, 7
  %v2981 = vsub.s32 %v2978, %v2980
  %v2982 = vrot.slane %v2903, %v2981
  %v2984 = vunpack.c.l.s4 1966171168
  %v2985 = vunpack.c.0.s8 %v2984
  %v2986 = vlaneseq
  %v2987 = vshrl.u32 %v2986, 7
  %v2988 = vsub.s32 %v2985, %v2987
  %v2989 = vrot.slane %v2975, %v2988
  %v2990 = vcombine.high %v2982, %v2982
  %v2991 = vcombine.high %v2989, %v2989
  %v2993 = vunpack.c.l.s4 1966171168
  %v2994 = vunpack.c.0.s8 %v2993
  %v2995 = vlaneseq
  %v2996 = vshrl.u32 %v2995, 7
  %v2997 = vsub.s32 %v2994, %v2996
  %v2998 = vrot.slane %v2982, %v2997
  %v3000 = vunpack.c.l.s4 1966171168
  %v3001 = vunpack.c.0.s8 %v3000
  %v3002 = vlaneseq
  %v3003 = vshrl.u32 %v3002, 7
  %v3004 = vsub.s32 %v3001, %v3003
  %v3005 = vrot.slane %v2989, %v3004
  %v3007 = vunpack.c.l.s4 1966171168
  %v3008 = vunpack.c.0.s8 %v3007
  %v3009 = vlaneseq
  %v3010 = vshrl.u32 %v3009, 7
  %v3011 = vsub.s32 %v3008, %v3010
  %v3012 = vrot.slane %v2990, %v3011
  %v3014 = vunpack.c.l.s4 1966171168
  %v3015 = vunpack.c.0.s8 %v3014
  %v3016 = vlaneseq
  %v3017 = vshrl.u32 %v3016, 7
  %v3018 = vsub.s32 %v3015, %v3017
  %v3019 = vrot.slane %v2991, %v3018
  %v3020 = vcombine.high %v2998, %v2998
  %v3021 = vcombine.high %v3005, %v3005
  %v3022 = vcombine.high %v3012, %v3012
  %v3023 = vcombine.high %v3019, %v3019
  %v3024 = vlaneseq
  %v3025 = vshrl.u32 %v3024, 7
  %v3026 = vsub.s32 0, %v3025
  %v3027 = vrot.slane %v2949, %v3026
  %v3028 = vlaneseq
  %v3029 = vshrl.u32 %v3028, 7
  %v3030 = vsub.s32 0, %v3029
  %v3031 = vrot.slane %v2963, %v3030
  %v3032 = vlaneseq
  %v3033 = vshrl.u32 %v3032, 7
  %v3034 = vsub.s32 0, %v3033
  %v3035 = vrot.slane %v2971, %v3034
  %v3036 = vlaneseq
  %v3037 = vshrl.u32 %v3036, 7
  %v3038 = vsub.s32 0, %v3037
  %v3039 = vrot.slane %v2973, %v3038
  %v3040 = vlaneseq
  %v3041 = vshrl.u32 %v3040, 7
  %v3042 = vsub.s32 0, %v3041
  %v3043 = vrot.slane %v2956, %v3042
  %v3044 = vlaneseq
  %v3045 = vshrl.u32 %v3044, 7
  %v3046 = vsub.s32 0, %v3045
  %v3047 = vrot.slane %v2970, %v3046
  %v3048 = vlaneseq
  %v3049 = vshrl.u32 %v3048, 7
  %v3050 = vsub.s32 0, %v3049
  %v3051 = vrot.slane %v2972, %v3050
  %v3052 = vlaneseq
  %v3053 = vshrl.u32 %v3052, 7
  %v3054 = vsub.s32 0, %v3053
  %v3055 = vrot.slane %v2974, %v3054
  %v3056 = vlaneseq
  %v3057 = vshrl.u32 %v3056, 7
  %v3058 = vsub.s32 0, %v3057
  %v3059 = vrot.slane %v2998, %v3058
  %v3060 = vlaneseq
  %v3061 = vshrl.u32 %v3060, 7
  %v3062 = vsub.s32 0, %v3061
  %v3063 = vrot.slane %v3012, %v3062
  %v3064 = vlaneseq
  %v3065 = vshrl.u32 %v3064, 7
  %v3066 = vsub.s32 0, %v3065
  %v3067 = vrot.slane %v3020, %v3066
  %v3068 = vlaneseq
  %v3069 = vshrl.u32 %v3068, 7
  %v3070 = vsub.s32 0, %v3069
  %v3071 = vrot.slane %v3022, %v3070
  %v3072 = vlaneseq
  %v3073 = vshrl.u32 %v3072, 7
  %v3074 = vsub.s32 0, %v3073
  %v3075 = vrot.slane %v3005, %v3074
  %v3076 = vlaneseq
  %v3077 = vshrl.u32 %v3076, 7
  %v3078 = vsub.s32 0, %v3077
  %v3079 = vrot.slane %v3019, %v3078
  %v3080 = vlaneseq
  %v3081 = vshrl.u32 %v3080, 7
  %v3082 = vsub.s32 0, %v3081
  %v3083 = vrot.slane %v3021, %v3082
  %v3084 = vlaneseq
  %v3085 = vshrl.u32 %v3084, 7
  %v3086 = vsub.s32 0, %v3085
  %v3087 = vrot.slane %v3023, %v3086
  %3106 = vrot.lane.b32.xlu0 %v2912, 96
  %v3107 = vpop.permute.xlu0 %3106
  %3108 = vrot.lane.b32.xlu0 %v2913, 96
  %v3109 = vpop.permute.xlu0 %3108
  %v3112 = vmul.f32 %v3027, %v3107
  %v3113 = vmul.f32 %v3027, %v3109
  %v3114 = vmul.f32 %v3031, %v3107
  %v3115 = vmul.f32 %v3031, %v3109
  %v3116 = vmul.f32 %v3035, %v3107
  %v3117 = vmul.f32 %v3035, %v3109
  %v3118 = vmul.f32 %v3039, %v3107
  %v3119 = vmul.f32 %v3039, %v3109
  %v3120 = vmul.f32 %v3043, %v3107
  %v3121 = vmul.f32 %v3043, %v3109
  %v3122 = vmul.f32 %v3047, %v3107
  %v3123 = vmul.f32 %v3047, %v3109
  %v3124 = vmul.f32 %v3051, %v3107
  %v3125 = vmul.f32 %v3051, %v3109
  %v3126 = vmul.f32 %v3055, %v3107
  %v3127 = vmul.f32 %v3055, %v3109
  %v3128 = vmul.f32 %v3059, %v3107
  %v3129 = vmul.f32 %v3059, %v3109
  %v3130 = vmul.f32 %v3063, %v3107
  %v3131 = vmul.f32 %v3063, %v3109
  %v3132 = vmul.f32 %v3067, %v3107
  %v3133 = vmul.f32 %v3067, %v3109
  %v3134 = vmul.f32 %v3071, %v3107
  %v3135 = vmul.f32 %v3071, %v3109
  %v3136 = vmul.f32 %v3075, %v3107
  %v3137 = vmul.f32 %v3075, %v3109
  %v3138 = vmul.f32 %v3079, %v3107
  %v3139 = vmul.f32 %v3079, %v3109
  %v3140 = vmul.f32 %v3083, %v3107
  %v3141 = vmul.f32 %v3083, %v3109
  %v3142 = vmul.f32 %v3087, %v3107
  %v3143 = vmul.f32 %v3087, %v3109
  %3176 = vrot.lane.b32.xlu0 %v1090, 96
  %v3177 = vpop.permute.xlu0 %3176
  %3178 = vrot.lane.b32.xlu0 %v1092, 96
  %v3179 = vpop.permute.xlu0 %3178
  %3180 = vrot.lane.b32.xlu0 %v1094, 96
  %v3181 = vpop.permute.xlu0 %3180
  %3182 = vrot.lane.b32.xlu0 %v1096, 96
  %v3183 = vpop.permute.xlu0 %3182
  %3184 = vrot.lane.b32.xlu0 %v1098, 96
  %v3185 = vpop.permute.xlu0 %3184
  %3186 = vrot.lane.b32.xlu0 %v1100, 96
  %v3187 = vpop.permute.xlu0 %3186
  %3188 = vrot.lane.b32.xlu0 %v1102, 96
  %v3189 = vpop.permute.xlu0 %3188
  %3190 = vrot.lane.b32.xlu0 %v1104, 96
  %v3191 = vpop.permute.xlu0 %3190
  %3192 = vrot.lane.b32.xlu0 %v1106, 96
  %v3193 = vpop.permute.xlu0 %3192
  %3194 = vrot.lane.b32.xlu0 %v1108, 96
  %v3195 = vpop.permute.xlu0 %3194
  %3196 = vrot.lane.b32.xlu0 %v1110, 96
  %v3197 = vpop.permute.xlu0 %3196
  %3198 = vrot.lane.b32.xlu0 %v1112, 96
  %v3199 = vpop.permute.xlu0 %3198
  %3200 = vrot.lane.b32.xlu0 %v1114, 96
  %v3201 = vpop.permute.xlu0 %3200
  %3202 = vrot.lane.b32.xlu0 %v1116, 96
  %v3203 = vpop.permute.xlu0 %3202
  %3204 = vrot.lane.b32.xlu0 %v1118, 96
  %v3205 = vpop.permute.xlu0 %3204
  %3206 = vrot.lane.b32.xlu0 %v1120, 96
  %v3207 = vpop.permute.xlu0 %3206
  %3208 = vrot.lane.b32.xlu0 %v1122, 96
  %v3209 = vpop.permute.xlu0 %3208
  %3210 = vrot.lane.b32.xlu0 %v1124, 96
  %v3211 = vpop.permute.xlu0 %3210
  %3212 = vrot.lane.b32.xlu0 %v1126, 96
  %v3213 = vpop.permute.xlu0 %3212
  %3214 = vrot.lane.b32.xlu0 %v1128, 96
  %v3215 = vpop.permute.xlu0 %3214
  %3216 = vrot.lane.b32.xlu0 %v1130, 96
  %v3217 = vpop.permute.xlu0 %3216
  %3218 = vrot.lane.b32.xlu0 %v1132, 96
  %v3219 = vpop.permute.xlu0 %3218
  %3220 = vrot.lane.b32.xlu0 %v1134, 96
  %v3221 = vpop.permute.xlu0 %3220
  %3222 = vrot.lane.b32.xlu0 %v1136, 96
  %v3223 = vpop.permute.xlu0 %3222
  %3224 = vrot.lane.b32.xlu0 %v1138, 96
  %v3225 = vpop.permute.xlu0 %3224
  %3226 = vrot.lane.b32.xlu0 %v1140, 96
  %v3227 = vpop.permute.xlu0 %3226
  %3228 = vrot.lane.b32.xlu0 %v1142, 96
  %v3229 = vpop.permute.xlu0 %3228
  %3230 = vrot.lane.b32.xlu0 %v1144, 96
  %v3231 = vpop.permute.xlu0 %3230
  %3232 = vrot.lane.b32.xlu0 %v1146, 96
  %v3233 = vpop.permute.xlu0 %3232
  %3234 = vrot.lane.b32.xlu0 %v1148, 96
  %v3235 = vpop.permute.xlu0 %3234
  %3236 = vrot.lane.b32.xlu0 %v1150, 96
  %v3237 = vpop.permute.xlu0 %3236
  %3238 = vrot.lane.b32.xlu0 %v1152, 96
  %v3239 = vpop.permute.xlu0 %3238
  %v3272 = vmul.f32 %v3112, %v3177
  %v3273 = vmul.f32 %v3113, %v3179
  %v3274 = vmul.f32 %v3114, %v3181
  %v3275 = vmul.f32 %v3115, %v3183
  %v3276 = vmul.f32 %v3116, %v3185
  %v3277 = vmul.f32 %v3117, %v3187
  %v3278 = vmul.f32 %v3118, %v3189
  %v3279 = vmul.f32 %v3119, %v3191
  %v3280 = vmul.f32 %v3120, %v3193
  %v3281 = vmul.f32 %v3121, %v3195
  %v3282 = vmul.f32 %v3122, %v3197
  %v3283 = vmul.f32 %v3123, %v3199
  %v3284 = vmul.f32 %v3124, %v3201
  %v3285 = vmul.f32 %v3125, %v3203
  %v3286 = vmul.f32 %v3126, %v3205
  %v3287 = vmul.f32 %v3127, %v3207
  %v3288 = vmul.f32 %v3128, %v3209
  %v3289 = vmul.f32 %v3129, %v3211
  %v3290 = vmul.f32 %v3130, %v3213
  %v3291 = vmul.f32 %v3131, %v3215
  %v3292 = vmul.f32 %v3132, %v3217
  %v3293 = vmul.f32 %v3133, %v3219
  %v3294 = vmul.f32 %v3134, %v3221
  %v3295 = vmul.f32 %v3135, %v3223
  %v3296 = vmul.f32 %v3136, %v3225
  %v3297 = vmul.f32 %v3137, %v3227
  %v3298 = vmul.f32 %v3138, %v3229
  %v3299 = vmul.f32 %v3139, %v3231
  %v3300 = vmul.f32 %v3140, %v3233
  %v3301 = vmul.f32 %v3141, %v3235
  %v3302 = vmul.f32 %v3142, %v3237
  %v3303 = vmul.f32 %v3143, %v3239
  %v3304 = vpack.c.bf16 %v3273, %v3272
  %v3305 = vpack.c.bf16 %v3275, %v3274
  %v3306 = vpack.c.bf16 %v3277, %v3276
  %v3307 = vpack.c.bf16 %v3279, %v3278
  %v3308 = vpack.c.bf16 %v3281, %v3280
  %v3309 = vpack.c.bf16 %v3283, %v3282
  %v3310 = vpack.c.bf16 %v3285, %v3284
  %v3311 = vpack.c.bf16 %v3287, %v3286
  %v3312 = vpack.c.bf16 %v3289, %v3288
  %v3313 = vpack.c.bf16 %v3291, %v3290
  %v3314 = vpack.c.bf16 %v3293, %v3292
  %v3315 = vpack.c.bf16 %v3295, %v3294
  %v3316 = vpack.c.bf16 %v3297, %v3296
  %v3317 = vpack.c.bf16 %v3299, %v3298
  %v3318 = vpack.c.bf16 %v3301, %v3300
  %v3319 = vpack.c.bf16 %v3303, %v3302
  %v3321 = vsel %vm464, %v3304, 0
  %v3324 = vsel %vm464, %v3305, 0
  %v3327 = vsel %vm464, %v3306, 0
  %v3330 = vsel %vm464, %v3307, 0
  %v3333 = vsel %vm464, %v3308, 0
  %v3336 = vsel %vm464, %v3309, 0
  %v3339 = vsel %vm464, %v3310, 0
  %v3342 = vsel %vm464, %v3311, 0
  %v3345 = vsel %vm464, %v3312, 0
  %v3348 = vsel %vm464, %v3313, 0
  %v3351 = vsel %vm464, %v3314, 0
  %v3354 = vsel %vm464, %v3315, 0
  %v3357 = vsel %vm464, %v3316, 0
  %v3360 = vsel %vm464, %v3317, 0
  %v3363 = vsel %vm464, %v3318, 0
  %v3366 = vsel %vm464, %v3319, 0
  %3368 = vmatprep.subr.bf16.mxu0 0
  %3369 = vmatpush1.bf16.msra.mxu0 0
  %3370 = vmatprep.subr.bf16.mxu0 0
  %3371 = vmatpush1.bf16.msra.mxu0 0
  %3372 = vmatprep.subr.bf16.mxu0 0
  %3373 = vmatpush1.bf16.msra.mxu0 0
  %3374 = vmatprep.subr.bf16.mxu0 0
  %3375 = vmatpush1.bf16.msra.mxu0 0
  %3376 = vmatprep.subr.bf16.mxu0 0
  %3377 = vmatpush1.bf16.msra.mxu0 0
  %3378 = vmatprep.subr.bf16.mxu0 0
  %3379 = vmatpush1.bf16.msra.mxu0 0
  %3380 = vmatprep.subr.bf16.mxu0 0
  %3381 = vmatpush1.bf16.msra.mxu0 %v1756
  %3382 = vmatprep.subr.bf16.mxu0 0
  %3383 = vmatpush1.bf16.msra.mxu0 %v1755
  %3384 = vmatprep.subr.bf16.mxu0 0
  %3385 = vmatpush2.bf16.msra.mxu0 0
  %3386 = vmatprep.subr.bf16.mxu0 0
  %3387 = vmatpush2.bf16.msra.mxu0 0
  %3388 = vmatprep.subr.bf16.mxu0 0
  %3389 = vmatpush2.bf16.msra.mxu0 0
  %3390 = vmatprep.subr.bf16.mxu0 0
  %3391 = vmatpush2.bf16.msra.mxu0 0
  %3392 = vmatprep.subr.bf16.mxu0 0
  %3393 = vmatpush2.bf16.msra.mxu0 0
  %3394 = vmatprep.subr.bf16.mxu0 0
  %3395 = vmatpush2.bf16.msra.mxu0 0
  %3396 = vmatprep.subr.bf16.mxu0 0
  %3397 = vmatpush2.bf16.msra.mxu0 0
  %3398 = vmatprep.subr.bf16.mxu0 0
  %3399 = vmatpush2.bf16.msra.mxu0 0
  %3400 = vmatprep.mubr.bf16.mxu0 0
  %3401 = vmatmul.mubr.bf16.gmra.mxu0 %v3321
  %v3402 = vpop.f32.mrf.mxu0
  %v3403 = vadd.f32 0.0, %v3402
  %v3404 = vpop.f32.mrf.mxu0
  %v3405 = vpop.f32.mrf.mxu0
  %v3406 = vadd.f32 0.0, %v3405
  %v3407 = vpop.f32.mrf.mxu0
  %3408 = vmatprep.mubr.bf16.mxu0 0
  %3409 = vmatmul.mubr.bf16.gmra.mxu0 %v3324
  %v3410 = vpop.f32.mrf.mxu0
  %v3411 = vadd.f32 0.0, %v3410
  %v3412 = vpop.f32.mrf.mxu0
  %v3413 = vpop.f32.mrf.mxu0
  %v3414 = vadd.f32 0.0, %v3413
  %v3415 = vpop.f32.mrf.mxu0
  %3416 = vmatprep.mubr.bf16.mxu0 0
  %3417 = vmatmul.mubr.bf16.gmra.mxu0 %v3327
  %v3418 = vpop.f32.mrf.mxu0
  %v3419 = vadd.f32 0.0, %v3418
  %v3420 = vpop.f32.mrf.mxu0
  %v3421 = vpop.f32.mrf.mxu0
  %v3422 = vadd.f32 0.0, %v3421
  %v3423 = vpop.f32.mrf.mxu0
  %3424 = vmatprep.mubr.bf16.mxu0 0
  %3425 = vmatmul.mubr.bf16.gmra.mxu0 %v3330
  %v3426 = vpop.f32.mrf.mxu0
  %v3427 = vadd.f32 0.0, %v3426
  %v3428 = vpop.f32.mrf.mxu0
  %v3429 = vpop.f32.mrf.mxu0
  %v3430 = vadd.f32 0.0, %v3429
  %v3431 = vpop.f32.mrf.mxu0
  %3432 = vmatprep.mubr.bf16.mxu0 0
  %3433 = vmatmul.mubr.bf16.gmra.mxu0 %v3333
  %v3434 = vpop.f32.mrf.mxu0
  %v3435 = vadd.f32 0.0, %v3434
  %v3436 = vpop.f32.mrf.mxu0
  %v3437 = vpop.f32.mrf.mxu0
  %v3438 = vadd.f32 0.0, %v3437
  %v3439 = vpop.f32.mrf.mxu0
  %3440 = vmatprep.mubr.bf16.mxu0 0
  %3441 = vmatmul.mubr.bf16.gmra.mxu0 %v3336
  %v3442 = vpop.f32.mrf.mxu0
  %v3443 = vadd.f32 0.0, %v3442
  %v3444 = vpop.f32.mrf.mxu0
  %v3445 = vpop.f32.mrf.mxu0
  %v3446 = vadd.f32 0.0, %v3445
  %v3447 = vpop.f32.mrf.mxu0
  %3448 = vmatprep.mubr.bf16.mxu0 0
  %3449 = vmatmul.mubr.bf16.gmra.mxu0 %v3339
  %v3450 = vpop.f32.mrf.mxu0
  %v3451 = vadd.f32 0.0, %v3450
  %v3452 = vpop.f32.mrf.mxu0
  %v3453 = vpop.f32.mrf.mxu0
  %v3454 = vadd.f32 0.0, %v3453
  %v3455 = vpop.f32.mrf.mxu0
  %3456 = vmatprep.mubr.bf16.mxu0 0
  %3457 = vmatmul.mubr.bf16.gmra.mxu0 %v3342
  %v3458 = vpop.f32.mrf.mxu0
  %v3459 = vadd.f32 0.0, %v3458
  %v3460 = vpop.f32.mrf.mxu0
  %v3461 = vpop.f32.mrf.mxu0
  %v3462 = vadd.f32 0.0, %v3461
  %v3463 = vpop.f32.mrf.mxu0
  %3464 = vmatprep.mubr.bf16.mxu0 0
  %3465 = vmatmul.mubr.bf16.gmra.mxu0 %v3345
  %v3466 = vpop.f32.mrf.mxu0
  %v3467 = vadd.f32 0.0, %v3466
  %v3468 = vpop.f32.mrf.mxu0
  %v3469 = vpop.f32.mrf.mxu0
  %v3470 = vadd.f32 0.0, %v3469
  %v3471 = vpop.f32.mrf.mxu0
  %3472 = vmatprep.mubr.bf16.mxu0 0
  %3473 = vmatmul.mubr.bf16.gmra.mxu0 %v3348
  %v3474 = vpop.f32.mrf.mxu0
  %v3475 = vadd.f32 0.0, %v3474
  %v3476 = vpop.f32.mrf.mxu0
  %v3477 = vpop.f32.mrf.mxu0
  %v3478 = vadd.f32 0.0, %v3477
  %v3479 = vpop.f32.mrf.mxu0
  %3480 = vmatprep.mubr.bf16.mxu0 0
  %3481 = vmatmul.mubr.bf16.gmra.mxu0 %v3351
  %v3482 = vpop.f32.mrf.mxu0
  %v3483 = vadd.f32 0.0, %v3482
  %v3484 = vpop.f32.mrf.mxu0
  %v3485 = vpop.f32.mrf.mxu0
  %v3486 = vadd.f32 0.0, %v3485
  %v3487 = vpop.f32.mrf.mxu0
  %3488 = vmatprep.mubr.bf16.mxu0 0
  %3489 = vmatmul.mubr.bf16.gmra.mxu0 %v3354
  %v3490 = vpop.f32.mrf.mxu0
  %v3491 = vadd.f32 0.0, %v3490
  %v3492 = vpop.f32.mrf.mxu0
  %v3493 = vpop.f32.mrf.mxu0
  %v3494 = vadd.f32 0.0, %v3493
  %v3495 = vpop.f32.mrf.mxu0
  %3496 = vmatprep.mubr.bf16.mxu0 0
  %3497 = vmatmul.mubr.bf16.gmra.mxu0 %v3357
  %v3498 = vpop.f32.mrf.mxu0
  %v3499 = vadd.f32 0.0, %v3498
  %v3500 = vpop.f32.mrf.mxu0
  %v3501 = vpop.f32.mrf.mxu0
  %v3502 = vadd.f32 0.0, %v3501
  %v3503 = vpop.f32.mrf.mxu0
  %3504 = vmatprep.mubr.bf16.mxu0 0
  %3505 = vmatmul.mubr.bf16.gmra.mxu0 %v3360
  %v3506 = vpop.f32.mrf.mxu0
  %v3507 = vadd.f32 0.0, %v3506
  %v3508 = vpop.f32.mrf.mxu0
  %v3509 = vpop.f32.mrf.mxu0
  %v3510 = vadd.f32 0.0, %v3509
  %v3511 = vpop.f32.mrf.mxu0
  %3512 = vmatprep.mubr.bf16.mxu0 0
  %3513 = vmatmul.mubr.bf16.gmra.mxu0 %v3363
  %v3514 = vpop.f32.mrf.mxu0
  %v3515 = vadd.f32 0.0, %v3514
  %v3516 = vpop.f32.mrf.mxu0
  %v3517 = vpop.f32.mrf.mxu0
  %v3518 = vadd.f32 0.0, %v3517
  %v3519 = vpop.f32.mrf.mxu0
  %3520 = vmatprep.mubr.bf16.mxu0 0
  %3521 = vmatmul.mubr.bf16.gmra.mxu0 %v3366
  %v3522 = vpop.f32.mrf.mxu0
  %v3523 = vadd.f32 0.0, %v3522
  %v3524 = vpop.f32.mrf.mxu0
  %v3525 = vpop.f32.mrf.mxu0
  %v3526 = vadd.f32 0.0, %v3525
  %v3527 = vpop.f32.mrf.mxu0
  %3528 = vdwg.mxu0
  %v3529 = vxor.u32 %v3403, 2147483648
  %v3530 = vxor.u32 %v3406, 2147483648
  %v3531 = vxor.u32 %v3411, 2147483648
  %v3532 = vxor.u32 %v3414, 2147483648
  %v3533 = vxor.u32 %v3419, 2147483648
  %v3534 = vxor.u32 %v3422, 2147483648
  %v3535 = vxor.u32 %v3427, 2147483648
  %v3536 = vxor.u32 %v3430, 2147483648
  %v3537 = vxor.u32 %v3435, 2147483648
  %v3538 = vxor.u32 %v3438, 2147483648
  %v3539 = vxor.u32 %v3443, 2147483648
  %v3540 = vxor.u32 %v3446, 2147483648
  %v3541 = vxor.u32 %v3451, 2147483648
  %v3542 = vxor.u32 %v3454, 2147483648
  %v3543 = vxor.u32 %v3459, 2147483648
  %v3544 = vxor.u32 %v3462, 2147483648
  %v3545 = vxor.u32 %v3467, 2147483648
  %v3546 = vxor.u32 %v3470, 2147483648
  %v3547 = vxor.u32 %v3475, 2147483648
  %v3548 = vxor.u32 %v3478, 2147483648
  %v3549 = vxor.u32 %v3483, 2147483648
  %v3550 = vxor.u32 %v3486, 2147483648
  %v3551 = vxor.u32 %v3491, 2147483648
  %v3552 = vxor.u32 %v3494, 2147483648
  %v3553 = vxor.u32 %v3499, 2147483648
  %v3554 = vxor.u32 %v3502, 2147483648
  %v3555 = vxor.u32 %v3507, 2147483648
  %v3556 = vxor.u32 %v3510, 2147483648
  %v3557 = vxor.u32 %v3515, 2147483648
  %v3558 = vxor.u32 %v3518, 2147483648
  %v3559 = vxor.u32 %v3523, 2147483648
  %v3560 = vxor.u32 %v3526, 2147483648
  %v3561 = vmul.f32 %v3529, 1.442695
  %v3562 = vpow.pop %v3561
  %v3563 = vmul.f32 %v3530, 1.442695
  %v3564 = vpow.pop %v3563
  %v3565 = vmul.f32 %v3531, 1.442695
  %v3566 = vpow.pop %v3565
  %v3567 = vmul.f32 %v3532, 1.442695
  %v3568 = vpow.pop %v3567
  %v3569 = vmul.f32 %v3533, 1.442695
  %v3570 = vpow.pop %v3569
  %v3571 = vmul.f32 %v3534, 1.442695
  %v3572 = vpow.pop %v3571
  %v3573 = vmul.f32 %v3535, 1.442695
  %v3574 = vpow.pop %v3573
  %v3575 = vmul.f32 %v3536, 1.442695
  %v3576 = vpow.pop %v3575
  %v3577 = vmul.f32 %v3537, 1.442695
  %v3578 = vpow.pop %v3577
  %v3579 = vmul.f32 %v3538, 1.442695
  %v3580 = vpow.pop %v3579
  %v3581 = vmul.f32 %v3539, 1.442695
  %v3582 = vpow.pop %v3581
  %v3583 = vmul.f32 %v3540, 1.442695
  %v3584 = vpow.pop %v3583
  %v3585 = vmul.f32 %v3541, 1.442695
  %v3586 = vpow.pop %v3585
  %v3587 = vmul.f32 %v3542, 1.442695
  %v3588 = vpow.pop %v3587
  %v3589 = vmul.f32 %v3543, 1.442695
  %v3590 = vpow.pop %v3589
  %v3591 = vmul.f32 %v3544, 1.442695
  %v3592 = vpow.pop %v3591
  %v3593 = vmul.f32 %v3545, 1.442695
  %v3594 = vpow.pop %v3593
  %v3595 = vmul.f32 %v3546, 1.442695
  %v3596 = vpow.pop %v3595
  %v3597 = vmul.f32 %v3547, 1.442695
  %v3598 = vpow.pop %v3597
  %v3599 = vmul.f32 %v3548, 1.442695
  %v3600 = vpow.pop %v3599
  %v3601 = vmul.f32 %v3549, 1.442695
  %v3602 = vpow.pop %v3601
  %v3603 = vmul.f32 %v3550, 1.442695
  %v3604 = vpow.pop %v3603
  %v3605 = vmul.f32 %v3551, 1.442695
  %v3606 = vpow.pop %v3605
  %v3607 = vmul.f32 %v3552, 1.442695
  %v3608 = vpow.pop %v3607
  %v3609 = vmul.f32 %v3553, 1.442695
  %v3610 = vpow.pop %v3609
  %v3611 = vmul.f32 %v3554, 1.442695
  %v3612 = vpow.pop %v3611
  %v3613 = vmul.f32 %v3555, 1.442695
  %v3614 = vpow.pop %v3613
  %v3615 = vmul.f32 %v3556, 1.442695
  %v3616 = vpow.pop %v3615
  %v3617 = vmul.f32 %v3557, 1.442695
  %v3618 = vpow.pop %v3617
  %v3619 = vmul.f32 %v3558, 1.442695
  %v3620 = vpow.pop %v3619
  %v3621 = vmul.f32 %v3559, 1.442695
  %v3622 = vpow.pop %v3621
  %v3623 = vmul.f32 %v3560, 1.442695
  %v3624 = vpow.pop %v3623
  %v3625 = vadd.f32 %v3562, 1.0
  %v3626 = vadd.f32 %v3564, 1.0
  %v3627 = vadd.f32 %v3566, 1.0
  %v3628 = vadd.f32 %v3568, 1.0
  %v3629 = vadd.f32 %v3570, 1.0
  %v3630 = vadd.f32 %v3572, 1.0
  %v3631 = vadd.f32 %v3574, 1.0
  %v3632 = vadd.f32 %v3576, 1.0
  %v3633 = vadd.f32 %v3578, 1.0
  %v3634 = vadd.f32 %v3580, 1.0
  %v3635 = vadd.f32 %v3582, 1.0
  %v3636 = vadd.f32 %v3584, 1.0
  %v3637 = vadd.f32 %v3586, 1.0
  %v3638 = vadd.f32 %v3588, 1.0
  %v3639 = vadd.f32 %v3590, 1.0
  %v3640 = vadd.f32 %v3592, 1.0
  %v3641 = vadd.f32 %v3594, 1.0
  %v3642 = vadd.f32 %v3596, 1.0
  %v3643 = vadd.f32 %v3598, 1.0
  %v3644 = vadd.f32 %v3600, 1.0
  %v3645 = vadd.f32 %v3602, 1.0
  %v3646 = vadd.f32 %v3604, 1.0
  %v3647 = vadd.f32 %v3606, 1.0
  %v3648 = vadd.f32 %v3608, 1.0
  %v3649 = vadd.f32 %v3610, 1.0
  %v3650 = vadd.f32 %v3612, 1.0
  %v3651 = vadd.f32 %v3614, 1.0
  %v3652 = vadd.f32 %v3616, 1.0
  %v3653 = vadd.f32 %v3618, 1.0
  %v3654 = vadd.f32 %v3620, 1.0
  %v3655 = vadd.f32 %v3622, 1.0
  %v3656 = vadd.f32 %v3624, 1.0
  %v3657 = vrcp.pop %v3625
  %v3658 = vmul.f32 1.0, %v3657
  %v3659 = vrcp.pop %v3626
  %v3660 = vmul.f32 1.0, %v3659
  %v3661 = vrcp.pop %v3627
  %v3662 = vmul.f32 1.0, %v3661
  %v3663 = vrcp.pop %v3628
  %v3664 = vmul.f32 1.0, %v3663
  %v3665 = vrcp.pop %v3629
  %v3666 = vmul.f32 1.0, %v3665
  %v3667 = vrcp.pop %v3630
  %v3668 = vmul.f32 1.0, %v3667
  %v3669 = vrcp.pop %v3631
  %v3670 = vmul.f32 1.0, %v3669
  %v3671 = vrcp.pop %v3632
  %v3672 = vmul.f32 1.0, %v3671
  %v3673 = vrcp.pop %v3633
  %v3674 = vmul.f32 1.0, %v3673
  %v3675 = vrcp.pop %v3634
  %v3676 = vmul.f32 1.0, %v3675
  %v3677 = vrcp.pop %v3635
  %v3678 = vmul.f32 1.0, %v3677
  %v3679 = vrcp.pop %v3636
  %v3680 = vmul.f32 1.0, %v3679
  %v3681 = vrcp.pop %v3637
  %v3682 = vmul.f32 1.0, %v3681
  %v3683 = vrcp.pop %v3638
  %v3684 = vmul.f32 1.0, %v3683
  %v3685 = vrcp.pop %v3639
  %v3686 = vmul.f32 1.0, %v3685
  %v3687 = vrcp.pop %v3640
  %v3688 = vmul.f32 1.0, %v3687
  %v3689 = vrcp.pop %v3641
  %v3690 = vmul.f32 1.0, %v3689
  %v3691 = vrcp.pop %v3642
  %v3692 = vmul.f32 1.0, %v3691
  %v3693 = vrcp.pop %v3643
  %v3694 = vmul.f32 1.0, %v3693
  %v3695 = vrcp.pop %v3644
  %v3696 = vmul.f32 1.0, %v3695
  %v3697 = vrcp.pop %v3645
  %v3698 = vmul.f32 1.0, %v3697
  %v3699 = vrcp.pop %v3646
  %v3700 = vmul.f32 1.0, %v3699
  %v3701 = vrcp.pop %v3647
  %v3702 = vmul.f32 1.0, %v3701
  %v3703 = vrcp.pop %v3648
  %v3704 = vmul.f32 1.0, %v3703
  %v3705 = vrcp.pop %v3649
  %v3706 = vmul.f32 1.0, %v3705
  %v3707 = vrcp.pop %v3650
  %v3708 = vmul.f32 1.0, %v3707
  %v3709 = vrcp.pop %v3651
  %v3710 = vmul.f32 1.0, %v3709
  %v3711 = vrcp.pop %v3652
  %v3712 = vmul.f32 1.0, %v3711
  %v3713 = vrcp.pop %v3653
  %v3714 = vmul.f32 1.0, %v3713
  %v3715 = vrcp.pop %v3654
  %v3716 = vmul.f32 1.0, %v3715
  %v3717 = vrcp.pop %v3655
  %v3718 = vmul.f32 1.0, %v3717
  %v3719 = vrcp.pop %v3656
  %v3720 = vmul.f32 1.0, %v3719
  %v3721 = vmul.f32 %v3403, %v3658
  %v3722 = vmul.f32 %v3406, %v3660
  %v3723 = vmul.f32 %v3411, %v3662
  %v3724 = vmul.f32 %v3414, %v3664
  %v3725 = vmul.f32 %v3419, %v3666
  %v3726 = vmul.f32 %v3422, %v3668
  %v3727 = vmul.f32 %v3427, %v3670
  %v3728 = vmul.f32 %v3430, %v3672
  %v3729 = vmul.f32 %v3435, %v3674
  %v3730 = vmul.f32 %v3438, %v3676
  %v3731 = vmul.f32 %v3443, %v3678
  %v3732 = vmul.f32 %v3446, %v3680
  %v3733 = vmul.f32 %v3451, %v3682
  %v3734 = vmul.f32 %v3454, %v3684
  %v3735 = vmul.f32 %v3459, %v3686
  %v3736 = vmul.f32 %v3462, %v3688
  %v3737 = vmul.f32 %v3467, %v3690
  %v3738 = vmul.f32 %v3470, %v3692
  %v3739 = vmul.f32 %v3475, %v3694
  %v3740 = vmul.f32 %v3478, %v3696
  %v3741 = vmul.f32 %v3483, %v3698
  %v3742 = vmul.f32 %v3486, %v3700
  %v3743 = vmul.f32 %v3491, %v3702
  %v3744 = vmul.f32 %v3494, %v3704
  %v3745 = vmul.f32 %v3499, %v3706
  %v3746 = vmul.f32 %v3502, %v3708
  %v3747 = vmul.f32 %v3507, %v3710
  %v3748 = vmul.f32 %v3510, %v3712
  %v3749 = vmul.f32 %v3515, %v3714
  %v3750 = vmul.f32 %v3518, %v3716
  %v3751 = vmul.f32 %v3523, %v3718
  %v3752 = vmul.f32 %v3526, %v3720
  %3753 = vrot.lane.b32.xlu0 %v1314, 32
  %v3754 = vpop.permute.xlu0 %3753
  %3755 = vrot.lane.b32.xlu0 %v1315, 32
  %v3756 = vpop.permute.xlu0 %3755
  %3757 = vrot.lane.b32.xlu0 %v1316, 32
  %v3758 = vpop.permute.xlu0 %3757
  %3759 = vrot.lane.b32.xlu0 %v1317, 32
  %v3760 = vpop.permute.xlu0 %3759
  %3761 = vrot.lane.b32.xlu0 %v1318, 32
  %v3762 = vpop.permute.xlu0 %3761
  %3763 = vrot.lane.b32.xlu0 %v1319, 32
  %v3764 = vpop.permute.xlu0 %3763
  %3765 = vrot.lane.b32.xlu0 %v1320, 32
  %v3766 = vpop.permute.xlu0 %3765
  %3767 = vrot.lane.b32.xlu0 %v1321, 32
  %v3768 = vpop.permute.xlu0 %3767
  %3769 = vrot.lane.b32.xlu0 %v1322, 32
  %v3770 = vpop.permute.xlu0 %3769
  %3771 = vrot.lane.b32.xlu0 %v1323, 32
  %v3772 = vpop.permute.xlu0 %3771
  %3773 = vrot.lane.b32.xlu0 %v1324, 32
  %v3774 = vpop.permute.xlu0 %3773
  %3775 = vrot.lane.b32.xlu0 %v1325, 32
  %v3776 = vpop.permute.xlu0 %3775
  %3777 = vrot.lane.b32.xlu0 %v1326, 32
  %v3778 = vpop.permute.xlu0 %3777
  %3779 = vrot.lane.b32.xlu0 %v1327, 32
  %v3780 = vpop.permute.xlu0 %3779
  %3781 = vrot.lane.b32.xlu0 %v1328, 32
  %v3782 = vpop.permute.xlu0 %3781
  %3783 = vrot.lane.b32.xlu0 %v1329, 32
  %v3784 = vpop.permute.xlu0 %3783
  %3785 = vrot.lane.b32.xlu0 %v1330, 32
  %v3786 = vpop.permute.xlu0 %3785
  %3787 = vrot.lane.b32.xlu0 %v1331, 32
  %v3788 = vpop.permute.xlu0 %3787
  %3789 = vrot.lane.b32.xlu0 %v1332, 32
  %v3790 = vpop.permute.xlu0 %3789
  %3791 = vrot.lane.b32.xlu0 %v1333, 32
  %v3792 = vpop.permute.xlu0 %3791
  %3793 = vrot.lane.b32.xlu0 %v1334, 32
  %v3794 = vpop.permute.xlu0 %3793
  %3795 = vrot.lane.b32.xlu0 %v1335, 32
  %v3796 = vpop.permute.xlu0 %3795
  %3797 = vrot.lane.b32.xlu0 %v1336, 32
  %v3798 = vpop.permute.xlu0 %3797
  %3799 = vrot.lane.b32.xlu0 %v1337, 32
  %v3800 = vpop.permute.xlu0 %3799
  %3801 = vrot.lane.b32.xlu0 %v1338, 32
  %v3802 = vpop.permute.xlu0 %3801
  %3803 = vrot.lane.b32.xlu0 %v1339, 32
  %v3804 = vpop.permute.xlu0 %3803
  %3805 = vrot.lane.b32.xlu0 %v1340, 32
  %v3806 = vpop.permute.xlu0 %3805
  %3807 = vrot.lane.b32.xlu0 %v1341, 32
  %v3808 = vpop.permute.xlu0 %3807
  %3809 = vrot.lane.b32.xlu0 %v1342, 32
  %v3810 = vpop.permute.xlu0 %3809
  %3811 = vrot.lane.b32.xlu0 %v1343, 32
  %v3812 = vpop.permute.xlu0 %3811
  %3813 = vrot.lane.b32.xlu0 %v1344, 32
  %v3814 = vpop.permute.xlu0 %3813
  %3815 = vrot.lane.b32.xlu0 %v1345, 32
  %v3816 = vpop.permute.xlu0 %3815
  %v3849 = vmul.f32 %v2922, %v3754
  %v3850 = vmul.f32 %v2923, %v3756
  %v3851 = vmul.f32 %v2922, %v3758
  %v3852 = vmul.f32 %v2923, %v3760
  %v3853 = vmul.f32 %v2922, %v3762
  %v3854 = vmul.f32 %v2923, %v3764
  %v3855 = vmul.f32 %v2922, %v3766
  %v3856 = vmul.f32 %v2923, %v3768
  %v3857 = vmul.f32 %v2922, %v3770
  %v3858 = vmul.f32 %v2923, %v3772
  %v3859 = vmul.f32 %v2922, %v3774
  %v3860 = vmul.f32 %v2923, %v3776
  %v3861 = vmul.f32 %v2922, %v3778
  %v3862 = vmul.f32 %v2923, %v3780
  %v3863 = vmul.f32 %v2922, %v3782
  %v3864 = vmul.f32 %v2923, %v3784
  %v3865 = vmul.f32 %v2922, %v3786
  %v3866 = vmul.f32 %v2923, %v3788
  %v3867 = vmul.f32 %v2922, %v3790
  %v3868 = vmul.f32 %v2923, %v3792
  %v3869 = vmul.f32 %v2922, %v3794
  %v3870 = vmul.f32 %v2923, %v3796
  %v3871 = vmul.f32 %v2922, %v3798
  %v3872 = vmul.f32 %v2923, %v3800
  %v3873 = vmul.f32 %v2922, %v3802
  %v3874 = vmul.f32 %v2923, %v3804
  %v3875 = vmul.f32 %v2922, %v3806
  %v3876 = vmul.f32 %v2923, %v3808
  %v3877 = vmul.f32 %v2922, %v3810
  %v3878 = vmul.f32 %v2923, %v3812
  %v3879 = vmul.f32 %v2922, %v3814
  %v3880 = vmul.f32 %v2923, %v3816
  %3913 = vrot.lane.b32.xlu0 %v3721, 64
  %v3914 = vpop.permute.xlu0 %3913
  %3915 = vrot.lane.b32.xlu0 %v3722, 64
  %v3916 = vpop.permute.xlu0 %3915
  %3917 = vrot.lane.b32.xlu0 %v3723, 64
  %v3918 = vpop.permute.xlu0 %3917
  %3919 = vrot.lane.b32.xlu0 %v3724, 64
  %v3920 = vpop.permute.xlu0 %3919
  %3921 = vrot.lane.b32.xlu0 %v3725, 64
  %v3922 = vpop.permute.xlu0 %3921
  %3923 = vrot.lane.b32.xlu0 %v3726, 64
  %v3924 = vpop.permute.xlu0 %3923
  %3925 = vrot.lane.b32.xlu0 %v3727, 64
  %v3926 = vpop.permute.xlu0 %3925
  %3927 = vrot.lane.b32.xlu0 %v3728, 64
  %v3928 = vpop.permute.xlu0 %3927
  %3929 = vrot.lane.b32.xlu0 %v3729, 64
  %v3930 = vpop.permute.xlu0 %3929
  %3931 = vrot.lane.b32.xlu0 %v3730, 64
  %v3932 = vpop.permute.xlu0 %3931
  %3933 = vrot.lane.b32.xlu0 %v3731, 64
  %v3934 = vpop.permute.xlu0 %3933
  %3935 = vrot.lane.b32.xlu0 %v3732, 64
  %v3936 = vpop.permute.xlu0 %3935
  %3937 = vrot.lane.b32.xlu0 %v3733, 64
  %v3938 = vpop.permute.xlu0 %3937
  %3939 = vrot.lane.b32.xlu0 %v3734, 64
  %v3940 = vpop.permute.xlu0 %3939
  %3941 = vrot.lane.b32.xlu0 %v3735, 64
  %v3942 = vpop.permute.xlu0 %3941
  %3943 = vrot.lane.b32.xlu0 %v3736, 64
  %v3944 = vpop.permute.xlu0 %3943
  %3945 = vrot.lane.b32.xlu0 %v3737, 64
  %v3946 = vpop.permute.xlu0 %3945
  %3947 = vrot.lane.b32.xlu0 %v3738, 64
  %v3948 = vpop.permute.xlu0 %3947
  %3949 = vrot.lane.b32.xlu0 %v3739, 64
  %v3950 = vpop.permute.xlu0 %3949
  %3951 = vrot.lane.b32.xlu0 %v3740, 64
  %v3952 = vpop.permute.xlu0 %3951
  %3953 = vrot.lane.b32.xlu0 %v3741, 64
  %v3954 = vpop.permute.xlu0 %3953
  %3955 = vrot.lane.b32.xlu0 %v3742, 64
  %v3956 = vpop.permute.xlu0 %3955
  %3957 = vrot.lane.b32.xlu0 %v3743, 64
  %v3958 = vpop.permute.xlu0 %3957
  %3959 = vrot.lane.b32.xlu0 %v3744, 64
  %v3960 = vpop.permute.xlu0 %3959
  %3961 = vrot.lane.b32.xlu0 %v3745, 64
  %v3962 = vpop.permute.xlu0 %3961
  %3963 = vrot.lane.b32.xlu0 %v3746, 64
  %v3964 = vpop.permute.xlu0 %3963
  %3965 = vrot.lane.b32.xlu0 %v3747, 64
  %v3966 = vpop.permute.xlu0 %3965
  %3967 = vrot.lane.b32.xlu0 %v3748, 64
  %v3968 = vpop.permute.xlu0 %3967
  %3969 = vrot.lane.b32.xlu0 %v3749, 64
  %v3970 = vpop.permute.xlu0 %3969
  %3971 = vrot.lane.b32.xlu0 %v3750, 64
  %v3972 = vpop.permute.xlu0 %3971
  %3973 = vrot.lane.b32.xlu0 %v3751, 64
  %v3974 = vpop.permute.xlu0 %3973
  %3975 = vrot.lane.b32.xlu0 %v3752, 64
  %v3976 = vpop.permute.xlu0 %3975
  %v4009 = vmul.f32 %v3849, %v3914
  %v4010 = vmul.f32 %v3850, %v3916
  %v4011 = vmul.f32 %v3851, %v3918
  %v4012 = vmul.f32 %v3852, %v3920
  %v4013 = vmul.f32 %v3853, %v3922
  %v4014 = vmul.f32 %v3854, %v3924
  %v4015 = vmul.f32 %v3855, %v3926
  %v4016 = vmul.f32 %v3856, %v3928
  %v4017 = vmul.f32 %v3857, %v3930
  %v4018 = vmul.f32 %v3858, %v3932
  %v4019 = vmul.f32 %v3859, %v3934
  %v4020 = vmul.f32 %v3860, %v3936
  %v4021 = vmul.f32 %v3861, %v3938
  %v4022 = vmul.f32 %v3862, %v3940
  %v4023 = vmul.f32 %v3863, %v3942
  %v4024 = vmul.f32 %v3864, %v3944
  %v4025 = vmul.f32 %v3865, %v3946
  %v4026 = vmul.f32 %v3866, %v3948
  %v4027 = vmul.f32 %v3867, %v3950
  %v4028 = vmul.f32 %v3868, %v3952
  %v4029 = vmul.f32 %v3869, %v3954
  %v4030 = vmul.f32 %v3870, %v3956
  %v4031 = vmul.f32 %v3871, %v3958
  %v4032 = vmul.f32 %v3872, %v3960
  %v4033 = vmul.f32 %v3873, %v3962
  %v4034 = vmul.f32 %v3874, %v3964
  %v4035 = vmul.f32 %v3875, %v3966
  %v4036 = vmul.f32 %v3876, %v3968
  %v4037 = vmul.f32 %v3877, %v3970
  %v4038 = vmul.f32 %v3878, %v3972
  %v4039 = vmul.f32 %v3879, %v3974
  %v4040 = vmul.f32 %v3880, %v3976
  %v4041 = vsel %vm2512, %v4009, 0.0
  %v4042 = vsel %vm2512, %v4010, 0.0
  %v4043 = vadd.f32 %v4041, %v4042
  %v4044 = vrot.slane %v4043, 4
  %v4045 = vadd.f32 %v4043, %v4044
  %v4046 = vrot.slane %v4045, 2
  %v4047 = vadd.f32 %v4045, %v4046
  %v4048 = vrot.slane %v4047, 1
  %v4049 = vadd.f32 %v4047, %v4048
  %v4050 = vsel %vm2512, %v4011, 0.0
  %v4051 = vsel %vm2512, %v4012, 0.0
  %v4052 = vadd.f32 %v4050, %v4051
  %v4053 = vrot.slane %v4052, 4
  %v4054 = vadd.f32 %v4052, %v4053
  %v4055 = vrot.slane %v4054, 2
  %v4056 = vadd.f32 %v4054, %v4055
  %v4057 = vrot.slane %v4056, 1
  %v4058 = vadd.f32 %v4056, %v4057
  %v4059 = vsel %vm2512, %v4013, 0.0
  %v4060 = vsel %vm2512, %v4014, 0.0
  %v4061 = vadd.f32 %v4059, %v4060
  %v4062 = vrot.slane %v4061, 4
  %v4063 = vadd.f32 %v4061, %v4062
  %v4064 = vrot.slane %v4063, 2
  %v4065 = vadd.f32 %v4063, %v4064
  %v4066 = vrot.slane %v4065, 1
  %v4067 = vadd.f32 %v4065, %v4066
  %v4068 = vsel %vm2512, %v4015, 0.0
  %v4069 = vsel %vm2512, %v4016, 0.0
  %v4070 = vadd.f32 %v4068, %v4069
  %v4071 = vrot.slane %v4070, 4
  %v4072 = vadd.f32 %v4070, %v4071
  %v4073 = vrot.slane %v4072, 2
  %v4074 = vadd.f32 %v4072, %v4073
  %v4075 = vrot.slane %v4074, 1
  %v4076 = vadd.f32 %v4074, %v4075
  %v4077 = vsel %vm2512, %v4017, 0.0
  %v4078 = vsel %vm2512, %v4018, 0.0
  %v4079 = vadd.f32 %v4077, %v4078
  %v4080 = vrot.slane %v4079, 4
  %v4081 = vadd.f32 %v4079, %v4080
  %v4082 = vrot.slane %v4081, 2
  %v4083 = vadd.f32 %v4081, %v4082
  %v4084 = vrot.slane %v4083, 1
  %v4085 = vadd.f32 %v4083, %v4084
  %v4086 = vsel %vm2512, %v4019, 0.0
  %v4087 = vsel %vm2512, %v4020, 0.0
  %v4088 = vadd.f32 %v4086, %v4087
  %v4089 = vrot.slane %v4088, 4
  %v4090 = vadd.f32 %v4088, %v4089
  %v4091 = vrot.slane %v4090, 2
  %v4092 = vadd.f32 %v4090, %v4091
  %v4093 = vrot.slane %v4092, 1
  %v4094 = vadd.f32 %v4092, %v4093
  %v4095 = vsel %vm2512, %v4021, 0.0
  %v4096 = vsel %vm2512, %v4022, 0.0
  %v4097 = vadd.f32 %v4095, %v4096
  %v4098 = vrot.slane %v4097, 4
  %v4099 = vadd.f32 %v4097, %v4098
  %v4100 = vrot.slane %v4099, 2
  %v4101 = vadd.f32 %v4099, %v4100
  %v4102 = vrot.slane %v4101, 1
  %v4103 = vadd.f32 %v4101, %v4102
  %v4104 = vsel %vm2512, %v4023, 0.0
  %v4105 = vsel %vm2512, %v4024, 0.0
  %v4106 = vadd.f32 %v4104, %v4105
  %v4107 = vrot.slane %v4106, 4
  %v4108 = vadd.f32 %v4106, %v4107
  %v4109 = vrot.slane %v4108, 2
  %v4110 = vadd.f32 %v4108, %v4109
  %v4111 = vrot.slane %v4110, 1
  %v4112 = vadd.f32 %v4110, %v4111
  %v4113 = vsel %vm2512, %v4025, 0.0
  %v4114 = vsel %vm2512, %v4026, 0.0
  %v4115 = vadd.f32 %v4113, %v4114
  %v4116 = vrot.slane %v4115, 4
  %v4117 = vadd.f32 %v4115, %v4116
  %v4118 = vrot.slane %v4117, 2
  %v4119 = vadd.f32 %v4117, %v4118
  %v4120 = vrot.slane %v4119, 1
  %v4121 = vadd.f32 %v4119, %v4120
  %v4122 = vsel %vm2512, %v4027, 0.0
  %v4123 = vsel %vm2512, %v4028, 0.0
  %v4124 = vadd.f32 %v4122, %v4123
  %v4125 = vrot.slane %v4124, 4
  %v4126 = vadd.f32 %v4124, %v4125
  %v4127 = vrot.slane %v4126, 2
  %v4128 = vadd.f32 %v4126, %v4127
  %v4129 = vrot.slane %v4128, 1
  %v4130 = vadd.f32 %v4128, %v4129
  %v4131 = vsel %vm2512, %v4029, 0.0
  %v4132 = vsel %vm2512, %v4030, 0.0
  %v4133 = vadd.f32 %v4131, %v4132
  %v4134 = vrot.slane %v4133, 4
  %v4135 = vadd.f32 %v4133, %v4134
  %v4136 = vrot.slane %v4135, 2
  %v4137 = vadd.f32 %v4135, %v4136
  %v4138 = vrot.slane %v4137, 1
  %v4139 = vadd.f32 %v4137, %v4138
  %v4140 = vsel %vm2512, %v4031, 0.0
  %v4141 = vsel %vm2512, %v4032, 0.0
  %v4142 = vadd.f32 %v4140, %v4141
  %v4143 = vrot.slane %v4142, 4
  %v4144 = vadd.f32 %v4142, %v4143
  %v4145 = vrot.slane %v4144, 2
  %v4146 = vadd.f32 %v4144, %v4145
  %v4147 = vrot.slane %v4146, 1
  %v4148 = vadd.f32 %v4146, %v4147
  %v4149 = vsel %vm2512, %v4033, 0.0
  %v4150 = vsel %vm2512, %v4034, 0.0
  %v4151 = vadd.f32 %v4149, %v4150
  %v4152 = vrot.slane %v4151, 4
  %v4153 = vadd.f32 %v4151, %v4152
  %v4154 = vrot.slane %v4153, 2
  %v4155 = vadd.f32 %v4153, %v4154
  %v4156 = vrot.slane %v4155, 1
  %v4157 = vadd.f32 %v4155, %v4156
  %v4158 = vsel %vm2512, %v4035, 0.0
  %v4159 = vsel %vm2512, %v4036, 0.0
  %v4160 = vadd.f32 %v4158, %v4159
  %v4161 = vrot.slane %v4160, 4
  %v4162 = vadd.f32 %v4160, %v4161
  %v4163 = vrot.slane %v4162, 2
  %v4164 = vadd.f32 %v4162, %v4163
  %v4165 = vrot.slane %v4164, 1
  %v4166 = vadd.f32 %v4164, %v4165
  %v4167 = vsel %vm2512, %v4037, 0.0
  %v4168 = vsel %vm2512, %v4038, 0.0
  %v4169 = vadd.f32 %v4167, %v4168
  %v4170 = vrot.slane %v4169, 4
  %v4171 = vadd.f32 %v4169, %v4170
  %v4172 = vrot.slane %v4171, 2
  %v4173 = vadd.f32 %v4171, %v4172
  %v4174 = vrot.slane %v4173, 1
  %v4175 = vadd.f32 %v4173, %v4174
  %v4176 = vsel %vm2512, %v4039, 0.0
  %v4177 = vsel %vm2512, %v4040, 0.0
  %v4178 = vadd.f32 %v4176, %v4177
  %v4179 = vrot.slane %v4178, 4
  %v4180 = vadd.f32 %v4178, %v4179
  %v4181 = vrot.slane %v4180, 2
  %v4182 = vadd.f32 %v4180, %v4181
  %v4183 = vrot.slane %v4182, 1
  %v4184 = vadd.f32 %v4182, %v4183
  %v4185 = vpack.c.bf16 %v4049, %v4049
  %v4186 = vpack.c.bf16 %v4058, %v4058
  %v4187 = vpack.c.bf16 %v4067, %v4067
  %v4188 = vpack.c.bf16 %v4076, %v4076
  %v4189 = vpack.c.bf16 %v4085, %v4085
  %v4190 = vpack.c.bf16 %v4094, %v4094
  %v4191 = vpack.c.bf16 %v4103, %v4103
  %v4192 = vpack.c.bf16 %v4112, %v4112
  %v4193 = vpack.c.bf16 %v4121, %v4121
  %v4194 = vpack.c.bf16 %v4130, %v4130
  %v4195 = vpack.c.bf16 %v4139, %v4139
  %v4196 = vpack.c.bf16 %v4148, %v4148
  %v4197 = vpack.c.bf16 %v4157, %v4157
  %v4198 = vpack.c.bf16 %v4166, %v4166
  %v4199 = vpack.c.bf16 %v4175, %v4175
  %v4200 = vpack.c.bf16 %v4184, %v4184
  %v4201 = vlaneseq
  %v4202 = vshrl.u32 %v4201, 7
  %v4203 = vsub.s32 3, %v4202
  %v4204 = vrot.slane %v2802, %v4203
  %v4221 = vunpack.c.l.b16 %v4185
  %v4222 = vunpack.c.l.b16 %v4186
  %v4223 = vunpack.c.l.b16 %v4187
  %v4224 = vunpack.c.l.b16 %v4188
  %v4225 = vunpack.c.l.b16 %v4189
  %v4226 = vunpack.c.l.b16 %v4190
  %v4227 = vunpack.c.l.b16 %v4191
  %v4228 = vunpack.c.l.b16 %v4192
  %v4229 = vunpack.c.l.b16 %v4193
  %v4230 = vunpack.c.l.b16 %v4194
  %v4231 = vunpack.c.l.b16 %v4195
  %v4232 = vunpack.c.l.b16 %v4196
  %v4233 = vunpack.c.l.b16 %v4197
  %v4234 = vunpack.c.l.b16 %v4198
  %v4235 = vunpack.c.l.b16 %v4199
  %v4236 = vunpack.c.l.b16 %v4200
  %v4237 = vsel %vm2709, %v4222, %v4221
  %v4238 = vsel %vm2711, %v4223, %v4237
  %v4239 = vsel %vm2713, %v4224, %v4238
  %v4240 = vsel %vm2715, %v4225, %v4239
  %v4241 = vsel %vm2717, %v4226, %v4240
  %v4242 = vsel %vm2719, %v4227, %v4241
  %v4243 = vsel %vm2721, %v4228, %v4242
  %v4244 = vsel %vm2709, %v4230, %v4229
  %v4245 = vsel %vm2711, %v4231, %v4244
  %v4246 = vsel %vm2713, %v4232, %v4245
  %v4247 = vsel %vm2715, %v4233, %v4246
  %v4248 = vsel %vm2717, %v4234, %v4247
  %v4249 = vsel %vm2719, %v4235, %v4248
  %v4250 = vsel %vm2721, %v4236, %v4249
  %v4251 = vpack.c.b16 %v4250, %v4243
  %4252 = vrot.lane.b32.xlu0 %v4251, 64
  %v4253 = vpop.permute.xlu0 %4252
  %v4258 = vunpack.c.l.b16 %v2797
  %v4259 = vunpack.c.l.b16 %v2798
  %v4260 = vunpack.c.l.b16 %v2799
  %v4261 = vunpack.c.l.b16 %v2800
  %v4262 = vpack.c.b16 %v4259, %v4258
  %v4263 = vpack.c.b16 %v4261, %v4260
  %v4267 = vsel %vm464, %v4253, 0
  %4269 = vmatprep.subr.bf16.mxu0 0
  %4270 = vmatpush1.bf16.msra.mxu0 0
  %4271 = vmatprep.subr.bf16.mxu0 0
  %4272 = vmatpush1.bf16.msra.mxu0 0
  %4273 = vmatprep.subr.bf16.mxu0 0
  %4274 = vmatpush1.bf16.msra.mxu0 0
  %4275 = vmatprep.subr.bf16.mxu0 0
  %4276 = vmatpush1.bf16.msra.mxu0 0
  %4277 = vmatprep.subr.bf16.mxu0 0
  %4278 = vmatpush1.bf16.msra.mxu0 0
  %4279 = vmatprep.subr.bf16.mxu0 0
  %4280 = vmatpush1.bf16.msra.mxu0 0
  %4281 = vmatprep.subr.bf16.mxu0 0
  %4282 = vmatpush1.bf16.msra.mxu0 %v4263
  %4283 = vmatprep.subr.bf16.mxu0 0
  %4284 = vmatpush1.bf16.msra.mxu0 %v4262
  %4285 = vmatprep.subr.bf16.mxu0 0
  %4286 = vmatpush2.bf16.msra.mxu0 0
  %4287 = vmatprep.subr.bf16.mxu0 0
  %4288 = vmatpush2.bf16.msra.mxu0 0
  %4289 = vmatprep.subr.bf16.mxu0 0
  %4290 = vmatpush2.bf16.msra.mxu0 0
  %4291 = vmatprep.subr.bf16.mxu0 0
  %4292 = vmatpush2.bf16.msra.mxu0 0
  %4293 = vmatprep.subr.bf16.mxu0 0
  %4294 = vmatpush2.bf16.msra.mxu0 0
  %4295 = vmatprep.subr.bf16.mxu0 0
  %4296 = vmatpush2.bf16.msra.mxu0 0
  %4297 = vmatprep.subr.bf16.mxu0 0
  %4298 = vmatpush2.bf16.msra.mxu0 0
  %4299 = vmatprep.subr.bf16.mxu0 0
  %4300 = vmatpush2.bf16.msra.mxu0 0
  %4301 = vmatprep.mubr.bf16.mxu0 0
  %4302 = vmatmul.mubr.bf16.gmra.mxu0 %v4267
  %v4303 = vpop.f32.mrf.mxu0
  %v4304 = vadd.f32 %v4204, %v4303
  %v4305 = vpop.f32.mrf.mxu0
  %v4306 = vpop.f32.mrf.mxu0
  %v4307 = vadd.f32 %v4204, %v4306
  %v4308 = vpop.f32.mrf.mxu0
  %4309 = vdwg.mxu0
  %v4310 = vadd.f32 %v2789, %v4304
  %v4311 = vadd.f32 %v2790, %v4307
  %s4312 = scalar_lea.vmem %s6, 32
  %v4313 = vld [vmem:[%s4312] sm:$0xf]
  %v4314 = vld [vmem:[%s4312 + $0x4] sm:$0xf]
  %v4315 = vld [vmem:[%s4312 + $0x8] sm:$0xf]
  %v4316 = vld [vmem:[%s4312 + $0xc] sm:$0xf]
  %s4317 = scalar_lea.vmem %s7, 32
  %v4318 = vld [vmem:[%s4317] sm:$0xf]
  %v4319 = vld [vmem:[%s4317 + $0x4] sm:$0xf]
  %v4320 = vld [vmem:[%s4317 + $0x8] sm:$0xf]
  %v4321 = vld [vmem:[%s4317 + $0xc] sm:$0xf]
  %s4322 = scalar_lea.vmem %s10, 16
  %v4323 = vld [vmem:[%s4322] sm:$0xff]
  %v4324 = vsel %vm464, %v4310, 0.0
  %4325 = vadd.xlane.f32.xlu0 %v4324
  %v4326 = vpop.xlane.xlu0 %4325
  %v4327 = vsel %vm464, %v4311, 0.0
  %4328 = vadd.xlane.f32.xlu0 %v4327
  %v4329 = vpop.xlane.xlu0 %4328
  %v4330 = vmul.f32 %v4326, %v1363
  %v4331 = vmul.f32 %v4329, %v1363
  %v4332 = vsub.f32 %v4310, %v4330
  %v4333 = vsub.f32 %v4311, %v4331
  %v4334 = vmul.f32 %v4332, %v4332
  %v4335 = vmul.f32 %v4333, %v4333
  %v4336 = vsel %vm464, %v4334, 0.0
  %4337 = vadd.xlane.f32.xlu0 %v4336
  %v4338 = vpop.xlane.xlu0 %4337
  %v4339 = vsel %vm464, %v4335, 0.0
  %4340 = vadd.xlane.f32.xlu0 %v4339
  %v4341 = vpop.xlane.xlu0 %4340
  %v4342 = vmul.f32 %v4338, %v1363
  %v4343 = vmul.f32 %v4341, %v1363
  %v4344 = vadd.f32 %v4342, 1e-05
  %v4345 = vadd.f32 %v4343, 1e-05
  %v4346 = vrsqrt.pop %v4344
  %v4347 = vrsqrt.pop %v4345
  %v4348 = vmul.f32 %v4332, %v4346
  %v4349 = vmul.f32 %v4333, %v4347
  %v4350 = vlaneseq
  %v4351 = vshrl.u32 %v4350, 7
  %v4352 = vsub.s32 4, %v4351
  %v4353 = vrot.slane %v4323, %v4352
  %v4354 = vmul.f32 %v4348, %v4353
  %v4355 = vmul.f32 %v4349, %v4353
  %v4356 = vlaneseq
  %v4357 = vshrl.u32 %v4356, 7
  %v4358 = vsub.s32 5, %v4357
  %v4359 = vrot.slane %v4323, %v4358
  %v4360 = vadd.f32 %v4354, %v4359
  %v4361 = vadd.f32 %v4355, %v4359
  %v4362 = vpack.c.bf16 %v4361, %v4360
  %v4367 = vunpack.c.l.b16 %v4313
  %v4368 = vunpack.c.l.b16 %v4314
  %v4369 = vunpack.c.l.b16 %v4315
  %v4370 = vunpack.c.l.b16 %v4316
  %v4371 = vpack.c.b16 %v4368, %v4367
  %v4372 = vpack.c.b16 %v4370, %v4369
  %v4376 = vsel %vm464, %v4362, 0
  %4378 = vmatprep.subr.bf16.mxu0 0
  %4379 = vmatpush1.bf16.msra.mxu0 0
  %4380 = vmatprep.subr.bf16.mxu0 0
  %4381 = vmatpush1.bf16.msra.mxu0 0
  %4382 = vmatprep.subr.bf16.mxu0 0
  %4383 = vmatpush1.bf16.msra.mxu0 0
  %4384 = vmatprep.subr.bf16.mxu0 0
  %4385 = vmatpush1.bf16.msra.mxu0 0
  %4386 = vmatprep.subr.bf16.mxu0 0
  %4387 = vmatpush1.bf16.msra.mxu0 0
  %4388 = vmatprep.subr.bf16.mxu0 0
  %4389 = vmatpush1.bf16.msra.mxu0 0
  %4390 = vmatprep.subr.bf16.mxu0 0
  %4391 = vmatpush1.bf16.msra.mxu0 %v4372
  %4392 = vmatprep.subr.bf16.mxu0 0
  %4393 = vmatpush1.bf16.msra.mxu0 %v4371
  %4394 = vmatprep.subr.bf16.mxu0 0
  %4395 = vmatpush2.bf16.msra.mxu0 0
  %4396 = vmatprep.subr.bf16.mxu0 0
  %4397 = vmatpush2.bf16.msra.mxu0 0
  %4398 = vmatprep.subr.bf16.mxu0 0
  %4399 = vmatpush2.bf16.msra.mxu0 0
  %4400 = vmatprep.subr.bf16.mxu0 0
  %4401 = vmatpush2.bf16.msra.mxu0 0
  %4402 = vmatprep.subr.bf16.mxu0 0
  %4403 = vmatpush2.bf16.msra.mxu0 0
  %4404 = vmatprep.subr.bf16.mxu0 0
  %4405 = vmatpush2.bf16.msra.mxu0 0
  %4406 = vmatprep.subr.bf16.mxu0 0
  %4407 = vmatpush2.bf16.msra.mxu0 0
  %4408 = vmatprep.subr.bf16.mxu0 0
  %4409 = vmatpush2.bf16.msra.mxu0 0
  %4410 = vmatprep.mubr.bf16.mxu0 0
  %4411 = vmatmul.mubr.bf16.gmra.mxu0 %v4376
  %v4412 = vpop.f32.mrf.mxu0
  %v4413 = vadd.f32 0.0, %v4412
  %v4414 = vpop.f32.mrf.mxu0
  %v4415 = vpop.f32.mrf.mxu0
  %v4416 = vadd.f32 0.0, %v4415
  %v4417 = vpop.f32.mrf.mxu0
  %4418 = vdwg.mxu0
  %v4419 = vlaneseq
  %v4420 = vshrl.u32 %v4419, 7
  %v4421 = vsub.s32 0, %v4420
  %v4422 = vrot.slane %v4323, %v4421
  %v4423 = vadd.f32 %v4413, %v4422
  %v4424 = vadd.f32 %v4416, %v4422
  %v4425 = vlaneseq
  %v4426 = vshrl.u32 %v4425, 7
  %v4427 = vsub.s32 1, %v4426
  %v4428 = vrot.slane %v4323, %v4427
  %4430 = vrot.lane.b32.xlu0 %v4428, 32
  %v4431 = vpop.permute.xlu0 %4430
  %v4433 = vadd.f32 %v4413, %v4431
  %v4434 = vadd.f32 %v4416, %v4431
  %v4435 = vlaneseq
  %v4436 = vshrl.u32 %v4435, 7
  %v4437 = vsub.s32 2, %v4436
  %v4438 = vrot.slane %v4323, %v4437
  %4440 = vrot.lane.b32.xlu0 %v4438, 64
  %v4441 = vpop.permute.xlu0 %4440
  %v4443 = vadd.f32 %v4413, %v4441
  %v4444 = vadd.f32 %v4416, %v4441
  %v4447 = vcombine.high %v4423, %v4423
  %v4449 = vunpack.c.l.s4 1966171168
  %v4450 = vunpack.c.0.s8 %v4449
  %v4451 = vlaneseq
  %v4452 = vshrl.u32 %v4451, 7
  %v4453 = vsub.s32 %v4450, %v4452
  %v4454 = vrot.slane %v4423, %v4453
  %v4456 = vunpack.c.l.s4 1966171168
  %v4457 = vunpack.c.0.s8 %v4456
  %v4458 = vlaneseq
  %v4459 = vshrl.u32 %v4458, 7
  %v4460 = vsub.s32 %v4457, %v4459
  %v4461 = vrot.slane %v4447, %v4460
  %v4462 = vcombine.high %v4454, %v4454
  %v4463 = vcombine.high %v4461, %v4461
  %v4465 = vunpack.c.l.s4 1966171168
  %v4466 = vunpack.c.0.s8 %v4465
  %v4467 = vlaneseq
  %v4468 = vshrl.u32 %v4467, 7
  %v4469 = vsub.s32 %v4466, %v4468
  %v4470 = vrot.slane %v4454, %v4469
  %v4472 = vunpack.c.l.s4 1966171168
  %v4473 = vunpack.c.0.s8 %v4472
  %v4474 = vlaneseq
  %v4475 = vshrl.u32 %v4474, 7
  %v4476 = vsub.s32 %v4473, %v4475
  %v4477 = vrot.slane %v4461, %v4476
  %v4479 = vunpack.c.l.s4 1966171168
  %v4480 = vunpack.c.0.s8 %v4479
  %v4481 = vlaneseq
  %v4482 = vshrl.u32 %v4481, 7
  %v4483 = vsub.s32 %v4480, %v4482
  %v4484 = vrot.slane %v4462, %v4483
  %v4486 = vunpack.c.l.s4 1966171168
  %v4487 = vunpack.c.0.s8 %v4486
  %v4488 = vlaneseq
  %v4489 = vshrl.u32 %v4488, 7
  %v4490 = vsub.s32 %v4487, %v4489
  %v4491 = vrot.slane %v4463, %v4490
  %v4492 = vcombine.high %v4470, %v4470
  %v4493 = vcombine.high %v4477, %v4477
  %v4494 = vcombine.high %v4484, %v4484
  %v4495 = vcombine.high %v4491, %v4491
  %v4496 = vcombine.high %v4424, %v4424
  %v4498 = vunpack.c.l.s4 1966171168
  %v4499 = vunpack.c.0.s8 %v4498
  %v4500 = vlaneseq
  %v4501 = vshrl.u32 %v4500, 7
  %v4502 = vsub.s32 %v4499, %v4501
  %v4503 = vrot.slane %v4424, %v4502
  %v4505 = vunpack.c.l.s4 1966171168
  %v4506 = vunpack.c.0.s8 %v4505
  %v4507 = vlaneseq
  %v4508 = vshrl.u32 %v4507, 7
  %v4509 = vsub.s32 %v4506, %v4508
  %v4510 = vrot.slane %v4496, %v4509
  %v4511 = vcombine.high %v4503, %v4503
  %v4512 = vcombine.high %v4510, %v4510
  %v4514 = vunpack.c.l.s4 1966171168
  %v4515 = vunpack.c.0.s8 %v4514
  %v4516 = vlaneseq
  %v4517 = vshrl.u32 %v4516, 7
  %v4518 = vsub.s32 %v4515, %v4517
  %v4519 = vrot.slane %v4503, %v4518
  %v4521 = vunpack.c.l.s4 1966171168
  %v4522 = vunpack.c.0.s8 %v4521
  %v4523 = vlaneseq
  %v4524 = vshrl.u32 %v4523, 7
  %v4525 = vsub.s32 %v4522, %v4524
  %v4526 = vrot.slane %v4510, %v4525
  %v4528 = vunpack.c.l.s4 1966171168
  %v4529 = vunpack.c.0.s8 %v4528
  %v4530 = vlaneseq
  %v4531 = vshrl.u32 %v4530, 7
  %v4532 = vsub.s32 %v4529, %v4531
  %v4533 = vrot.slane %v4511, %v4532
  %v4535 = vunpack.c.l.s4 1966171168
  %v4536 = vunpack.c.0.s8 %v4535
  %v4537 = vlaneseq
  %v4538 = vshrl.u32 %v4537, 7
  %v4539 = vsub.s32 %v4536, %v4538
  %v4540 = vrot.slane %v4512, %v4539
  %v4541 = vcombine.high %v4519, %v4519
  %v4542 = vcombine.high %v4526, %v4526
  %v4543 = vcombine.high %v4533, %v4533
  %v4544 = vcombine.high %v4540, %v4540
  %v4545 = vlaneseq
  %v4546 = vshrl.u32 %v4545, 7
  %v4547 = vsub.s32 0, %v4546
  %v4548 = vrot.slane %v4470, %v4547
  %v4549 = vlaneseq
  %v4550 = vshrl.u32 %v4549, 7
  %v4551 = vsub.s32 0, %v4550
  %v4552 = vrot.slane %v4484, %v4551
  %v4553 = vlaneseq
  %v4554 = vshrl.u32 %v4553, 7
  %v4555 = vsub.s32 0, %v4554
  %v4556 = vrot.slane %v4492, %v4555
  %v4557 = vlaneseq
  %v4558 = vshrl.u32 %v4557, 7
  %v4559 = vsub.s32 0, %v4558
  %v4560 = vrot.slane %v4494, %v4559
  %v4561 = vlaneseq
  %v4562 = vshrl.u32 %v4561, 7
  %v4563 = vsub.s32 0, %v4562
  %v4564 = vrot.slane %v4477, %v4563
  %v4565 = vlaneseq
  %v4566 = vshrl.u32 %v4565, 7
  %v4567 = vsub.s32 0, %v4566
  %v4568 = vrot.slane %v4491, %v4567
  %v4569 = vlaneseq
  %v4570 = vshrl.u32 %v4569, 7
  %v4571 = vsub.s32 0, %v4570
  %v4572 = vrot.slane %v4493, %v4571
  %v4573 = vlaneseq
  %v4574 = vshrl.u32 %v4573, 7
  %v4575 = vsub.s32 0, %v4574
  %v4576 = vrot.slane %v4495, %v4575
  %v4577 = vlaneseq
  %v4578 = vshrl.u32 %v4577, 7
  %v4579 = vsub.s32 0, %v4578
  %v4580 = vrot.slane %v4519, %v4579
  %v4581 = vlaneseq
  %v4582 = vshrl.u32 %v4581, 7
  %v4583 = vsub.s32 0, %v4582
  %v4584 = vrot.slane %v4533, %v4583
  %v4585 = vlaneseq
  %v4586 = vshrl.u32 %v4585, 7
  %v4587 = vsub.s32 0, %v4586
  %v4588 = vrot.slane %v4541, %v4587
  %v4589 = vlaneseq
  %v4590 = vshrl.u32 %v4589, 7
  %v4591 = vsub.s32 0, %v4590
  %v4592 = vrot.slane %v4543, %v4591
  %v4593 = vlaneseq
  %v4594 = vshrl.u32 %v4593, 7
  %v4595 = vsub.s32 0, %v4594
  %v4596 = vrot.slane %v4526, %v4595
  %v4597 = vlaneseq
  %v4598 = vshrl.u32 %v4597, 7
  %v4599 = vsub.s32 0, %v4598
  %v4600 = vrot.slane %v4540, %v4599
  %v4601 = vlaneseq
  %v4602 = vshrl.u32 %v4601, 7
  %v4603 = vsub.s32 0, %v4602
  %v4604 = vrot.slane %v4542, %v4603
  %v4605 = vlaneseq
  %v4606 = vshrl.u32 %v4605, 7
  %v4607 = vsub.s32 0, %v4606
  %v4608 = vrot.slane %v4544, %v4607
  %4627 = vrot.lane.b32.xlu0 %v4433, 96
  %v4628 = vpop.permute.xlu0 %4627
  %4629 = vrot.lane.b32.xlu0 %v4434, 96
  %v4630 = vpop.permute.xlu0 %4629
  %v4633 = vmul.f32 %v4548, %v4628
  %v4634 = vmul.f32 %v4548, %v4630
  %v4635 = vmul.f32 %v4552, %v4628
  %v4636 = vmul.f32 %v4552, %v4630
  %v4637 = vmul.f32 %v4556, %v4628
  %v4638 = vmul.f32 %v4556, %v4630
  %v4639 = vmul.f32 %v4560, %v4628
  %v4640 = vmul.f32 %v4560, %v4630
  %v4641 = vmul.f32 %v4564, %v4628
  %v4642 = vmul.f32 %v4564, %v4630
  %v4643 = vmul.f32 %v4568, %v4628
  %v4644 = vmul.f32 %v4568, %v4630
  %v4645 = vmul.f32 %v4572, %v4628
  %v4646 = vmul.f32 %v4572, %v4630
  %v4647 = vmul.f32 %v4576, %v4628
  %v4648 = vmul.f32 %v4576, %v4630
  %v4649 = vmul.f32 %v4580, %v4628
  %v4650 = vmul.f32 %v4580, %v4630
  %v4651 = vmul.f32 %v4584, %v4628
  %v4652 = vmul.f32 %v4584, %v4630
  %v4653 = vmul.f32 %v4588, %v4628
  %v4654 = vmul.f32 %v4588, %v4630
  %v4655 = vmul.f32 %v4592, %v4628
  %v4656 = vmul.f32 %v4592, %v4630
  %v4657 = vmul.f32 %v4596, %v4628
  %v4658 = vmul.f32 %v4596, %v4630
  %v4659 = vmul.f32 %v4600, %v4628
  %v4660 = vmul.f32 %v4600, %v4630
  %v4661 = vmul.f32 %v4604, %v4628
  %v4662 = vmul.f32 %v4604, %v4630
  %v4663 = vmul.f32 %v4608, %v4628
  %v4664 = vmul.f32 %v4608, %v4630
  %4665 = vrot.lane.b32.xlu0 %v1090, 64
  %v4666 = vpop.permute.xlu0 %4665
  %4667 = vrot.lane.b32.xlu0 %v1092, 64
  %v4668 = vpop.permute.xlu0 %4667
  %4669 = vrot.lane.b32.xlu0 %v1094, 64
  %v4670 = vpop.permute.xlu0 %4669
  %4671 = vrot.lane.b32.xlu0 %v1096, 64
  %v4672 = vpop.permute.xlu0 %4671
  %4673 = vrot.lane.b32.xlu0 %v1098, 64
  %v4674 = vpop.permute.xlu0 %4673
  %4675 = vrot.lane.b32.xlu0 %v1100, 64
  %v4676 = vpop.permute.xlu0 %4675
  %4677 = vrot.lane.b32.xlu0 %v1102, 64
  %v4678 = vpop.permute.xlu0 %4677
  %4679 = vrot.lane.b32.xlu0 %v1104, 64
  %v4680 = vpop.permute.xlu0 %4679
  %4681 = vrot.lane.b32.xlu0 %v1106, 64
  %v4682 = vpop.permute.xlu0 %4681
  %4683 = vrot.lane.b32.xlu0 %v1108, 64
  %v4684 = vpop.permute.xlu0 %4683
  %4685 = vrot.lane.b32.xlu0 %v1110, 64
  %v4686 = vpop.permute.xlu0 %4685
  %4687 = vrot.lane.b32.xlu0 %v1112, 64
  %v4688 = vpop.permute.xlu0 %4687
  %4689 = vrot.lane.b32.xlu0 %v1114, 64
  %v4690 = vpop.permute.xlu0 %4689
  %4691 = vrot.lane.b32.xlu0 %v1116, 64
  %v4692 = vpop.permute.xlu0 %4691
  %4693 = vrot.lane.b32.xlu0 %v1118, 64
  %v4694 = vpop.permute.xlu0 %4693
  %4695 = vrot.lane.b32.xlu0 %v1120, 64
  %v4696 = vpop.permute.xlu0 %4695
  %4697 = vrot.lane.b32.xlu0 %v1122, 64
  %v4698 = vpop.permute.xlu0 %4697
  %4699 = vrot.lane.b32.xlu0 %v1124, 64
  %v4700 = vpop.permute.xlu0 %4699
  %4701 = vrot.lane.b32.xlu0 %v1126, 64
  %v4702 = vpop.permute.xlu0 %4701
  %4703 = vrot.lane.b32.xlu0 %v1128, 64
  %v4704 = vpop.permute.xlu0 %4703
  %4705 = vrot.lane.b32.xlu0 %v1130, 64
  %v4706 = vpop.permute.xlu0 %4705
  %4707 = vrot.lane.b32.xlu0 %v1132, 64
  %v4708 = vpop.permute.xlu0 %4707
  %4709 = vrot.lane.b32.xlu0 %v1134, 64
  %v4710 = vpop.permute.xlu0 %4709
  %4711 = vrot.lane.b32.xlu0 %v1136, 64
  %v4712 = vpop.permute.xlu0 %4711
  %4713 = vrot.lane.b32.xlu0 %v1138, 64
  %v4714 = vpop.permute.xlu0 %4713
  %4715 = vrot.lane.b32.xlu0 %v1140, 64
  %v4716 = vpop.permute.xlu0 %4715
  %4717 = vrot.lane.b32.xlu0 %v1142, 64
  %v4718 = vpop.permute.xlu0 %4717
  %4719 = vrot.lane.b32.xlu0 %v1144, 64
  %v4720 = vpop.permute.xlu0 %4719
  %4721 = vrot.lane.b32.xlu0 %v1146, 64
  %v4722 = vpop.permute.xlu0 %4721
  %4723 = vrot.lane.b32.xlu0 %v1148, 64
  %v4724 = vpop.permute.xlu0 %4723
  %4725 = vrot.lane.b32.xlu0 %v1150, 64
  %v4726 = vpop.permute.xlu0 %4725
  %4727 = vrot.lane.b32.xlu0 %v1152, 64
  %v4728 = vpop.permute.xlu0 %4727
  %v4761 = vmul.f32 %v4633, %v4666
  %v4762 = vmul.f32 %v4634, %v4668
  %v4763 = vmul.f32 %v4635, %v4670
  %v4764 = vmul.f32 %v4636, %v4672
  %v4765 = vmul.f32 %v4637, %v4674
  %v4766 = vmul.f32 %v4638, %v4676
  %v4767 = vmul.f32 %v4639, %v4678
  %v4768 = vmul.f32 %v4640, %v4680
  %v4769 = vmul.f32 %v4641, %v4682
  %v4770 = vmul.f32 %v4642, %v4684
  %v4771 = vmul.f32 %v4643, %v4686
  %v4772 = vmul.f32 %v4644, %v4688
  %v4773 = vmul.f32 %v4645, %v4690
  %v4774 = vmul.f32 %v4646, %v4692
  %v4775 = vmul.f32 %v4647, %v4694
  %v4776 = vmul.f32 %v4648, %v4696
  %v4777 = vmul.f32 %v4649, %v4698
  %v4778 = vmul.f32 %v4650, %v4700
  %v4779 = vmul.f32 %v4651, %v4702
  %v4780 = vmul.f32 %v4652, %v4704
  %v4781 = vmul.f32 %v4653, %v4706
  %v4782 = vmul.f32 %v4654, %v4708
  %v4783 = vmul.f32 %v4655, %v4710
  %v4784 = vmul.f32 %v4656, %v4712
  %v4785 = vmul.f32 %v4657, %v4714
  %v4786 = vmul.f32 %v4658, %v4716
  %v4787 = vmul.f32 %v4659, %v4718
  %v4788 = vmul.f32 %v4660, %v4720
  %v4789 = vmul.f32 %v4661, %v4722
  %v4790 = vmul.f32 %v4662, %v4724
  %v4791 = vmul.f32 %v4663, %v4726
  %v4792 = vmul.f32 %v4664, %v4728
  %v4793 = vpack.c.bf16 %v4762, %v4761
  %v4794 = vpack.c.bf16 %v4764, %v4763
  %v4795 = vpack.c.bf16 %v4766, %v4765
  %v4796 = vpack.c.bf16 %v4768, %v4767
  %v4797 = vpack.c.bf16 %v4770, %v4769
  %v4798 = vpack.c.bf16 %v4772, %v4771
  %v4799 = vpack.c.bf16 %v4774, %v4773
  %v4800 = vpack.c.bf16 %v4776, %v4775
  %v4801 = vpack.c.bf16 %v4778, %v4777
  %v4802 = vpack.c.bf16 %v4780, %v4779
  %v4803 = vpack.c.bf16 %v4782, %v4781
  %v4804 = vpack.c.bf16 %v4784, %v4783
  %v4805 = vpack.c.bf16 %v4786, %v4785
  %v4806 = vpack.c.bf16 %v4788, %v4787
  %v4807 = vpack.c.bf16 %v4790, %v4789
  %v4808 = vpack.c.bf16 %v4792, %v4791
  %v4810 = vsel %vm464, %v4793, 0
  %v4813 = vsel %vm464, %v4794, 0
  %v4816 = vsel %vm464, %v4795, 0
  %v4819 = vsel %vm464, %v4796, 0
  %v4822 = vsel %vm464, %v4797, 0
  %v4825 = vsel %vm464, %v4798, 0
  %v4828 = vsel %vm464, %v4799, 0
  %v4831 = vsel %vm464, %v4800, 0
  %v4834 = vsel %vm464, %v4801, 0
  %v4837 = vsel %vm464, %v4802, 0
  %v4840 = vsel %vm464, %v4803, 0
  %v4843 = vsel %vm464, %v4804, 0
  %v4846 = vsel %vm464, %v4805, 0
  %v4849 = vsel %vm464, %v4806, 0
  %v4852 = vsel %vm464, %v4807, 0
  %v4855 = vsel %vm464, %v4808, 0
  %4857 = vmatprep.subr.bf16.mxu0 0
  %4858 = vmatpush1.bf16.msra.mxu0 0
  %4859 = vmatprep.subr.bf16.mxu0 0
  %4860 = vmatpush1.bf16.msra.mxu0 0
  %4861 = vmatprep.subr.bf16.mxu0 0
  %4862 = vmatpush1.bf16.msra.mxu0 0
  %4863 = vmatprep.subr.bf16.mxu0 0
  %4864 = vmatpush1.bf16.msra.mxu0 0
  %4865 = vmatprep.subr.bf16.mxu0 0
  %4866 = vmatpush1.bf16.msra.mxu0 0
  %4867 = vmatprep.subr.bf16.mxu0 0
  %4868 = vmatpush1.bf16.msra.mxu0 0
  %4869 = vmatprep.subr.bf16.mxu0 0
  %4870 = vmatpush1.bf16.msra.mxu0 %v1756
  %4871 = vmatprep.subr.bf16.mxu0 0
  %4872 = vmatpush1.bf16.msra.mxu0 %v1755
  %4873 = vmatprep.subr.bf16.mxu0 0
  %4874 = vmatpush2.bf16.msra.mxu0 0
  %4875 = vmatprep.subr.bf16.mxu0 0
  %4876 = vmatpush2.bf16.msra.mxu0 0
  %4877 = vmatprep.subr.bf16.mxu0 0
  %4878 = vmatpush2.bf16.msra.mxu0 0
  %4879 = vmatprep.subr.bf16.mxu0 0
  %4880 = vmatpush2.bf16.msra.mxu0 0
  %4881 = vmatprep.subr.bf16.mxu0 0
  %4882 = vmatpush2.bf16.msra.mxu0 0
  %4883 = vmatprep.subr.bf16.mxu0 0
  %4884 = vmatpush2.bf16.msra.mxu0 0
  %4885 = vmatprep.subr.bf16.mxu0 0
  %4886 = vmatpush2.bf16.msra.mxu0 0
  %4887 = vmatprep.subr.bf16.mxu0 0
  %4888 = vmatpush2.bf16.msra.mxu0 0
  %4889 = vmatprep.mubr.bf16.mxu0 0
  %4890 = vmatmul.mubr.bf16.gmra.mxu0 %v4810
  %v4891 = vpop.f32.mrf.mxu0
  %v4892 = vadd.f32 0.0, %v4891
  %v4893 = vpop.f32.mrf.mxu0
  %v4894 = vpop.f32.mrf.mxu0
  %v4895 = vadd.f32 0.0, %v4894
  %v4896 = vpop.f32.mrf.mxu0
  %4897 = vmatprep.mubr.bf16.mxu0 0
  %4898 = vmatmul.mubr.bf16.gmra.mxu0 %v4813
  %v4899 = vpop.f32.mrf.mxu0
  %v4900 = vadd.f32 0.0, %v4899
  %v4901 = vpop.f32.mrf.mxu0
  %v4902 = vpop.f32.mrf.mxu0
  %v4903 = vadd.f32 0.0, %v4902
  %v4904 = vpop.f32.mrf.mxu0
  %4905 = vmatprep.mubr.bf16.mxu0 0
  %4906 = vmatmul.mubr.bf16.gmra.mxu0 %v4816
  %v4907 = vpop.f32.mrf.mxu0
  %v4908 = vadd.f32 0.0, %v4907
  %v4909 = vpop.f32.mrf.mxu0
  %v4910 = vpop.f32.mrf.mxu0
  %v4911 = vadd.f32 0.0, %v4910
  %v4912 = vpop.f32.mrf.mxu0
  %4913 = vmatprep.mubr.bf16.mxu0 0
  %4914 = vmatmul.mubr.bf16.gmra.mxu0 %v4819
  %v4915 = vpop.f32.mrf.mxu0
  %v4916 = vadd.f32 0.0, %v4915
  %v4917 = vpop.f32.mrf.mxu0
  %v4918 = vpop.f32.mrf.mxu0
  %v4919 = vadd.f32 0.0, %v4918
  %v4920 = vpop.f32.mrf.mxu0
  %4921 = vmatprep.mubr.bf16.mxu0 0
  %4922 = vmatmul.mubr.bf16.gmra.mxu0 %v4822
  %v4923 = vpop.f32.mrf.mxu0
  %v4924 = vadd.f32 0.0, %v4923
  %v4925 = vpop.f32.mrf.mxu0
  %v4926 = vpop.f32.mrf.mxu0
  %v4927 = vadd.f32 0.0, %v4926
  %v4928 = vpop.f32.mrf.mxu0
  %4929 = vmatprep.mubr.bf16.mxu0 0
  %4930 = vmatmul.mubr.bf16.gmra.mxu0 %v4825
  %v4931 = vpop.f32.mrf.mxu0
  %v4932 = vadd.f32 0.0, %v4931
  %v4933 = vpop.f32.mrf.mxu0
  %v4934 = vpop.f32.mrf.mxu0
  %v4935 = vadd.f32 0.0, %v4934
  %v4936 = vpop.f32.mrf.mxu0
  %4937 = vmatprep.mubr.bf16.mxu0 0
  %4938 = vmatmul.mubr.bf16.gmra.mxu0 %v4828
  %v4939 = vpop.f32.mrf.mxu0
  %v4940 = vadd.f32 0.0, %v4939
  %v4941 = vpop.f32.mrf.mxu0
  %v4942 = vpop.f32.mrf.mxu0
  %v4943 = vadd.f32 0.0, %v4942
  %v4944 = vpop.f32.mrf.mxu0
  %4945 = vmatprep.mubr.bf16.mxu0 0
  %4946 = vmatmul.mubr.bf16.gmra.mxu0 %v4831
  %v4947 = vpop.f32.mrf.mxu0
  %v4948 = vadd.f32 0.0, %v4947
  %v4949 = vpop.f32.mrf.mxu0
  %v4950 = vpop.f32.mrf.mxu0
  %v4951 = vadd.f32 0.0, %v4950
  %v4952 = vpop.f32.mrf.mxu0
  %4953 = vmatprep.mubr.bf16.mxu0 0
  %4954 = vmatmul.mubr.bf16.gmra.mxu0 %v4834
  %v4955 = vpop.f32.mrf.mxu0
  %v4956 = vadd.f32 0.0, %v4955
  %v4957 = vpop.f32.mrf.mxu0
  %v4958 = vpop.f32.mrf.mxu0
  %v4959 = vadd.f32 0.0, %v4958
  %v4960 = vpop.f32.mrf.mxu0
  %4961 = vmatprep.mubr.bf16.mxu0 0
  %4962 = vmatmul.mubr.bf16.gmra.mxu0 %v4837
  %v4963 = vpop.f32.mrf.mxu0
  %v4964 = vadd.f32 0.0, %v4963
  %v4965 = vpop.f32.mrf.mxu0
  %v4966 = vpop.f32.mrf.mxu0
  %v4967 = vadd.f32 0.0, %v4966
  %v4968 = vpop.f32.mrf.mxu0
  %4969 = vmatprep.mubr.bf16.mxu0 0
  %4970 = vmatmul.mubr.bf16.gmra.mxu0 %v4840
  %v4971 = vpop.f32.mrf.mxu0
  %v4972 = vadd.f32 0.0, %v4971
  %v4973 = vpop.f32.mrf.mxu0
  %v4974 = vpop.f32.mrf.mxu0
  %v4975 = vadd.f32 0.0, %v4974
  %v4976 = vpop.f32.mrf.mxu0
  %4977 = vmatprep.mubr.bf16.mxu0 0
  %4978 = vmatmul.mubr.bf16.gmra.mxu0 %v4843
  %v4979 = vpop.f32.mrf.mxu0
  %v4980 = vadd.f32 0.0, %v4979
  %v4981 = vpop.f32.mrf.mxu0
  %v4982 = vpop.f32.mrf.mxu0
  %v4983 = vadd.f32 0.0, %v4982
  %v4984 = vpop.f32.mrf.mxu0
  %4985 = vmatprep.mubr.bf16.mxu0 0
  %4986 = vmatmul.mubr.bf16.gmra.mxu0 %v4846
  %v4987 = vpop.f32.mrf.mxu0
  %v4988 = vadd.f32 0.0, %v4987
  %v4989 = vpop.f32.mrf.mxu0
  %v4990 = vpop.f32.mrf.mxu0
  %v4991 = vadd.f32 0.0, %v4990
  %v4992 = vpop.f32.mrf.mxu0
  %4993 = vmatprep.mubr.bf16.mxu0 0
  %4994 = vmatmul.mubr.bf16.gmra.mxu0 %v4849
  %v4995 = vpop.f32.mrf.mxu0
  %v4996 = vadd.f32 0.0, %v4995
  %v4997 = vpop.f32.mrf.mxu0
  %v4998 = vpop.f32.mrf.mxu0
  %v4999 = vadd.f32 0.0, %v4998
  %v5000 = vpop.f32.mrf.mxu0
  %5001 = vmatprep.mubr.bf16.mxu0 0
  %5002 = vmatmul.mubr.bf16.gmra.mxu0 %v4852
  %v5003 = vpop.f32.mrf.mxu0
  %v5004 = vadd.f32 0.0, %v5003
  %v5005 = vpop.f32.mrf.mxu0
  %v5006 = vpop.f32.mrf.mxu0
  %v5007 = vadd.f32 0.0, %v5006
  %v5008 = vpop.f32.mrf.mxu0
  %5009 = vmatprep.mubr.bf16.mxu0 0
  %5010 = vmatmul.mubr.bf16.gmra.mxu0 %v4855
  %v5011 = vpop.f32.mrf.mxu0
  %v5012 = vadd.f32 0.0, %v5011
  %v5013 = vpop.f32.mrf.mxu0
  %v5014 = vpop.f32.mrf.mxu0
  %v5015 = vadd.f32 0.0, %v5014
  %v5016 = vpop.f32.mrf.mxu0
  %5017 = vdwg.mxu0
  %v5018 = vxor.u32 %v4892, 2147483648
  %v5019 = vxor.u32 %v4895, 2147483648
  %v5020 = vxor.u32 %v4900, 2147483648
  %v5021 = vxor.u32 %v4903, 2147483648
  %v5022 = vxor.u32 %v4908, 2147483648
  %v5023 = vxor.u32 %v4911, 2147483648
  %v5024 = vxor.u32 %v4916, 2147483648
  %v5025 = vxor.u32 %v4919, 2147483648
  %v5026 = vxor.u32 %v4924, 2147483648
  %v5027 = vxor.u32 %v4927, 2147483648
  %v5028 = vxor.u32 %v4932, 2147483648
  %v5029 = vxor.u32 %v4935, 2147483648
  %v5030 = vxor.u32 %v4940, 2147483648
  %v5031 = vxor.u32 %v4943, 2147483648
  %v5032 = vxor.u32 %v4948, 2147483648
  %v5033 = vxor.u32 %v4951, 2147483648
  %v5034 = vxor.u32 %v4956, 2147483648
  %v5035 = vxor.u32 %v4959, 2147483648
  %v5036 = vxor.u32 %v4964, 2147483648
  %v5037 = vxor.u32 %v4967, 2147483648
  %v5038 = vxor.u32 %v4972, 2147483648
  %v5039 = vxor.u32 %v4975, 2147483648
  %v5040 = vxor.u32 %v4980, 2147483648
  %v5041 = vxor.u32 %v4983, 2147483648
  %v5042 = vxor.u32 %v4988, 2147483648
  %v5043 = vxor.u32 %v4991, 2147483648
  %v5044 = vxor.u32 %v4996, 2147483648
  %v5045 = vxor.u32 %v4999, 2147483648
  %v5046 = vxor.u32 %v5004, 2147483648
  %v5047 = vxor.u32 %v5007, 2147483648
  %v5048 = vxor.u32 %v5012, 2147483648
  %v5049 = vxor.u32 %v5015, 2147483648
  %v5050 = vmul.f32 %v5018, 1.442695
  %v5051 = vpow.pop %v5050
  %v5052 = vmul.f32 %v5019, 1.442695
  %v5053 = vpow.pop %v5052
  %v5054 = vmul.f32 %v5020, 1.442695
  %v5055 = vpow.pop %v5054
  %v5056 = vmul.f32 %v5021, 1.442695
  %v5057 = vpow.pop %v5056
  %v5058 = vmul.f32 %v5022, 1.442695
  %v5059 = vpow.pop %v5058
  %v5060 = vmul.f32 %v5023, 1.442695
  %v5061 = vpow.pop %v5060
  %v5062 = vmul.f32 %v5024, 1.442695
  %v5063 = vpow.pop %v5062
  %v5064 = vmul.f32 %v5025, 1.442695
  %v5065 = vpow.pop %v5064
  %v5066 = vmul.f32 %v5026, 1.442695
  %v5067 = vpow.pop %v5066
  %v5068 = vmul.f32 %v5027, 1.442695
  %v5069 = vpow.pop %v5068
  %v5070 = vmul.f32 %v5028, 1.442695
  %v5071 = vpow.pop %v5070
  %v5072 = vmul.f32 %v5029, 1.442695
  %v5073 = vpow.pop %v5072
  %v5074 = vmul.f32 %v5030, 1.442695
  %v5075 = vpow.pop %v5074
  %v5076 = vmul.f32 %v5031, 1.442695
  %v5077 = vpow.pop %v5076
  %v5078 = vmul.f32 %v5032, 1.442695
  %v5079 = vpow.pop %v5078
  %v5080 = vmul.f32 %v5033, 1.442695
  %v5081 = vpow.pop %v5080
  %v5082 = vmul.f32 %v5034, 1.442695
  %v5083 = vpow.pop %v5082
  %v5084 = vmul.f32 %v5035, 1.442695
  %v5085 = vpow.pop %v5084
  %v5086 = vmul.f32 %v5036, 1.442695
  %v5087 = vpow.pop %v5086
  %v5088 = vmul.f32 %v5037, 1.442695
  %v5089 = vpow.pop %v5088
  %v5090 = vmul.f32 %v5038, 1.442695
  %v5091 = vpow.pop %v5090
  %v5092 = vmul.f32 %v5039, 1.442695
  %v5093 = vpow.pop %v5092
  %v5094 = vmul.f32 %v5040, 1.442695
  %v5095 = vpow.pop %v5094
  %v5096 = vmul.f32 %v5041, 1.442695
  %v5097 = vpow.pop %v5096
  %v5098 = vmul.f32 %v5042, 1.442695
  %v5099 = vpow.pop %v5098
  %v5100 = vmul.f32 %v5043, 1.442695
  %v5101 = vpow.pop %v5100
  %v5102 = vmul.f32 %v5044, 1.442695
  %v5103 = vpow.pop %v5102
  %v5104 = vmul.f32 %v5045, 1.442695
  %v5105 = vpow.pop %v5104
  %v5106 = vmul.f32 %v5046, 1.442695
  %v5107 = vpow.pop %v5106
  %v5108 = vmul.f32 %v5047, 1.442695
  %v5109 = vpow.pop %v5108
  %v5110 = vmul.f32 %v5048, 1.442695
  %v5111 = vpow.pop %v5110
  %v5112 = vmul.f32 %v5049, 1.442695
  %v5113 = vpow.pop %v5112
  %v5114 = vadd.f32 %v5051, 1.0
  %v5115 = vadd.f32 %v5053, 1.0
  %v5116 = vadd.f32 %v5055, 1.0
  %v5117 = vadd.f32 %v5057, 1.0
  %v5118 = vadd.f32 %v5059, 1.0
  %v5119 = vadd.f32 %v5061, 1.0
  %v5120 = vadd.f32 %v5063, 1.0
  %v5121 = vadd.f32 %v5065, 1.0
  %v5122 = vadd.f32 %v5067, 1.0
  %v5123 = vadd.f32 %v5069, 1.0
  %v5124 = vadd.f32 %v5071, 1.0
  %v5125 = vadd.f32 %v5073, 1.0
  %v5126 = vadd.f32 %v5075, 1.0
  %v5127 = vadd.f32 %v5077, 1.0
  %v5128 = vadd.f32 %v5079, 1.0
  %v5129 = vadd.f32 %v5081, 1.0
  %v5130 = vadd.f32 %v5083, 1.0
  %v5131 = vadd.f32 %v5085, 1.0
  %v5132 = vadd.f32 %v5087, 1.0
  %v5133 = vadd.f32 %v5089, 1.0
  %v5134 = vadd.f32 %v5091, 1.0
  %v5135 = vadd.f32 %v5093, 1.0
  %v5136 = vadd.f32 %v5095, 1.0
  %v5137 = vadd.f32 %v5097, 1.0
  %v5138 = vadd.f32 %v5099, 1.0
  %v5139 = vadd.f32 %v5101, 1.0
  %v5140 = vadd.f32 %v5103, 1.0
  %v5141 = vadd.f32 %v5105, 1.0
  %v5142 = vadd.f32 %v5107, 1.0
  %v5143 = vadd.f32 %v5109, 1.0
  %v5144 = vadd.f32 %v5111, 1.0
  %v5145 = vadd.f32 %v5113, 1.0
  %v5146 = vrcp.pop %v5114
  %v5147 = vmul.f32 1.0, %v5146
  %v5148 = vrcp.pop %v5115
  %v5149 = vmul.f32 1.0, %v5148
  %v5150 = vrcp.pop %v5116
  %v5151 = vmul.f32 1.0, %v5150
  %v5152 = vrcp.pop %v5117
  %v5153 = vmul.f32 1.0, %v5152
  %v5154 = vrcp.pop %v5118
  %v5155 = vmul.f32 1.0, %v5154
  %v5156 = vrcp.pop %v5119
  %v5157 = vmul.f32 1.0, %v5156
  %v5158 = vrcp.pop %v5120
  %v5159 = vmul.f32 1.0, %v5158
  %v5160 = vrcp.pop %v5121
  %v5161 = vmul.f32 1.0, %v5160
  %v5162 = vrcp.pop %v5122
  %v5163 = vmul.f32 1.0, %v5162
  %v5164 = vrcp.pop %v5123
  %v5165 = vmul.f32 1.0, %v5164
  %v5166 = vrcp.pop %v5124
  %v5167 = vmul.f32 1.0, %v5166
  %v5168 = vrcp.pop %v5125
  %v5169 = vmul.f32 1.0, %v5168
  %v5170 = vrcp.pop %v5126
  %v5171 = vmul.f32 1.0, %v5170
  %v5172 = vrcp.pop %v5127
  %v5173 = vmul.f32 1.0, %v5172
  %v5174 = vrcp.pop %v5128
  %v5175 = vmul.f32 1.0, %v5174
  %v5176 = vrcp.pop %v5129
  %v5177 = vmul.f32 1.0, %v5176
  %v5178 = vrcp.pop %v5130
  %v5179 = vmul.f32 1.0, %v5178
  %v5180 = vrcp.pop %v5131
  %v5181 = vmul.f32 1.0, %v5180
  %v5182 = vrcp.pop %v5132
  %v5183 = vmul.f32 1.0, %v5182
  %v5184 = vrcp.pop %v5133
  %v5185 = vmul.f32 1.0, %v5184
  %v5186 = vrcp.pop %v5134
  %v5187 = vmul.f32 1.0, %v5186
  %v5188 = vrcp.pop %v5135
  %v5189 = vmul.f32 1.0, %v5188
  %v5190 = vrcp.pop %v5136
  %v5191 = vmul.f32 1.0, %v5190
  %v5192 = vrcp.pop %v5137
  %v5193 = vmul.f32 1.0, %v5192
  %v5194 = vrcp.pop %v5138
  %v5195 = vmul.f32 1.0, %v5194
  %v5196 = vrcp.pop %v5139
  %v5197 = vmul.f32 1.0, %v5196
  %v5198 = vrcp.pop %v5140
  %v5199 = vmul.f32 1.0, %v5198
  %v5200 = vrcp.pop %v5141
  %v5201 = vmul.f32 1.0, %v5200
  %v5202 = vrcp.pop %v5142
  %v5203 = vmul.f32 1.0, %v5202
  %v5204 = vrcp.pop %v5143
  %v5205 = vmul.f32 1.0, %v5204
  %v5206 = vrcp.pop %v5144
  %v5207 = vmul.f32 1.0, %v5206
  %v5208 = vrcp.pop %v5145
  %v5209 = vmul.f32 1.0, %v5208
  %v5210 = vmul.f32 %v4892, %v5147
  %v5211 = vmul.f32 %v4895, %v5149
  %v5212 = vmul.f32 %v4900, %v5151
  %v5213 = vmul.f32 %v4903, %v5153
  %v5214 = vmul.f32 %v4908, %v5155
  %v5215 = vmul.f32 %v4911, %v5157
  %v5216 = vmul.f32 %v4916, %v5159
  %v5217 = vmul.f32 %v4919, %v5161
  %v5218 = vmul.f32 %v4924, %v5163
  %v5219 = vmul.f32 %v4927, %v5165
  %v5220 = vmul.f32 %v4932, %v5167
  %v5221 = vmul.f32 %v4935, %v5169
  %v5222 = vmul.f32 %v4940, %v5171
  %v5223 = vmul.f32 %v4943, %v5173
  %v5224 = vmul.f32 %v4948, %v5175
  %v5225 = vmul.f32 %v4951, %v5177
  %v5226 = vmul.f32 %v4956, %v5179
  %v5227 = vmul.f32 %v4959, %v5181
  %v5228 = vmul.f32 %v4964, %v5183
  %v5229 = vmul.f32 %v4967, %v5185
  %v5230 = vmul.f32 %v4972, %v5187
  %v5231 = vmul.f32 %v4975, %v5189
  %v5232 = vmul.f32 %v4980, %v5191
  %v5233 = vmul.f32 %v4983, %v5193
  %v5234 = vmul.f32 %v4988, %v5195
  %v5235 = vmul.f32 %v4991, %v5197
  %v5236 = vmul.f32 %v4996, %v5199
  %v5237 = vmul.f32 %v4999, %v5201
  %v5238 = vmul.f32 %v5004, %v5203
  %v5239 = vmul.f32 %v5007, %v5205
  %v5240 = vmul.f32 %v5012, %v5207
  %v5241 = vmul.f32 %v5015, %v5209
  %v5242 = vmul.f32 %v4443, %v1314
  %v5243 = vmul.f32 %v4444, %v1315
  %v5244 = vmul.f32 %v4443, %v1316
  %v5245 = vmul.f32 %v4444, %v1317
  %v5246 = vmul.f32 %v4443, %v1318
  %v5247 = vmul.f32 %v4444, %v1319
  %v5248 = vmul.f32 %v4443, %v1320
  %v5249 = vmul.f32 %v4444, %v1321
  %v5250 = vmul.f32 %v4443, %v1322
  %v5251 = vmul.f32 %v4444, %v1323
  %v5252 = vmul.f32 %v4443, %v1324
  %v5253 = vmul.f32 %v4444, %v1325
  %v5254 = vmul.f32 %v4443, %v1326
  %v5255 = vmul.f32 %v4444, %v1327
  %v5256 = vmul.f32 %v4443, %v1328
  %v5257 = vmul.f32 %v4444, %v1329
  %v5258 = vmul.f32 %v4443, %v1330
  %v5259 = vmul.f32 %v4444, %v1331
  %v5260 = vmul.f32 %v4443, %v1332
  %v5261 = vmul.f32 %v4444, %v1333
  %v5262 = vmul.f32 %v4443, %v1334
  %v5263 = vmul.f32 %v4444, %v1335
  %v5264 = vmul.f32 %v4443, %v1336
  %v5265 = vmul.f32 %v4444, %v1337
  %v5266 = vmul.f32 %v4443, %v1338
  %v5267 = vmul.f32 %v4444, %v1339
  %v5268 = vmul.f32 %v4443, %v1340
  %v5269 = vmul.f32 %v4444, %v1341
  %v5270 = vmul.f32 %v4443, %v1342
  %v5271 = vmul.f32 %v4444, %v1343
  %v5272 = vmul.f32 %v4443, %v1344
  %v5273 = vmul.f32 %v4444, %v1345
  %5306 = vrot.lane.b32.xlu0 %v5210, 64
  %v5307 = vpop.permute.xlu0 %5306
  %5308 = vrot.lane.b32.xlu0 %v5211, 64
  %v5309 = vpop.permute.xlu0 %5308
  %5310 = vrot.lane.b32.xlu0 %v5212, 64
  %v5311 = vpop.permute.xlu0 %5310
  %5312 = vrot.lane.b32.xlu0 %v5213, 64
  %v5313 = vpop.permute.xlu0 %5312
  %5314 = vrot.lane.b32.xlu0 %v5214, 64
  %v5315 = vpop.permute.xlu0 %5314
  %5316 = vrot.lane.b32.xlu0 %v5215, 64
  %v5317 = vpop.permute.xlu0 %5316
  %5318 = vrot.lane.b32.xlu0 %v5216, 64
  %v5319 = vpop.permute.xlu0 %5318
  %5320 = vrot.lane.b32.xlu0 %v5217, 64
  %v5321 = vpop.permute.xlu0 %5320
  %5322 = vrot.lane.b32.xlu0 %v5218, 64
  %v5323 = vpop.permute.xlu0 %5322
  %5324 = vrot.lane.b32.xlu0 %v5219, 64
  %v5325 = vpop.permute.xlu0 %5324
  %5326 = vrot.lane.b32.xlu0 %v5220, 64
  %v5327 = vpop.permute.xlu0 %5326
  %5328 = vrot.lane.b32.xlu0 %v5221, 64
  %v5329 = vpop.permute.xlu0 %5328
  %5330 = vrot.lane.b32.xlu0 %v5222, 64
  %v5331 = vpop.permute.xlu0 %5330
  %5332 = vrot.lane.b32.xlu0 %v5223, 64
  %v5333 = vpop.permute.xlu0 %5332
  %5334 = vrot.lane.b32.xlu0 %v5224, 64
  %v5335 = vpop.permute.xlu0 %5334
  %5336 = vrot.lane.b32.xlu0 %v5225, 64
  %v5337 = vpop.permute.xlu0 %5336
  %5338 = vrot.lane.b32.xlu0 %v5226, 64
  %v5339 = vpop.permute.xlu0 %5338
  %5340 = vrot.lane.b32.xlu0 %v5227, 64
  %v5341 = vpop.permute.xlu0 %5340
  %5342 = vrot.lane.b32.xlu0 %v5228, 64
  %v5343 = vpop.permute.xlu0 %5342
  %5344 = vrot.lane.b32.xlu0 %v5229, 64
  %v5345 = vpop.permute.xlu0 %5344
  %5346 = vrot.lane.b32.xlu0 %v5230, 64
  %v5347 = vpop.permute.xlu0 %5346
  %5348 = vrot.lane.b32.xlu0 %v5231, 64
  %v5349 = vpop.permute.xlu0 %5348
  %5350 = vrot.lane.b32.xlu0 %v5232, 64
  %v5351 = vpop.permute.xlu0 %5350
  %5352 = vrot.lane.b32.xlu0 %v5233, 64
  %v5353 = vpop.permute.xlu0 %5352
  %5354 = vrot.lane.b32.xlu0 %v5234, 64
  %v5355 = vpop.permute.xlu0 %5354
  %5356 = vrot.lane.b32.xlu0 %v5235, 64
  %v5357 = vpop.permute.xlu0 %5356
  %5358 = vrot.lane.b32.xlu0 %v5236, 64
  %v5359 = vpop.permute.xlu0 %5358
  %5360 = vrot.lane.b32.xlu0 %v5237, 64
  %v5361 = vpop.permute.xlu0 %5360
  %5362 = vrot.lane.b32.xlu0 %v5238, 64
  %v5363 = vpop.permute.xlu0 %5362
  %5364 = vrot.lane.b32.xlu0 %v5239, 64
  %v5365 = vpop.permute.xlu0 %5364
  %5366 = vrot.lane.b32.xlu0 %v5240, 64
  %v5367 = vpop.permute.xlu0 %5366
  %5368 = vrot.lane.b32.xlu0 %v5241, 64
  %v5369 = vpop.permute.xlu0 %5368
  %v5402 = vmul.f32 %v5242, %v5307
  %v5403 = vmul.f32 %v5243, %v5309
  %v5404 = vmul.f32 %v5244, %v5311
  %v5405 = vmul.f32 %v5245, %v5313
  %v5406 = vmul.f32 %v5246, %v5315
  %v5407 = vmul.f32 %v5247, %v5317
  %v5408 = vmul.f32 %v5248, %v5319
  %v5409 = vmul.f32 %v5249, %v5321
  %v5410 = vmul.f32 %v5250, %v5323
  %v5411 = vmul.f32 %v5251, %v5325
  %v5412 = vmul.f32 %v5252, %v5327
  %v5413 = vmul.f32 %v5253, %v5329
  %v5414 = vmul.f32 %v5254, %v5331
  %v5415 = vmul.f32 %v5255, %v5333
  %v5416 = vmul.f32 %v5256, %v5335
  %v5417 = vmul.f32 %v5257, %v5337
  %v5418 = vmul.f32 %v5258, %v5339
  %v5419 = vmul.f32 %v5259, %v5341
  %v5420 = vmul.f32 %v5260, %v5343
  %v5421 = vmul.f32 %v5261, %v5345
  %v5422 = vmul.f32 %v5262, %v5347
  %v5423 = vmul.f32 %v5263, %v5349
  %v5424 = vmul.f32 %v5264, %v5351
  %v5425 = vmul.f32 %v5265, %v5353
  %v5426 = vmul.f32 %v5266, %v5355
  %v5427 = vmul.f32 %v5267, %v5357
  %v5428 = vmul.f32 %v5268, %v5359
  %v5429 = vmul.f32 %v5269, %v5361
  %v5430 = vmul.f32 %v5270, %v5363
  %v5431 = vmul.f32 %v5271, %v5365
  %v5432 = vmul.f32 %v5272, %v5367
  %v5433 = vmul.f32 %v5273, %v5369
  %v5434 = vsel %vm2512, %v5402, 0.0
  %v5435 = vsel %vm2512, %v5403, 0.0
  %v5436 = vadd.f32 %v5434, %v5435
  %v5437 = vrot.slane %v5436, 4
  %v5438 = vadd.f32 %v5436, %v5437
  %v5439 = vrot.slane %v5438, 2
  %v5440 = vadd.f32 %v5438, %v5439
  %v5441 = vrot.slane %v5440, 1
  %v5442 = vadd.f32 %v5440, %v5441
  %v5443 = vsel %vm2512, %v5404, 0.0
  %v5444 = vsel %vm2512, %v5405, 0.0
  %v5445 = vadd.f32 %v5443, %v5444
  %v5446 = vrot.slane %v5445, 4
  %v5447 = vadd.f32 %v5445, %v5446
  %v5448 = vrot.slane %v5447, 2
  %v5449 = vadd.f32 %v5447, %v5448
  %v5450 = vrot.slane %v5449, 1
  %v5451 = vadd.f32 %v5449, %v5450
  %v5452 = vsel %vm2512, %v5406, 0.0
  %v5453 = vsel %vm2512, %v5407, 0.0
  %v5454 = vadd.f32 %v5452, %v5453
  %v5455 = vrot.slane %v5454, 4
  %v5456 = vadd.f32 %v5454, %v5455
  %v5457 = vrot.slane %v5456, 2
  %v5458 = vadd.f32 %v5456, %v5457
  %v5459 = vrot.slane %v5458, 1
  %v5460 = vadd.f32 %v5458, %v5459
  %v5461 = vsel %vm2512, %v5408, 0.0
  %v5462 = vsel %vm2512, %v5409, 0.0
  %v5463 = vadd.f32 %v5461, %v5462
  %v5464 = vrot.slane %v5463, 4
  %v5465 = vadd.f32 %v5463, %v5464
  %v5466 = vrot.slane %v5465, 2
  %v5467 = vadd.f32 %v5465, %v5466
  %v5468 = vrot.slane %v5467, 1
  %v5469 = vadd.f32 %v5467, %v5468
  %v5470 = vsel %vm2512, %v5410, 0.0
  %v5471 = vsel %vm2512, %v5411, 0.0
  %v5472 = vadd.f32 %v5470, %v5471
  %v5473 = vrot.slane %v5472, 4
  %v5474 = vadd.f32 %v5472, %v5473
  %v5475 = vrot.slane %v5474, 2
  %v5476 = vadd.f32 %v5474, %v5475
  %v5477 = vrot.slane %v5476, 1
  %v5478 = vadd.f32 %v5476, %v5477
  %v5479 = vsel %vm2512, %v5412, 0.0
  %v5480 = vsel %vm2512, %v5413, 0.0
  %v5481 = vadd.f32 %v5479, %v5480
  %v5482 = vrot.slane %v5481, 4
  %v5483 = vadd.f32 %v5481, %v5482
  %v5484 = vrot.slane %v5483, 2
  %v5485 = vadd.f32 %v5483, %v5484
  %v5486 = vrot.slane %v5485, 1
  %v5487 = vadd.f32 %v5485, %v5486
  %v5488 = vsel %vm2512, %v5414, 0.0
  %v5489 = vsel %vm2512, %v5415, 0.0
  %v5490 = vadd.f32 %v5488, %v5489
  %v5491 = vrot.slane %v5490, 4
  %v5492 = vadd.f32 %v5490, %v5491
  %v5493 = vrot.slane %v5492, 2
  %v5494 = vadd.f32 %v5492, %v5493
  %v5495 = vrot.slane %v5494, 1
  %v5496 = vadd.f32 %v5494, %v5495
  %v5497 = vsel %vm2512, %v5416, 0.0
  %v5498 = vsel %vm2512, %v5417, 0.0
  %v5499 = vadd.f32 %v5497, %v5498
  %v5500 = vrot.slane %v5499, 4
  %v5501 = vadd.f32 %v5499, %v5500
  %v5502 = vrot.slane %v5501, 2
  %v5503 = vadd.f32 %v5501, %v5502
  %v5504 = vrot.slane %v5503, 1
  %v5505 = vadd.f32 %v5503, %v5504
  %v5506 = vsel %vm2512, %v5418, 0.0
  %v5507 = vsel %vm2512, %v5419, 0.0
  %v5508 = vadd.f32 %v5506, %v5507
  %v5509 = vrot.slane %v5508, 4
  %v5510 = vadd.f32 %v5508, %v5509
  %v5511 = vrot.slane %v5510, 2
  %v5512 = vadd.f32 %v5510, %v5511
  %v5513 = vrot.slane %v5512, 1
  %v5514 = vadd.f32 %v5512, %v5513
  %v5515 = vsel %vm2512, %v5420, 0.0
  %v5516 = vsel %vm2512, %v5421, 0.0
  %v5517 = vadd.f32 %v5515, %v5516
  %v5518 = vrot.slane %v5517, 4
  %v5519 = vadd.f32 %v5517, %v5518
  %v5520 = vrot.slane %v5519, 2
  %v5521 = vadd.f32 %v5519, %v5520
  %v5522 = vrot.slane %v5521, 1
  %v5523 = vadd.f32 %v5521, %v5522
  %v5524 = vsel %vm2512, %v5422, 0.0
  %v5525 = vsel %vm2512, %v5423, 0.0
  %v5526 = vadd.f32 %v5524, %v5525
  %v5527 = vrot.slane %v5526, 4
  %v5528 = vadd.f32 %v5526, %v5527
  %v5529 = vrot.slane %v5528, 2
  %v5530 = vadd.f32 %v5528, %v5529
  %v5531 = vrot.slane %v5530, 1
  %v5532 = vadd.f32 %v5530, %v5531
  %v5533 = vsel %vm2512, %v5424, 0.0
  %v5534 = vsel %vm2512, %v5425, 0.0
  %v5535 = vadd.f32 %v5533, %v5534
  %v5536 = vrot.slane %v5535, 4
  %v5537 = vadd.f32 %v5535, %v5536
  %v5538 = vrot.slane %v5537, 2
  %v5539 = vadd.f32 %v5537, %v5538
  %v5540 = vrot.slane %v5539, 1
  %v5541 = vadd.f32 %v5539, %v5540
  %v5542 = vsel %vm2512, %v5426, 0.0
  %v5543 = vsel %vm2512, %v5427, 0.0
  %v5544 = vadd.f32 %v5542, %v5543
  %v5545 = vrot.slane %v5544, 4
  %v5546 = vadd.f32 %v5544, %v5545
  %v5547 = vrot.slane %v5546, 2
  %v5548 = vadd.f32 %v5546, %v5547
  %v5549 = vrot.slane %v5548, 1
  %v5550 = vadd.f32 %v5548, %v5549
  %v5551 = vsel %vm2512, %v5428, 0.0
  %v5552 = vsel %vm2512, %v5429, 0.0
  %v5553 = vadd.f32 %v5551, %v5552
  %v5554 = vrot.slane %v5553, 4
  %v5555 = vadd.f32 %v5553, %v5554
  %v5556 = vrot.slane %v5555, 2
  %v5557 = vadd.f32 %v5555, %v5556
  %v5558 = vrot.slane %v5557, 1
  %v5559 = vadd.f32 %v5557, %v5558
  %v5560 = vsel %vm2512, %v5430, 0.0
  %v5561 = vsel %vm2512, %v5431, 0.0
  %v5562 = vadd.f32 %v5560, %v5561
  %v5563 = vrot.slane %v5562, 4
  %v5564 = vadd.f32 %v5562, %v5563
  %v5565 = vrot.slane %v5564, 2
  %v5566 = vadd.f32 %v5564, %v5565
  %v5567 = vrot.slane %v5566, 1
  %v5568 = vadd.f32 %v5566, %v5567
  %v5569 = vsel %vm2512, %v5432, 0.0
  %v5570 = vsel %vm2512, %v5433, 0.0
  %v5571 = vadd.f32 %v5569, %v5570
  %v5572 = vrot.slane %v5571, 4
  %v5573 = vadd.f32 %v5571, %v5572
  %v5574 = vrot.slane %v5573, 2
  %v5575 = vadd.f32 %v5573, %v5574
  %v5576 = vrot.slane %v5575, 1
  %v5577 = vadd.f32 %v5575, %v5576
  %v5578 = vpack.c.bf16 %v5442, %v5442
  %v5579 = vpack.c.bf16 %v5451, %v5451
  %v5580 = vpack.c.bf16 %v5460, %v5460
  %v5581 = vpack.c.bf16 %v5469, %v5469
  %v5582 = vpack.c.bf16 %v5478, %v5478
  %v5583 = vpack.c.bf16 %v5487, %v5487
  %v5584 = vpack.c.bf16 %v5496, %v5496
  %v5585 = vpack.c.bf16 %v5505, %v5505
  %v5586 = vpack.c.bf16 %v5514, %v5514
  %v5587 = vpack.c.bf16 %v5523, %v5523
  %v5588 = vpack.c.bf16 %v5532, %v5532
  %v5589 = vpack.c.bf16 %v5541, %v5541
  %v5590 = vpack.c.bf16 %v5550, %v5550
  %v5591 = vpack.c.bf16 %v5559, %v5559
  %v5592 = vpack.c.bf16 %v5568, %v5568
  %v5593 = vpack.c.bf16 %v5577, %v5577
  %v5594 = vlaneseq
  %v5595 = vshrl.u32 %v5594, 7
  %v5596 = vsub.s32 3, %v5595
  %v5597 = vrot.slane %v4323, %v5596
  %v5614 = vunpack.c.l.b16 %v5578
  %v5615 = vunpack.c.l.b16 %v5579
  %v5616 = vunpack.c.l.b16 %v5580
  %v5617 = vunpack.c.l.b16 %v5581
  %v5618 = vunpack.c.l.b16 %v5582
  %v5619 = vunpack.c.l.b16 %v5583
  %v5620 = vunpack.c.l.b16 %v5584
  %v5621 = vunpack.c.l.b16 %v5585
  %v5622 = vunpack.c.l.b16 %v5586
  %v5623 = vunpack.c.l.b16 %v5587
  %v5624 = vunpack.c.l.b16 %v5588
  %v5625 = vunpack.c.l.b16 %v5589
  %v5626 = vunpack.c.l.b16 %v5590
  %v5627 = vunpack.c.l.b16 %v5591
  %v5628 = vunpack.c.l.b16 %v5592
  %v5629 = vunpack.c.l.b16 %v5593
  %v5630 = vsel %vm2709, %v5615, %v5614
  %v5631 = vsel %vm2711, %v5616, %v5630
  %v5632 = vsel %vm2713, %v5617, %v5631
  %v5633 = vsel %vm2715, %v5618, %v5632
  %v5634 = vsel %vm2717, %v5619, %v5633
  %v5635 = vsel %vm2719, %v5620, %v5634
  %v5636 = vsel %vm2721, %v5621, %v5635
  %v5637 = vsel %vm2709, %v5623, %v5622
  %v5638 = vsel %vm2711, %v5624, %v5637
  %v5639 = vsel %vm2713, %v5625, %v5638
  %v5640 = vsel %vm2715, %v5626, %v5639
  %v5641 = vsel %vm2717, %v5627, %v5640
  %v5642 = vsel %vm2719, %v5628, %v5641
  %v5643 = vsel %vm2721, %v5629, %v5642
  %v5644 = vpack.c.b16 %v5643, %v5636
  %5645 = vrot.lane.b32.xlu0 %v5644, 64
  %v5646 = vpop.permute.xlu0 %5645
  %v5651 = vunpack.c.l.b16 %v4318
  %v5652 = vunpack.c.l.b16 %v4319
  %v5653 = vunpack.c.l.b16 %v4320
  %v5654 = vunpack.c.l.b16 %v4321
  %v5655 = vpack.c.b16 %v5652, %v5651
  %v5656 = vpack.c.b16 %v5654, %v5653
  %v5660 = vsel %vm464, %v5646, 0
  %5662 = vmatprep.subr.bf16.mxu0 0
  %5663 = vmatpush1.bf16.msra.mxu0 0
  %5664 = vmatprep.subr.bf16.mxu0 0
  %5665 = vmatpush1.bf16.msra.mxu0 0
  %5666 = vmatprep.subr.bf16.mxu0 0
  %5667 = vmatpush1.bf16.msra.mxu0 0
  %5668 = vmatprep.subr.bf16.mxu0 0
  %5669 = vmatpush1.bf16.msra.mxu0 0
  %5670 = vmatprep.subr.bf16.mxu0 0
  %5671 = vmatpush1.bf16.msra.mxu0 0
  %5672 = vmatprep.subr.bf16.mxu0 0
  %5673 = vmatpush1.bf16.msra.mxu0 0
  %5674 = vmatprep.subr.bf16.mxu0 0
  %5675 = vmatpush1.bf16.msra.mxu0 %v5656
  %5676 = vmatprep.subr.bf16.mxu0 0
  %5677 = vmatpush1.bf16.msra.mxu0 %v5655
  %5678 = vmatprep.subr.bf16.mxu0 0
  %5679 = vmatpush2.bf16.msra.mxu0 0
  %5680 = vmatprep.subr.bf16.mxu0 0
  %5681 = vmatpush2.bf16.msra.mxu0 0
  %5682 = vmatprep.subr.bf16.mxu0 0
  %5683 = vmatpush2.bf16.msra.mxu0 0
  %5684 = vmatprep.subr.bf16.mxu0 0
  %5685 = vmatpush2.bf16.msra.mxu0 0
  %5686 = vmatprep.subr.bf16.mxu0 0
  %5687 = vmatpush2.bf16.msra.mxu0 0
  %5688 = vmatprep.subr.bf16.mxu0 0
  %5689 = vmatpush2.bf16.msra.mxu0 0
  %5690 = vmatprep.subr.bf16.mxu0 0
  %5691 = vmatpush2.bf16.msra.mxu0 0
  %5692 = vmatprep.subr.bf16.mxu0 0
  %5693 = vmatpush2.bf16.msra.mxu0 0
  %5694 = vmatprep.mubr.bf16.mxu0 0
  %5695 = vmatmul.mubr.bf16.gmra.mxu0 %v5660
  %v5696 = vpop.f32.mrf.mxu0
  %v5697 = vadd.f32 %v5597, %v5696
  %v5698 = vpop.f32.mrf.mxu0
  %v5699 = vpop.f32.mrf.mxu0
  %v5700 = vadd.f32 %v5597, %v5699
  %v5701 = vpop.f32.mrf.mxu0
  %5702 = vdwg.mxu0
  %v5703 = vadd.f32 %v4310, %v5697
  %v5704 = vadd.f32 %v4311, %v5700
  %5705 = vst.msk [vmem:[%s11] sm:$0xff] %vm464, %v5703
  %5706 = vst.msk [vmem:[%s11 + $0x8] sm:$0xff] %vm464, %v5704
  // Predicated region
  $region46: #{torchmd_s_forward.1} parent=0 // pred_check
    _
  $region47: #{torchmd_s_forward.1} parent=0 // pred_check_branch
    %5708 = sbr.rel (0) target = $region49
  $region48: #{torchmd_s_forward.1} parent=0 // pred_region
    _
  $region49: #{torchmd_s_forward.1} parent=0 // pred_fallthru
    _
  // Predicated region
  $region50: #{torchmd_s_forward.1} parent=0 // pred_check
    _
  $region51: #{torchmd_s_forward.1} parent=0 // pred_check_branch
    %5710 = sbr.rel (0) target = $region53
  $region52: #{torchmd_s_forward.1} parent=0 // pred_region
    _
  $region53: #{torchmd_s_forward.1} parent=0 // pred_fallthru
    _

</llo_original>
